<compile_context>
chip_gen: v6e
topology: v6e:2x2x1
jax: 0.10.0
libtpu: 0.0.40
codegen_flags: <defaults>
</compile_context>

<pallas_src>
import numpy as np
import jax
import jax.numpy as jnp
from jax.experimental import pallas as pl
from jax.experimental.pallas import tpu as pltpu

ISO_226_LU = [(20.0, -31.6), (25.0, -27.2), (31.5, -23.0), (40.0, -19.1), (50.0, -15.9),
              (63.0, -13.0), (80.0, -10.3), (100.0, -8.1), (125.0, -6.2), (160.0, -4.5),
              (200.0, -3.1), (250.0, -2.0), (315.0, -1.1), (400.0, -0.4), (500.0, 0.0),
              (630.0, 0.3), (800.0, 0.3), (1000.0, 0.0), (1250.0, -2.7), (1600.0, -4.1),
              (2000.0, -1.0), (2500.0, 1.7), (3150.0, 2.5), (4000.0, 1.2), (5000.0, -2.1),
              (6300.0, -7.1), (8000.0, -11.2), (10000.0, -10.7), (12500.0, -3.1)]

_LN10_OVER_20 = float(np.log(10.0) / 20.0)


# ----------------------------- host-side helpers -----------------------------

def db_to_linear_np(db):
    return 10.0 ** (np.asarray(db, dtype=np.float64) / 20.0)


def frequency_to_weight(freqs):
    """ISO-226 loudness weights; linear interp in log-frequency w/ extrapolation
    (replaces scipy.interpolate.interp1d(..., fill_value='extrapolate'))."""
    table = np.array(ISO_226_LU, dtype=np.float64)
    xp, fp = np.log(table[:, 0]), table[:, 1]
    x = np.log(np.asarray(freqs, dtype=np.float64))
    idx = np.clip(np.searchsorted(xp, x) - 1, 0, len(xp) - 2)
    slope = (fp[idx + 1] - fp[idx]) / (xp[idx + 1] - xp[idx])
    return db_to_linear_np(fp[idx] + slope * (x - xp[idx]))


def stft_magnitude(x, n_fft, hop):
    """torchaudio.transforms.Spectrogram(power=1.0) equivalent for 1-D audio
    (init-time glue only: periodic hann window, center=True, reflect padding)."""
    win = 0.5 - 0.5 * np.cos(2.0 * np.pi * np.arange(n_fft) / n_fft)
    k = n_fft // 2 + 1
    ang = 2.0 * np.pi * np.outer(np.arange(n_fft), np.arange(k)) / n_fft
    c = jnp.asarray(win[:, None] * np.cos(ang), jnp.float32)
    s = jnp.asarray(win[:, None] * np.sin(ang), jnp.float32)
    pad = n_fft // 2
    xp_ = jnp.pad(x, (pad, pad), mode="reflect")
    n_frames = (xp_.shape[0] - n_fft) // hop + 1
    frames = jnp.stack([xp_[t * hop: t * hop + n_fft] for t in range(n_frames)], axis=0)
    re = frames @ c
    im = frames @ s
    return jnp.sqrt(re * re + im * im).T          # (n_fft//2+1, n_frames)


# ------------------------------- Pallas kernel -------------------------------

def _moments_last_axis(x, n):
    """PyTorch-style stats over the last axis: mean, unbiased var, and raw
    3rd/4th central-power sums (d^2 reused for d^3/d^4)."""
    mean = jnp.mean(x, axis=1, keepdims=True)
    d = x - mean
    d2 = d * d
    var = jnp.sum(d2, axis=1, keepdims=True) * (1.0 / (n - 1))
    skew = jnp.sum(d2 * d, axis=1, keepdims=True)
    kurt = jnp.sum(d2 * d2, axis=1, keepdims=True)
    return mean, var, skew, kurt


def _make_resynth_kernel(f_valid, f8, t_valid, pad, nt2, nfft2, hop2, k2, use_bf16):
    tm1_inv = 1.0 / (t_valid - 1)
    inv_f = 1.0 / f_valid
    inv_fm1 = 1.0 / (f_valid - 1)
    inv_ft = 1.0 / (f_valid * t_valid)
    inv_n2 = 1.0 / nt2
    inv_n2m1 = 1.0 / (nt2 - 1)
    lane_tail = 128 - (8 + 4 * k2)
    mm_dtype = jnp.bfloat16 if use_bf16 else jnp.float32

    def kernel(sdb_ref, dbl_ref, dbr_ref, w_ref, basis_ref, mw_ref,
               slab_ref, scal_ref, cov_ref):
        w = w_ref[...]                                           # (f8, 1); padded bins have weight 0

        def weighted_linear(db):
            # safe_db_to_linear(db) = min(10**(db/20), |db| + 1), then ISO-226 weighting.
            return jnp.minimum(jnp.exp(db * _LN10_OVER_20), jnp.abs(db) + 1.0) * w

        sdb = sdb_ref[...]                                       # (f8, T) dB, lane offset 0
        s = weighted_linear(sdb)                                 # (f8, T); padded rows are exactly 0

        # ---- per-bin stats of the dB spectrogram over time ----
        mean_db, var_db, skew_db, kurt_db = _moments_last_axis(sdb, t_valid)

        # ---- spectral flux / transient from adjacent frames ----
        # TODO(synk): the +1-lane-offset slice forces a small relayout; swap for a
        #             pltpu.roll + last-column mask once roll direction is validated.
        s_cur = s[:, :t_valid - 1]
        s_nxt = s[:, 1:]
        flux = jnp.sum(jnp.abs(s_nxt - s_cur), axis=1, keepdims=True) * tm1_inv
        ratio = (s_cur * s_cur) / (s_nxt * s_nxt + 0.001)
        transient = jnp.sqrt(jnp.sum(ratio, axis=1, keepdims=True) * tm1_inv)

        # ---- frame-wise moments over frequency (mask the zero-padded bins) ----
        row_valid = (jax.lax.broadcasted_iota(jnp.int32, (f8, 1), 0)
                     < f_valid).astype(jnp.float32)
        ebf = jnp.sum(s, axis=0, keepdims=True) * inv_f          # (1, T) energy by frame
        dsv = (s - ebf) * row_valid
        ds2 = dsv * dsv
        col_var = jnp.sum(ds2, axis=0, keepdims=True) * inv_fm1
        spectral_variance = jnp.mean(col_var, axis=1, keepdims=True)            # (1, 1)
        spectral_skewness = jnp.sum(jnp.sum(ds2 * dsv, axis=0, keepdims=True),
                                    axis=1, keepdims=True) * inv_ft
        spectral_kurtosis = jnp.sum(jnp.sum(ds2 * ds2, axis=0, keepdims=True),
                                    axis=1, keepdims=True) * inv_ft

        # ---- spectral flatness & per-frame energy stats (s >= 0 => mean|s| == ebf) ----
        flat = jnp.exp(ebf) / (1.0 + ebf)
        fe, fv, fs, fk = _moments_last_axis(flat, t_valid)
        ee, ev, es, ek = _moments_last_axis(ebf, t_valid)

        # ---- covariance across frequency bins: one MXU matmul (padded bins -> zero rows) ----
        scv = (s - jnp.mean(s, axis=1, keepdims=True)).astype(mm_dtype)
        cov_ref[...] = jax.lax.dot_general(
            scv, scv, (((1,), (1,)), ((), ())),
            preferred_element_type=jnp.float32) * tm1_inv

        # ---- modulation spectrogram ----
        # Frames are hop-strided slices of the reflect-padded weighted spectrum,
        # batched into ONE (nt2*f8, nfft2) @ (nfft2, 2*k2) windowed-rDFT matmul.
        s_left = weighted_linear(dbl_ref[...])                   # (f8, pad)
        s_right = weighted_linear(dbr_ref[...])                  # (f8, pad)
        s_padded = jnp.concatenate([s_left, s, s_right], axis=1)  # (f8, T + 2*pad)
        frames = jnp.concatenate(
            [s_padded[:, tt * hop2: tt * hop2 + nfft2] for tt in range(nt2)],
            axis=0)                                              # (nt2*f8, nfft2), 8-aligned concat
        spec = jnp.dot(frames.astype(mm_dtype), basis_ref[...].astype(mm_dtype),
                       preferred_element_type=jnp.float32)       # (nt2*f8, 2*k2)
        re = spec[:, :k2]
        im = spec[:, k2:2 * k2]
        mag = jnp.sqrt(re * re + im * im)                        # |STFT|, (nt2*f8, k2)

        def frame_block(n):                                      # sublane-aligned static slice
            return mag[n * f8:(n + 1) * f8, :]

        # Centered per-mod-bin moments over the nt2 frames (segment-sum, no bsum matmuls,
        # no raw-moment cancellation).  Matches the PyTorch get_stats() semantics:
        #   var is unweighted-unbiased * mw; skew/kurt center on the WEIGHTED energy.
        e_acc = frame_block(0)
        for n in range(1, nt2):
            e_acc = e_acc + frame_block(n)
        e_raw = e_acc * inv_n2                                   # (f8, k2) unweighted mean
        mw = mw_ref[...]                                         # (1, k2) mod-frequency weights
        mod_e = e_raw * mw
        v_acc = jnp.zeros((f8, k2), jnp.float32)
        sk_acc = jnp.zeros((f8, k2), jnp.float32)
        ku_acc = jnp.zeros((f8, k2), jnp.float32)
        for n in range(nt2):
            m = frame_block(n)
            dv = m - e_raw
            v_acc = v_acc + dv * dv
            dc = m - mod_e
            dc2 = dc * dc
            sk_acc = sk_acc + dc2 * dc
            ku_acc = ku_acc + dc2 * dc2
        mod_v = v_acc * inv_n2m1 * mw
        mod_sk = sk_acc * mw
        mod_ku = ku_acc * mw

        # ---- lane-dense outputs: one (f8, 128) slab store + one (1, 16) scalar row ----
        # TODO(synk): scalars could move to an SMEM output once vector->scalar extraction
        #             is validated on all target generations; kept as a VMEM row for now.
        slab_ref[...] = jnp.concatenate(
            [mean_db, var_db, skew_db, kurt_db, flux, transient,
             jnp.zeros((f8, 2), jnp.float32),
             mod_e, mod_v, mod_sk, mod_ku,
             jnp.zeros((f8, lane_tail), jnp.float32)], axis=1)
        scal_ref[...] = jnp.concatenate(
            [spectral_variance, spectral_skewness, spectral_kurtosis,
             fe, fv, fs, fk, ee, ev, es, ek,
             jnp.zeros((1, 5), jnp.float32)], axis=1)

    return kernel


# ------------------------------ kernel wrapper ------------------------------

_VMEM_SPEC = pl.BlockSpec(memory_space=pltpu.MemorySpace.VMEM)


def _vmem_limit_bytes():
    """Per-generation VMEM budget: ~100 MiB on v5e/v6e (128 MiB physical),
    ~48 MiB on v7x (64 MiB physical), always leaving DMA headroom."""
    phys = 64 * 1024 * 1024                     # conservative fallback (v7x physical)
    try:
        info = pltpu.get_tpu_info()
        phys = int(getattr(info, "vmem_capacity_bytes", phys))
    except Exception:
        pass
    return int(max(32 * 1024 * 1024, min(phys - 16 * 1024 * 1024, 100 * 1024 * 1024)))


def pallas_resynth_features(sdb, db_left, db_right, weights_col, mod_basis, mod_w, *,
                            f_valid, t_valid, pad, nt2, nfft2, hop2, k2, use_bf16=False):
    f8 = sdb.shape[0]
    assert f8 % 8 == 0 and f8 >= f_valid
    assert 8 + 4 * k2 <= 128, "widen the output slab for larger modulation FFTs"
    out_shape = (
        jax.ShapeDtypeStruct((f8, 128), jnp.float32),   # per-bin stats + modspec moments
        jax.ShapeDtypeStruct((1, 16), jnp.float32),     # scalar features
        jax.ShapeDtypeStruct((f8, f8), jnp.float32),    # covariance (host slices to F x F)
    )
    flops = int(2 * f8 * f8 * t_valid                     # covariance matmul
                + 2 * (nt2 * f8) * nfft2 * (2 * k2)       # modulation rDFT matmul
                + 60 * f8 * t_valid                       # elementwise stats (rough)
                + 10 * nt2 * f8 * k2)                     # modspec moments
    transcendentals = int(f8 * (t_valid + 2 * pad) + t_valid + nt2 * f8 * k2)
    bytes_accessed = int(4 * (sdb.size + db_left.size + db_right.size + weights_col.size
                              + mod_basis.size + mod_w.size
                              + f8 * 128 + 16 + f8 * f8))
    # TODO(synk): production shapes need a grid ('parallel' frequency tiles,
    #             (i,j,k)-tiled covariance, modspec pipelined over NT2 frame blocks).
    return pl.pallas_call(
        _make_resynth_kernel(f_valid, f8, t_valid, pad, nt2, nfft2, hop2, k2, use_bf16),
        out_shape=out_shape,
        in_specs=[_VMEM_SPEC] * 6,
        out_specs=(_VMEM_SPEC,) * 3,
        compiler_params=pltpu.CompilerParams(vmem_limit_bytes=_vmem_limit_bytes()),
        cost_estimate=pl.CostEstimate(flops=flops, transcendentals=transcendentals,
                                      bytes_accessed=bytes_accessed),
    )(sdb, db_left, db_right, weights_col, mod_basis, mod_w)


# --------------------------------- the module ---------------------------------

class ResynthesisFeaturesPallas:
    FEATURE_WEIGHTS = {'spectrogram_energy': 8.0, 'spectral_flux': 5.0,
                       'modulation_spectrogram_energy': 10.0, 'covariance': 10.0,
                       'spectral_flatness_energy': 50.0, 'spectral_flatness_variance': 50.0,
                       'transient': 20.0}

    def __init__(self, audio, sample_rate, n_fft=64, param_key=None, use_bf16_matmul=False):
        self.sample_rate = sample_rate
        self.hop_length = 64
        self.n_fft = n_fft   # reduced from 2048 to keep the demo spectrogram small
        # TODO(synk): flip to True on v6e/v7x once feature tolerances vs the f32
        #             reference are validated (halves matmul VMEM/DMA, ~4x MXU rate).
        self.use_bf16_matmul = use_bf16_matmul

        spec = stft_magnitude(audio, self.n_fft, self.hop_length)
        self.target_log_spectrogram = 20.0 * jnp.log10(spec)
        if bool(jnp.any(jnp.isnan(self.target_log_spectrogram))):
            raise ValueError('NaN detected in log spectrogram')

        self.frame_rate = self.hop_length / self.sample_rate
        self.nfft2 = int(2.0 / self.frame_rate)
        self.hop2 = self.nfft2 // 4
        self.pad2 = self.nfft2 // 2
        self.t_frames = int(self.target_log_spectrogram.shape[1])
        t_pad = self.t_frames + 2 * self.pad2
        self.nt2 = (t_pad - self.nfft2) // self.hop2 + 1
        self.k2 = self.nfft2 // 2 + 1

        n_bins = self.target_log_spectrogram.shape[0]
        self.f_valid = n_bins - 2                        # frequency_slice = 1:-1
        self.f8 = ((self.f_valid + 7) // 8) * 8          # sublane-aligned frequency extent

        bin_freqs = np.linspace(0.0, self.sample_rate / 2.0, n_bins)[1:-1]
        w = np.zeros((self.f8, 1), np.float32)
        w[:self.f_valid, 0] = frequency_to_weight(bin_freqs)   # padded bins get weight 0
        self.iso_weights = jnp.asarray(w)

        # Small shared windowed-rDFT basis [cos | sin] for the modulation spectrogram.
        win2 = 0.5 - 0.5 * np.cos(2.0 * np.pi * np.arange(self.nfft2) / self.nfft2)
        ang = 2.0 * np.pi * np.outer(np.arange(self.nfft2), np.arange(self.k2)) / self.nfft2
        basis = np.concatenate([win2[:, None] * np.cos(ang),
                                win2[:, None] * np.sin(ang)], axis=1)
        self.mod_basis = jnp.asarray(basis, dtype=jnp.float32)          # (nfft2, 2*K)
        mw = np.ones((1, self.k2), np.float32)
        mw[0, 1:] = np.arange(1, self.k2, dtype=np.float32) ** (-0.5)
        self.mod_weights = jnp.asarray(mw)   # column 0 (DC mod-freq) is dropped downstream

        target_unnorm = self.get_unnormalized_features(self.target_log_spectrogram)
        self.feature_weights = dict(self.FEATURE_WEIGHTS)
        self.normalization_factors = {
            key: self.feature_weights.get(key, 1.0) / jnp.sqrt(jnp.mean(jnp.square(value)))
            for key, value in target_unnorm.items()}
        self.target_features = self.normalize_features(target_unnorm)

        # Parameter init: randn_like(target) * std(target) + median(target)
        tls = self.target_log_spectrogram
        std = jnp.sqrt(jnp.sum(jnp.square(tls - jnp.mean(tls))) / (tls.size - 1))
        median = jnp.sort(tls.reshape(-1))[(tls.size - 1) // 2]   # torch-style lower median
        noise = jax.random.normal(param_key, tls.shape, jnp.float32)
        self.estimated_log_spectrogram = noise * std + median

    # ---- feature pipeline (one fused Pallas kernel + glue) ----
    def get_unnormalized_features(self, log_spectrogram):
        sdb = log_spectrogram[1:-1, :]                    # (F, T)
        pad = self.pad2
        t = self.t_frames
        # reflect strips for the modulation-spectrogram framing (host glue)
        left = sdb[:, 1:pad + 1][:, ::-1]
        right = sdb[:, t - pad - 1:t - 1][:, ::-1]
        rows = self.f8 - self.f_valid
        padf = lambda x: jnp.pad(x, ((0, rows), (0, 0)))  # zero-pad frequency to f8

        o_slab, o_scal, cov = pallas_resynth_features(
            padf(sdb), padf(left), padf(right), self.iso_weights,
            self.mod_basis, self.mod_weights,
            f_valid=self.f_valid, t_valid=t, pad=pad, nt2=self.nt2,
            nfft2=self.nfft2, hop2=self.hop2, k2=self.k2,
            use_bf16=self.use_bf16_matmul)
        o_slab = o_slab[:self.f_valid]
        cov = cov[:self.f_valid, :self.f_valid]

        k = self.k2
        b = 8
        return {
            'spectrogram_energy': o_slab[:, 0],
            'spectrogram_variance': o_slab[:, 1],
            'spectrogram_skewness': o_slab[:, 2],
            'spectrogram_kurtosis': o_slab[:, 3],
            'spectral_variance': o_scal[0, 0],
            'spectral_skewness': o_scal[0, 1],
            'spectral_kurtosis': o_scal[0, 2],
            'spectral_flatness_energy': o_scal[0, 3],
            'spectral_flatness_variance': o_scal[0, 4],
            'spectral_flatness_skewness': o_scal[0, 5],
            'spectral_flatness_kurtosis': o_scal[0, 6],
            'spectral_flux': o_slab[:, 4],
            'energy_energy': o_scal[0, 7],
            'energy_variance': o_scal[0, 8],
            'energy_skewness': o_scal[0, 9],
            'energy_kurtosis': o_scal[0, 10],
            'covariance': cov,
            'transient': o_slab[:, 5],
            'modulation_spectrogram_energy': o_slab[:, b + 1:b + k],
            'modulation_spectrogram_variance': o_slab[:, b + k + 1:b + 2 * k],
            'modulation_spectrogram_skewness': o_slab[:, b + 2 * k + 1:b + 3 * k],
            'modulation_spectrogram_kurtosis': o_slab[:, b + 3 * k + 1:b + 4 * k],
        }

    def normalize_features(self, features):
        return jnp.concatenate([jnp.ravel(value * self.normalization_factors[key])
                                for key, value in features.items()])

    def get_features(self, spectrogram):
        return self.normalize_features(self.get_unnormalized_features(spectrogram))

    def forward(self):
        return self.get_features(self.estimated_log_spectrogram)


# ------------------------------------ main ------------------------------------

if __name__ == "__main__":
    sample_rate = 512          # -> frame_rate = 64/512, modulation n_fft = 16, hop = 4
    key = jax.random.PRNGKey(0)
    k_audio, k_param = jax.random.split(key)
    audio = jax.random.normal(k_audio, (4032,), jnp.float32)   # -> 64 spectrogram frames

    model = ResynthesisFeaturesPallas(audio, sample_rate, n_fft=64, param_key=k_param)
    out = model.forward()
    out = jax.block_until_ready(out)

    # sanity checks
    fp = model.target_log_spectrogram.shape[0] - 2        # 31 usable frequency bins
    km = model.nfft2 // 2                                  # 8 kept modulation bins
    expected_len = 4 * fp + 3 + 4 + fp + 4 + fp * fp + fp + 4 * fp * km
    assert out.ndim == 1 and out.shape[0] == expected_len
    assert bool(jnp.all(jnp.isfinite(out)))
    print("KERNEL_OK")
</pallas_src>

<mosaic_0001>
module attributes {stable_mosaic.version = 11 : i64} {
  func.func @kernel(%arg0: memref<32x64xf32, #tpu.memory_space<vmem>>, %arg1: memref<32x8xf32, #tpu.memory_space<vmem>>, %arg2: memref<32x8xf32, #tpu.memory_space<vmem>>, %arg3: memref<32x1xf32, #tpu.memory_space<vmem>>, %arg4: memref<16x18xf32, #tpu.memory_space<vmem>>, %arg5: memref<1x9xf32, #tpu.memory_space<vmem>>, %arg6: memref<32x128xf32, #tpu.memory_space<vmem>>, %arg7: memref<1x16xf32, #tpu.memory_space<vmem>>, %arg8: memref<32x32xf32, #tpu.memory_space<vmem>>) attributes {dimension_semantics = [], scalar_prefetch = 0 : i64, scratch_operands = 0 : i64, tpu.core_type = #tpu.core_type<tc>} {
    %c0 = arith.constant 0 : index
    %c0_0 = arith.constant 0 : index
    %0 = vector.load %arg3[%c0, %c0_0] : memref<32x1xf32, #tpu.memory_space<vmem>>, vector<32x1xf32>
    %c0_1 = arith.constant 0 : index
    %c0_2 = arith.constant 0 : index
    %1 = vector.load %arg0[%c0_1, %c0_2] : memref<32x64xf32, #tpu.memory_space<vmem>>, vector<32x64xf32>
    %cst = arith.constant 0.115129255 : f32
    %2 = vector.broadcast %cst : f32 to vector<32x64xf32>
    %3 = arith.mulf %1, %2 : vector<32x64xf32>
    %4 = math.exp %3 : vector<32x64xf32>
    %5 = math.absf %1 : vector<32x64xf32>
    %cst_3 = arith.constant 1.000000e+00 : f32
    %6 = vector.broadcast %cst_3 : f32 to vector<32x64xf32>
    %7 = arith.addf %5, %6 : vector<32x64xf32>
    %8 = arith.minimumf %4, %7 : vector<32x64xf32>
    %9 = vector.broadcast %0 : vector<32x1xf32> to vector<32x64xf32>
    %10 = arith.mulf %8, %9 : vector<32x64xf32>
    %cst_4 = arith.constant dense<0.000000e+00> : vector<32xf32>
    %11 = vector.multi_reduction <add>, %1, %cst_4 [1] : vector<32x64xf32> to vector<32xf32>
    %12 = vector.shape_cast %11 : vector<32xf32> to vector<32x1xf32>
    %cst_5 = arith.constant 6.400000e+01 : f32
    %13 = vector.broadcast %cst_5 : f32 to vector<32x1xf32>
    %14 = arith.divf %12, %13 : vector<32x1xf32>
    %15 = vector.broadcast %14 : vector<32x1xf32> to vector<32x64xf32>
    %16 = arith.subf %1, %15 : vector<32x64xf32>
    %17 = arith.mulf %16, %16 : vector<32x64xf32>
    %cst_6 = arith.constant dense<0.000000e+00> : vector<32xf32>
    %18 = vector.multi_reduction <add>, %17, %cst_6 [1] : vector<32x64xf32> to vector<32xf32>
    %19 = vector.shape_cast %18 : vector<32xf32> to vector<32x1xf32>
    %cst_7 = arith.constant 0.0158730168 : f32
    %20 = vector.broadcast %cst_7 : f32 to vector<32x1xf32>
    %21 = arith.mulf %19, %20 : vector<32x1xf32>
    %22 = arith.mulf %17, %16 : vector<32x64xf32>
    %cst_8 = arith.constant dense<0.000000e+00> : vector<32xf32>
    %23 = vector.multi_reduction <add>, %22, %cst_8 [1] : vector<32x64xf32> to vector<32xf32>
    %24 = vector.shape_cast %23 : vector<32xf32> to vector<32x1xf32>
    %25 = arith.mulf %17, %17 : vector<32x64xf32>
    %cst_9 = arith.constant dense<0.000000e+00> : vector<32xf32>
    %26 = vector.multi_reduction <add>, %25, %cst_9 [1] : vector<32x64xf32> to vector<32xf32>
    %27 = vector.shape_cast %26 : vector<32xf32> to vector<32x1xf32>
    %28 = vector.extract_strided_slice %10 {offsets = [0, 0], sizes = [32, 63], strides = [1, 1]} : vector<32x64xf32> to vector<32x63xf32>
    %29 = vector.extract_strided_slice %10 {offsets = [0, 1], sizes = [32, 63], strides = [1, 1]} : vector<32x64xf32> to vector<32x63xf32>
    %30 = arith.subf %29, %28 : vector<32x63xf32>
    %31 = math.absf %30 : vector<32x63xf32>
    %cst_10 = arith.constant dense<0.000000e+00> : vector<32xf32>
    %32 = vector.multi_reduction <add>, %31, %cst_10 [1] : vector<32x63xf32> to vector<32xf32>
    %33 = vector.shape_cast %32 : vector<32xf32> to vector<32x1xf32>
    %cst_11 = arith.constant 0.0158730168 : f32
    %34 = vector.broadcast %cst_11 : f32 to vector<32x1xf32>
    %35 = arith.mulf %33, %34 : vector<32x1xf32>
    %36 = arith.mulf %28, %28 : vector<32x63xf32>
    %37 = arith.mulf %29, %29 : vector<32x63xf32>
    %cst_12 = arith.constant 1.000000e-03 : f32
    %38 = vector.broadcast %cst_12 : f32 to vector<32x63xf32>
    %39 = arith.addf %37, %38 : vector<32x63xf32>
    %40 = arith.divf %36, %39 : vector<32x63xf32>
    %cst_13 = arith.constant dense<0.000000e+00> : vector<32xf32>
    %41 = vector.multi_reduction <add>, %40, %cst_13 [1] : vector<32x63xf32> to vector<32xf32>
    %42 = vector.shape_cast %41 : vector<32xf32> to vector<32x1xf32>
    %cst_14 = arith.constant 0.0158730168 : f32
    %43 = vector.broadcast %cst_14 : f32 to vector<32x1xf32>
    %44 = arith.mulf %42, %43 : vector<32x1xf32>
    %45 = math.sqrt %44 : vector<32x1xf32>
    %46 = tpu.iota {dimensions = array<i32: 0>} : vector<32x1xi32>
    %c31_i32 = arith.constant 31 : i32
    %47 = vector.broadcast %c31_i32 : i32 to vector<32x1xi32>
    %48 = arith.cmpi slt, %46, %47 : vector<32x1xi32>
    %49 = arith.extui %48 : vector<32x1xi1> to vector<32x1xi32>
    %50 = arith.sitofp %49 : vector<32x1xi32> to vector<32x1xf32>
    %cst_15 = arith.constant dense<0.000000e+00> : vector<64xf32>
    %51 = vector.multi_reduction <add>, %10, %cst_15 [0] : vector<32x64xf32> to vector<64xf32>
    %52 = vector.shape_cast %51 : vector<64xf32> to vector<1x64xf32>
    %cst_16 = arith.constant 0.0322580636 : f32
    %53 = vector.broadcast %cst_16 : f32 to vector<1x64xf32>
    %54 = arith.mulf %52, %53 : vector<1x64xf32>
    %55 = vector.broadcast %54 : vector<1x64xf32> to vector<32x64xf32>
    %56 = arith.subf %10, %55 : vector<32x64xf32>
    %57 = vector.broadcast %50 : vector<32x1xf32> to vector<32x64xf32>
    %58 = arith.mulf %56, %57 : vector<32x64xf32>
    %59 = arith.mulf %58, %58 : vector<32x64xf32>
    %cst_17 = arith.constant dense<0.000000e+00> : vector<64xf32>
    %60 = vector.multi_reduction <add>, %59, %cst_17 [0] : vector<32x64xf32> to vector<64xf32>
    %61 = vector.shape_cast %60 : vector<64xf32> to vector<1x64xf32>
    %cst_18 = arith.constant 0.0333333351 : f32
    %62 = vector.broadcast %cst_18 : f32 to vector<1x64xf32>
    %63 = arith.mulf %61, %62 : vector<1x64xf32>
    %cst_19 = arith.constant dense<0.000000e+00> : vector<1xf32>
    %64 = vector.multi_reduction <add>, %63, %cst_19 [1] : vector<1x64xf32> to vector<1xf32>
    %65 = vector.shape_cast %64 : vector<1xf32> to vector<1x1xf32>
    %cst_20 = arith.constant 6.400000e+01 : f32
    %66 = vector.broadcast %cst_20 : f32 to vector<1x1xf32>
    %67 = arith.divf %65, %66 : vector<1x1xf32>
    %68 = arith.mulf %59, %58 : vector<32x64xf32>
    %cst_21 = arith.constant dense<0.000000e+00> : vector<64xf32>
    %69 = vector.multi_reduction <add>, %68, %cst_21 [0] : vector<32x64xf32> to vector<64xf32>
    %70 = vector.shape_cast %69 : vector<64xf32> to vector<1x64xf32>
    %cst_22 = arith.constant dense<0.000000e+00> : vector<1xf32>
    %71 = vector.multi_reduction <add>, %70, %cst_22 [1] : vector<1x64xf32> to vector<1xf32>
    %72 = vector.shape_cast %71 : vector<1xf32> to vector<1x1xf32>
    %cst_23 = arith.constant 5.04032243E-4 : f32
    %73 = vector.broadcast %cst_23 : f32 to vector<1x1xf32>
    %74 = arith.mulf %72, %73 : vector<1x1xf32>
    %75 = arith.mulf %59, %59 : vector<32x64xf32>
    %cst_24 = arith.constant dense<0.000000e+00> : vector<64xf32>
    %76 = vector.multi_reduction <add>, %75, %cst_24 [0] : vector<32x64xf32> to vector<64xf32>
    %77 = vector.shape_cast %76 : vector<64xf32> to vector<1x64xf32>
    %cst_25 = arith.constant dense<0.000000e+00> : vector<1xf32>
    %78 = vector.multi_reduction <add>, %77, %cst_25 [1] : vector<1x64xf32> to vector<1xf32>
    %79 = vector.shape_cast %78 : vector<1xf32> to vector<1x1xf32>
    %cst_26 = arith.constant 5.04032243E-4 : f32
    %80 = vector.broadcast %cst_26 : f32 to vector<1x1xf32>
    %81 = arith.mulf %79, %80 : vector<1x1xf32>
    %82 = math.exp %54 : vector<1x64xf32>
    %cst_27 = arith.constant 1.000000e+00 : f32
    %83 = vector.broadcast %cst_27 : f32 to vector<1x64xf32>
    %84 = arith.addf %83, %54 : vector<1x64xf32>
    %85 = arith.divf %82, %84 : vector<1x64xf32>
    %cst_28 = arith.constant dense<0.000000e+00> : vector<1xf32>
    %86 = vector.multi_reduction <add>, %85, %cst_28 [1] : vector<1x64xf32> to vector<1xf32>
    %87 = vector.shape_cast %86 : vector<1xf32> to vector<1x1xf32>
    %cst_29 = arith.constant 6.400000e+01 : f32
    %88 = vector.broadcast %cst_29 : f32 to vector<1x1xf32>
    %89 = arith.divf %87, %88 : vector<1x1xf32>
    %90 = vector.broadcast %89 : vector<1x1xf32> to vector<1x64xf32>
    %91 = arith.subf %85, %90 : vector<1x64xf32>
    %92 = arith.mulf %91, %91 : vector<1x64xf32>
    %cst_30 = arith.constant dense<0.000000e+00> : vector<1xf32>
    %93 = vector.multi_reduction <add>, %92, %cst_30 [1] : vector<1x64xf32> to vector<1xf32>
    %94 = vector.shape_cast %93 : vector<1xf32> to vector<1x1xf32>
    %cst_31 = arith.constant 0.0158730168 : f32
    %95 = vector.broadcast %cst_31 : f32 to vector<1x1xf32>
    %96 = arith.mulf %94, %95 : vector<1x1xf32>
    %97 = arith.mulf %92, %91 : vector<1x64xf32>
    %cst_32 = arith.constant dense<0.000000e+00> : vector<1xf32>
    %98 = vector.multi_reduction <add>, %97, %cst_32 [1] : vector<1x64xf32> to vector<1xf32>
    %99 = vector.shape_cast %98 : vector<1xf32> to vector<1x1xf32>
    %100 = arith.mulf %92, %92 : vector<1x64xf32>
    %cst_33 = arith.constant dense<0.000000e+00> : vector<1xf32>
    %101 = vector.multi_reduction <add>, %100, %cst_33 [1] : vector<1x64xf32> to vector<1xf32>
    %102 = vector.shape_cast %101 : vector<1xf32> to vector<1x1xf32>
    %cst_34 = arith.constant dense<0.000000e+00> : vector<1xf32>
    %103 = vector.multi_reduction <add>, %54, %cst_34 [1] : vector<1x64xf32> to vector<1xf32>
    %104 = vector.shape_cast %103 : vector<1xf32> to vector<1x1xf32>
    %cst_35 = arith.constant 6.400000e+01 : f32
    %105 = vector.broadcast %cst_35 : f32 to vector<1x1xf32>
    %106 = arith.divf %104, %105 : vector<1x1xf32>
    %107 = vector.broadcast %106 : vector<1x1xf32> to vector<1x64xf32>
    %108 = arith.subf %54, %107 : vector<1x64xf32>
    %109 = arith.mulf %108, %108 : vector<1x64xf32>
    %cst_36 = arith.constant dense<0.000000e+00> : vector<1xf32>
    %110 = vector.multi_reduction <add>, %109, %cst_36 [1] : vector<1x64xf32> to vector<1xf32>
    %111 = vector.shape_cast %110 : vector<1xf32> to vector<1x1xf32>
    %cst_37 = arith.constant 0.0158730168 : f32
    %112 = vector.broadcast %cst_37 : f32 to vector<1x1xf32>
    %113 = arith.mulf %111, %112 : vector<1x1xf32>
    %114 = arith.mulf %109, %108 : vector<1x64xf32>
    %cst_38 = arith.constant dense<0.000000e+00> : vector<1xf32>
    %115 = vector.multi_reduction <add>, %114, %cst_38 [1] : vector<1x64xf32> to vector<1xf32>
    %116 = vector.shape_cast %115 : vector<1xf32> to vector<1x1xf32>
    %117 = arith.mulf %109, %109 : vector<1x64xf32>
    %cst_39 = arith.constant dense<0.000000e+00> : vector<1xf32>
    %118 = vector.multi_reduction <add>, %117, %cst_39 [1] : vector<1x64xf32> to vector<1xf32>
    %119 = vector.shape_cast %118 : vector<1xf32> to vector<1x1xf32>
    %cst_40 = arith.constant dense<0.000000e+00> : vector<32xf32>
    %120 = vector.multi_reduction <add>, %10, %cst_40 [1] : vector<32x64xf32> to vector<32xf32>
    %121 = vector.shape_cast %120 : vector<32xf32> to vector<32x1xf32>
    %cst_41 = arith.constant 6.400000e+01 : f32
    %122 = vector.broadcast %cst_41 : f32 to vector<32x1xf32>
    %123 = arith.divf %121, %122 : vector<32x1xf32>
    %124 = vector.broadcast %123 : vector<32x1xf32> to vector<32x64xf32>
    %125 = arith.subf %10, %124 : vector<32x64xf32>
    %cst_42 = arith.constant dense<0.000000e+00> : vector<32x32xf32>
    %126 = tpu.matmul %125, %125, %cst_42 {dimension_numbers = #tpu.dot_dimension_numbers<[1], [1], [0], [0], [0, 0, 1, 0], [], []>} : vector<32x64xf32>, vector<32x64xf32>, vector<32x32xf32> -> vector<32x32xf32>
    %cst_43 = arith.constant 0.0158730168 : f32
    %127 = vector.broadcast %cst_43 : f32 to vector<32x32xf32>
    %128 = arith.mulf %126, %127 : vector<32x32xf32>
    %c0_44 = arith.constant 0 : index
    %c0_45 = arith.constant 0 : index
    %129 = vector.load %arg8[%c0_44, %c0_45] : memref<32x32xf32, #tpu.memory_space<vmem>>, vector<32x32xf32>
    tpu.vector_store %arg8[%c0_44, %c0_45], %128 {strides = array<i32>} : memref<32x32xf32, #tpu.memory_space<vmem>>, vector<32x32xf32>,
    %c0_46 = arith.constant 0 : index
    %c0_47 = arith.constant 0 : index
    %130 = vector.load %arg1[%c0_46, %c0_47] : memref<32x8xf32, #tpu.memory_space<vmem>>, vector<32x8xf32>
    %cst_48 = arith.constant 0.115129255 : f32
    %131 = vector.broadcast %cst_48 : f32 to vector<32x8xf32>
    %132 = arith.mulf %130, %131 : vector<32x8xf32>
    %133 = math.exp %132 : vector<32x8xf32>
    %134 = math.absf %130 : vector<32x8xf32>
    %cst_49 = arith.constant 1.000000e+00 : f32
    %135 = vector.broadcast %cst_49 : f32 to vector<32x8xf32>
    %136 = arith.addf %134, %135 : vector<32x8xf32>
    %137 = arith.minimumf %133, %136 : vector<32x8xf32>
    %138 = vector.broadcast %0 : vector<32x1xf32> to vector<32x8xf32>
    %139 = arith.mulf %137, %138 : vector<32x8xf32>
    %c0_50 = arith.constant 0 : index
    %c0_51 = arith.constant 0 : index
    %140 = vector.load %arg2[%c0_50, %c0_51] : memref<32x8xf32, #tpu.memory_space<vmem>>, vector<32x8xf32>
    %cst_52 = arith.constant 0.115129255 : f32
    %141 = vector.broadcast %cst_52 : f32 to vector<32x8xf32>
    %142 = arith.mulf %140, %141 : vector<32x8xf32>
    %143 = math.exp %142 : vector<32x8xf32>
    %144 = math.absf %140 : vector<32x8xf32>
    %cst_53 = arith.constant 1.000000e+00 : f32
    %145 = vector.broadcast %cst_53 : f32 to vector<32x8xf32>
    %146 = arith.addf %144, %145 : vector<32x8xf32>
    %147 = arith.minimumf %143, %146 : vector<32x8xf32>
    %148 = vector.broadcast %0 : vector<32x1xf32> to vector<32x8xf32>
    %149 = arith.mulf %147, %148 : vector<32x8xf32>
    %150 = tpu.concatenate %139, %10, %149 in 1 : vector<32x8xf32>, vector<32x64xf32>, vector<32x8xf32> -> vector<32x80xf32>
    %151 = vector.extract_strided_slice %150 {offsets = [0, 0], sizes = [32, 16], strides = [1, 1]} : vector<32x80xf32> to vector<32x16xf32>
    %152 = vector.extract_strided_slice %150 {offsets = [0, 4], sizes = [32, 16], strides = [1, 1]} : vector<32x80xf32> to vector<32x16xf32>
    %153 = vector.extract_strided_slice %150 {offsets = [0, 8], sizes = [32, 16], strides = [1, 1]} : vector<32x80xf32> to vector<32x16xf32>
    %154 = vector.extract_strided_slice %150 {offsets = [0, 12], sizes = [32, 16], strides = [1, 1]} : vector<32x80xf32> to vector<32x16xf32>
    %155 = vector.extract_strided_slice %150 {offsets = [0, 16], sizes = [32, 16], strides = [1, 1]} : vector<32x80xf32> to vector<32x16xf32>
    %156 = vector.extract_strided_slice %150 {offsets = [0, 20], sizes = [32, 16], strides = [1, 1]} : vector<32x80xf32> to vector<32x16xf32>
    %157 = vector.extract_strided_slice %150 {offsets = [0, 24], sizes = [32, 16], strides = [1, 1]} : vector<32x80xf32> to vector<32x16xf32>
    %158 = vector.extract_strided_slice %150 {offsets = [0, 28], sizes = [32, 16], strides = [1, 1]} : vector<32x80xf32> to vector<32x16xf32>
    %159 = vector.extract_strided_slice %150 {offsets = [0, 32], sizes = [32, 16], strides = [1, 1]} : vector<32x80xf32> to vector<32x16xf32>
    %160 = vector.extract_strided_slice %150 {offsets = [0, 36], sizes = [32, 16], strides = [1, 1]} : vector<32x80xf32> to vector<32x16xf32>
    %161 = vector.extract_strided_slice %150 {offsets = [0, 40], sizes = [32, 16], strides = [1, 1]} : vector<32x80xf32> to vector<32x16xf32>
    %162 = vector.extract_strided_slice %150 {offsets = [0, 44], sizes = [32, 16], strides = [1, 1]} : vector<32x80xf32> to vector<32x16xf32>
    %163 = vector.extract_strided_slice %150 {offsets = [0, 48], sizes = [32, 16], strides = [1, 1]} : vector<32x80xf32> to vector<32x16xf32>
    %164 = vector.extract_strided_slice %150 {offsets = [0, 52], sizes = [32, 16], strides = [1, 1]} : vector<32x80xf32> to vector<32x16xf32>
    %165 = vector.extract_strided_slice %150 {offsets = [0, 56], sizes = [32, 16], strides = [1, 1]} : vector<32x80xf32> to vector<32x16xf32>
    %166 = vector.extract_strided_slice %150 {offsets = [0, 60], sizes = [32, 16], strides = [1, 1]} : vector<32x80xf32> to vector<32x16xf32>
    %167 = vector.extract_strided_slice %150 {offsets = [0, 64], sizes = [32, 16], strides = [1, 1]} : vector<32x80xf32> to vector<32x16xf32>
    %168 = tpu.concatenate %151, %152, %153, %154, %155, %156, %157, %158, %159, %160, %161, %162, %163, %164, %165, %166 in 0 : vector<32x16xf32>, vector<32x16xf32>, vector<32x16xf32>, vector<32x16xf32>, vector<32x16xf32>, vector<32x16xf32>, vector<32x16xf32>, vector<32x16xf32>, vector<32x16xf32>, vector<32x16xf32>, vector<32x16xf32>, vector<32x16xf32>, vector<32x16xf32>, vector<32x16xf32>, vector<32x16xf32>, vector<32x16xf32> -> vector<512x16xf32>
    %169 = tpu.concatenate %168, %167 in 0 : vector<512x16xf32>, vector<32x16xf32> -> vector<544x16xf32>
    %c0_54 = arith.constant 0 : index
    %c0_55 = arith.constant 0 : index
    %170 = vector.load %arg4[%c0_54, %c0_55] : memref<16x18xf32, #tpu.memory_space<vmem>>, vector<16x18xf32>
    %cst_56 = arith.constant dense<0.000000e+00> : vector<544x18xf32>
    %171 = tpu.matmul %169, %170, %cst_56 {dimension_numbers = #tpu.dot_dimension_numbers<[1], [0], [0], [1], [0, 0, 1, 1], [], []>} : vector<544x16xf32>, vector<16x18xf32>, vector<544x18xf32> -> vector<544x18xf32>
    %172 = vector.extract_strided_slice %171 {offsets = [0, 0], sizes = [544, 9], strides = [1, 1]} : vector<544x18xf32> to vector<544x9xf32>
    %173 = vector.extract_strided_slice %171 {offsets = [0, 9], sizes = [544, 9], strides = [1, 1]} : vector<544x18xf32> to vector<544x9xf32>
    %174 = arith.mulf %172, %172 : vector<544x9xf32>
    %175 = arith.mulf %173, %173 : vector<544x9xf32>
    %176 = arith.addf %174, %175 : vector<544x9xf32>
    %177 = math.sqrt %176 : vector<544x9xf32>
    %178 = vector.extract_strided_slice %177 {offsets = [0, 0], sizes = [32, 9], strides = [1, 1]} : vector<544x9xf32> to vector<32x9xf32>
    %179 = vector.extract_strided_slice %177 {offsets = [32, 0], sizes = [32, 9], strides = [1, 1]} : vector<544x9xf32> to vector<32x9xf32>
    %180 = arith.addf %178, %179 : vector<32x9xf32>
    %181 = vector.extract_strided_slice %177 {offsets = [64, 0], sizes = [32, 9], strides = [1, 1]} : vector<544x9xf32> to vector<32x9xf32>
    %182 = arith.addf %180, %181 : vector<32x9xf32>
    %183 = vector.extract_strided_slice %177 {offsets = [96, 0], sizes = [32, 9], strides = [1, 1]} : vector<544x9xf32> to vector<32x9xf32>
    %184 = arith.addf %182, %183 : vector<32x9xf32>
    %185 = vector.extract_strided_slice %177 {offsets = [128, 0], sizes = [32, 9], strides = [1, 1]} : vector<544x9xf32> to vector<32x9xf32>
    %186 = arith.addf %184, %185 : vector<32x9xf32>
    %187 = vector.extract_strided_slice %177 {offsets = [160, 0], sizes = [32, 9], strides = [1, 1]} : vector<544x9xf32> to vector<32x9xf32>
    %188 = arith.addf %186, %187 : vector<32x9xf32>
    %189 = vector.extract_strided_slice %177 {offsets = [192, 0], sizes = [32, 9], strides = [1, 1]} : vector<544x9xf32> to vector<32x9xf32>
    %190 = arith.addf %188, %189 : vector<32x9xf32>
    %191 = vector.extract_strided_slice %177 {offsets = [224, 0], sizes = [32, 9], strides = [1, 1]} : vector<544x9xf32> to vector<32x9xf32>
    %192 = arith.addf %190, %191 : vector<32x9xf32>
    %193 = vector.extract_strided_slice %177 {offsets = [256, 0], sizes = [32, 9], strides = [1, 1]} : vector<544x9xf32> to vector<32x9xf32>
    %194 = arith.addf %192, %193 : vector<32x9xf32>
    %195 = vector.extract_strided_slice %177 {offsets = [288, 0], sizes = [32, 9], strides = [1, 1]} : vector<544x9xf32> to vector<32x9xf32>
    %196 = arith.addf %194, %195 : vector<32x9xf32>
    %197 = vector.extract_strided_slice %177 {offsets = [320, 0], sizes = [32, 9], strides = [1, 1]} : vector<544x9xf32> to vector<32x9xf32>
    %198 = arith.addf %196, %197 : vector<32x9xf32>
    %199 = vector.extract_strided_slice %177 {offsets = [352, 0], sizes = [32, 9], strides = [1, 1]} : vector<544x9xf32> to vector<32x9xf32>
    %200 = arith.addf %198, %199 : vector<32x9xf32>
    %201 = vector.extract_strided_slice %177 {offsets = [384, 0], sizes = [32, 9], strides = [1, 1]} : vector<544x9xf32> to vector<32x9xf32>
    %202 = arith.addf %200, %201 : vector<32x9xf32>
    %203 = vector.extract_strided_slice %177 {offsets = [416, 0], sizes = [32, 9], strides = [1, 1]} : vector<544x9xf32> to vector<32x9xf32>
    %204 = arith.addf %202, %203 : vector<32x9xf32>
    %205 = vector.extract_strided_slice %177 {offsets = [448, 0], sizes = [32, 9], strides = [1, 1]} : vector<544x9xf32> to vector<32x9xf32>
    %206 = arith.addf %204, %205 : vector<32x9xf32>
    %207 = vector.extract_strided_slice %177 {offsets = [480, 0], sizes = [32, 9], strides = [1, 1]} : vector<544x9xf32> to vector<32x9xf32>
    %208 = arith.addf %206, %207 : vector<32x9xf32>
    %209 = vector.extract_strided_slice %177 {offsets = [512, 0], sizes = [32, 9], strides = [1, 1]} : vector<544x9xf32> to vector<32x9xf32>
    %210 = arith.addf %208, %209 : vector<32x9xf32>
    %cst_57 = arith.constant 0.0588235296 : f32
    %211 = vector.broadcast %cst_57 : f32 to vector<32x9xf32>
    %212 = arith.mulf %210, %211 : vector<32x9xf32>
    %c0_58 = arith.constant 0 : index
    %c0_59 = arith.constant 0 : index
    %213 = vector.load %arg5[%c0_58, %c0_59] : memref<1x9xf32, #tpu.memory_space<vmem>>, vector<1x9xf32>
    %214 = vector.broadcast %213 : vector<1x9xf32> to vector<32x9xf32>
    %215 = arith.mulf %212, %214 : vector<32x9xf32>
    %cst_60 = arith.constant 0.000000e+00 : f32
    %216 = vector.broadcast %cst_60 : f32 to vector<32x9xf32>
    %cst_61 = arith.constant 0.000000e+00 : f32
    %217 = vector.broadcast %cst_61 : f32 to vector<32x9xf32>
    %cst_62 = arith.constant 0.000000e+00 : f32
    %218 = vector.broadcast %cst_62 : f32 to vector<32x9xf32>
    %219 = vector.extract_strided_slice %177 {offsets = [0, 0], sizes = [32, 9], strides = [1, 1]} : vector<544x9xf32> to vector<32x9xf32>
    %220 = arith.subf %219, %212 : vector<32x9xf32>
    %221 = arith.mulf %220, %220 : vector<32x9xf32>
    %222 = arith.addf %216, %221 : vector<32x9xf32>
    %223 = arith.subf %219, %215 : vector<32x9xf32>
    %224 = arith.mulf %223, %223 : vector<32x9xf32>
    %225 = arith.mulf %224, %223 : vector<32x9xf32>
    %226 = arith.addf %217, %225 : vector<32x9xf32>
    %227 = arith.mulf %224, %224 : vector<32x9xf32>
    %228 = arith.addf %218, %227 : vector<32x9xf32>
    %229 = vector.extract_strided_slice %177 {offsets = [32, 0], sizes = [32, 9], strides = [1, 1]} : vector<544x9xf32> to vector<32x9xf32>
    %230 = arith.subf %229, %212 : vector<32x9xf32>
    %231 = arith.mulf %230, %230 : vector<32x9xf32>
    %232 = arith.addf %222, %231 : vector<32x9xf32>
    %233 = arith.subf %229, %215 : vector<32x9xf32>
    %234 = arith.mulf %233, %233 : vector<32x9xf32>
    %235 = arith.mulf %234, %233 : vector<32x9xf32>
    %236 = arith.addf %226, %235 : vector<32x9xf32>
    %237 = arith.mulf %234, %234 : vector<32x9xf32>
    %238 = arith.addf %228, %237 : vector<32x9xf32>
    %239 = vector.extract_strided_slice %177 {offsets = [64, 0], sizes = [32, 9], strides = [1, 1]} : vector<544x9xf32> to vector<32x9xf32>
    %240 = arith.subf %239, %212 : vector<32x9xf32>
    %241 = arith.mulf %240, %240 : vector<32x9xf32>
    %242 = arith.addf %232, %241 : vector<32x9xf32>
    %243 = arith.subf %239, %215 : vector<32x9xf32>
    %244 = arith.mulf %243, %243 : vector<32x9xf32>
    %245 = arith.mulf %244, %243 : vector<32x9xf32>
    %246 = arith.addf %236, %245 : vector<32x9xf32>
    %247 = arith.mulf %244, %244 : vector<32x9xf32>
    %248 = arith.addf %238, %247 : vector<32x9xf32>
    %249 = vector.extract_strided_slice %177 {offsets = [96, 0], sizes = [32, 9], strides = [1, 1]} : vector<544x9xf32> to vector<32x9xf32>
    %250 = arith.subf %249, %212 : vector<32x9xf32>
    %251 = arith.mulf %250, %250 : vector<32x9xf32>
    %252 = arith.addf %242, %251 : vector<32x9xf32>
    %253 = arith.subf %249, %215 : vector<32x9xf32>
    %254 = arith.mulf %253, %253 : vector<32x9xf32>
    %255 = arith.mulf %254, %253 : vector<32x9xf32>
    %256 = arith.addf %246, %255 : vector<32x9xf32>
    %257 = arith.mulf %254, %254 : vector<32x9xf32>
    %258 = arith.addf %248, %257 : vector<32x9xf32>
    %259 = vector.extract_strided_slice %177 {offsets = [128, 0], sizes = [32, 9], strides = [1, 1]} : vector<544x9xf32> to vector<32x9xf32>
    %260 = arith.subf %259, %212 : vector<32x9xf32>
    %261 = arith.mulf %260, %260 : vector<32x9xf32>
    %262 = arith.addf %252, %261 : vector<32x9xf32>
    %263 = arith.subf %259, %215 : vector<32x9xf32>
    %264 = arith.mulf %263, %263 : vector<32x9xf32>
    %265 = arith.mulf %264, %263 : vector<32x9xf32>
    %266 = arith.addf %256, %265 : vector<32x9xf32>
    %267 = arith.mulf %264, %264 : vector<32x9xf32>
    %268 = arith.addf %258, %267 : vector<32x9xf32>
    %269 = vector.extract_strided_slice %177 {offsets = [160, 0], sizes = [32, 9], strides = [1, 1]} : vector<544x9xf32> to vector<32x9xf32>
    %270 = arith.subf %269, %212 : vector<32x9xf32>
    %271 = arith.mulf %270, %270 : vector<32x9xf32>
    %272 = arith.addf %262, %271 : vector<32x9xf32>
    %273 = arith.subf %269, %215 : vector<32x9xf32>
    %274 = arith.mulf %273, %273 : vector<32x9xf32>
    %275 = arith.mulf %274, %273 : vector<32x9xf32>
    %276 = arith.addf %266, %275 : vector<32x9xf32>
    %277 = arith.mulf %274, %274 : vector<32x9xf32>
    %278 = arith.addf %268, %277 : vector<32x9xf32>
    %279 = vector.extract_strided_slice %177 {offsets = [192, 0], sizes = [32, 9], strides = [1, 1]} : vector<544x9xf32> to vector<32x9xf32>
    %280 = arith.subf %279, %212 : vector<32x9xf32>
    %281 = arith.mulf %280, %280 : vector<32x9xf32>
    %282 = arith.addf %272, %281 : vector<32x9xf32>
    %283 = arith.subf %279, %215 : vector<32x9xf32>
    %284 = arith.mulf %283, %283 : vector<32x9xf32>
    %285 = arith.mulf %284, %283 : vector<32x9xf32>
    %286 = arith.addf %276, %285 : vector<32x9xf32>
    %287 = arith.mulf %284, %284 : vector<32x9xf32>
    %288 = arith.addf %278, %287 : vector<32x9xf32>
    %289 = vector.extract_strided_slice %177 {offsets = [224, 0], sizes = [32, 9], strides = [1, 1]} : vector<544x9xf32> to vector<32x9xf32>
    %290 = arith.subf %289, %212 : vector<32x9xf32>
    %291 = arith.mulf %290, %290 : vector<32x9xf32>
    %292 = arith.addf %282, %291 : vector<32x9xf32>
    %293 = arith.subf %289, %215 : vector<32x9xf32>
    %294 = arith.mulf %293, %293 : vector<32x9xf32>
    %295 = arith.mulf %294, %293 : vector<32x9xf32>
    %296 = arith.addf %286, %295 : vector<32x9xf32>
    %297 = arith.mulf %294, %294 : vector<32x9xf32>
    %298 = arith.addf %288, %297 : vector<32x9xf32>
    %299 = vector.extract_strided_slice %177 {offsets = [256, 0], sizes = [32, 9], strides = [1, 1]} : vector<544x9xf32> to vector<32x9xf32>
    %300 = arith.subf %299, %212 : vector<32x9xf32>
    %301 = arith.mulf %300, %300 : vector<32x9xf32>
    %302 = arith.addf %292, %301 : vector<32x9xf32>
    %303 = arith.subf %299, %215 : vector<32x9xf32>
    %304 = arith.mulf %303, %303 : vector<32x9xf32>
    %305 = arith.mulf %304, %303 : vector<32x9xf32>
    %306 = arith.addf %296, %305 : vector<32x9xf32>
    %307 = arith.mulf %304, %304 : vector<32x9xf32>
    %308 = arith.addf %298, %307 : vector<32x9xf32>
    %309 = vector.extract_strided_slice %177 {offsets = [288, 0], sizes = [32, 9], strides = [1, 1]} : vector<544x9xf32> to vector<32x9xf32>
    %310 = arith.subf %309, %212 : vector<32x9xf32>
    %311 = arith.mulf %310, %310 : vector<32x9xf32>
    %312 = arith.addf %302, %311 : vector<32x9xf32>
    %313 = arith.subf %309, %215 : vector<32x9xf32>
    %314 = arith.mulf %313, %313 : vector<32x9xf32>
    %315 = arith.mulf %314, %313 : vector<32x9xf32>
    %316 = arith.addf %306, %315 : vector<32x9xf32>
    %317 = arith.mulf %314, %314 : vector<32x9xf32>
    %318 = arith.addf %308, %317 : vector<32x9xf32>
    %319 = vector.extract_strided_slice %177 {offsets = [320, 0], sizes = [32, 9], strides = [1, 1]} : vector<544x9xf32> to vector<32x9xf32>
    %320 = arith.subf %319, %212 : vector<32x9xf32>
    %321 = arith.mulf %320, %320 : vector<32x9xf32>
    %322 = arith.addf %312, %321 : vector<32x9xf32>
    %323 = arith.subf %319, %215 : vector<32x9xf32>
    %324 = arith.mulf %323, %323 : vector<32x9xf32>
    %325 = arith.mulf %324, %323 : vector<32x9xf32>
    %326 = arith.addf %316, %325 : vector<32x9xf32>
    %327 = arith.mulf %324, %324 : vector<32x9xf32>
    %328 = arith.addf %318, %327 : vector<32x9xf32>
    %329 = vector.extract_strided_slice %177 {offsets = [352, 0], sizes = [32, 9], strides = [1, 1]} : vector<544x9xf32> to vector<32x9xf32>
    %330 = arith.subf %329, %212 : vector<32x9xf32>
    %331 = arith.mulf %330, %330 : vector<32x9xf32>
    %332 = arith.addf %322, %331 : vector<32x9xf32>
    %333 = arith.subf %329, %215 : vector<32x9xf32>
    %334 = arith.mulf %333, %333 : vector<32x9xf32>
    %335 = arith.mulf %334, %333 : vector<32x9xf32>
    %336 = arith.addf %326, %335 : vector<32x9xf32>
    %337 = arith.mulf %334, %334 : vector<32x9xf32>
    %338 = arith.addf %328, %337 : vector<32x9xf32>
    %339 = vector.extract_strided_slice %177 {offsets = [384, 0], sizes = [32, 9], strides = [1, 1]} : vector<544x9xf32> to vector<32x9xf32>
    %340 = arith.subf %339, %212 : vector<32x9xf32>
    %341 = arith.mulf %340, %340 : vector<32x9xf32>
    %342 = arith.addf %332, %341 : vector<32x9xf32>
    %343 = arith.subf %339, %215 : vector<32x9xf32>
    %344 = arith.mulf %343, %343 : vector<32x9xf32>
    %345 = arith.mulf %344, %343 : vector<32x9xf32>
    %346 = arith.addf %336, %345 : vector<32x9xf32>
    %347 = arith.mulf %344, %344 : vector<32x9xf32>
    %348 = arith.addf %338, %347 : vector<32x9xf32>
    %349 = vector.extract_strided_slice %177 {offsets = [416, 0], sizes = [32, 9], strides = [1, 1]} : vector<544x9xf32> to vector<32x9xf32>
    %350 = arith.subf %349, %212 : vector<32x9xf32>
    %351 = arith.mulf %350, %350 : vector<32x9xf32>
    %352 = arith.addf %342, %351 : vector<32x9xf32>
    %353 = arith.subf %349, %215 : vector<32x9xf32>
    %354 = arith.mulf %353, %353 : vector<32x9xf32>
    %355 = arith.mulf %354, %353 : vector<32x9xf32>
    %356 = arith.addf %346, %355 : vector<32x9xf32>
    %357 = arith.mulf %354, %354 : vector<32x9xf32>
    %358 = arith.addf %348, %357 : vector<32x9xf32>
    %359 = vector.extract_strided_slice %177 {offsets = [448, 0], sizes = [32, 9], strides = [1, 1]} : vector<544x9xf32> to vector<32x9xf32>
    %360 = arith.subf %359, %212 : vector<32x9xf32>
    %361 = arith.mulf %360, %360 : vector<32x9xf32>
    %362 = arith.addf %352, %361 : vector<32x9xf32>
    %363 = arith.subf %359, %215 : vector<32x9xf32>
    %364 = arith.mulf %363, %363 : vector<32x9xf32>
    %365 = arith.mulf %364, %363 : vector<32x9xf32>
    %366 = arith.addf %356, %365 : vector<32x9xf32>
    %367 = arith.mulf %364, %364 : vector<32x9xf32>
    %368 = arith.addf %358, %367 : vector<32x9xf32>
    %369 = vector.extract_strided_slice %177 {offsets = [480, 0], sizes = [32, 9], strides = [1, 1]} : vector<544x9xf32> to vector<32x9xf32>
    %370 = arith.subf %369, %212 : vector<32x9xf32>
    %371 = arith.mulf %370, %370 : vector<32x9xf32>
    %372 = arith.addf %362, %371 : vector<32x9xf32>
    %373 = arith.subf %369, %215 : vector<32x9xf32>
    %374 = arith.mulf %373, %373 : vector<32x9xf32>
    %375 = arith.mulf %374, %373 : vector<32x9xf32>
    %376 = arith.addf %366, %375 : vector<32x9xf32>
    %377 = arith.mulf %374, %374 : vector<32x9xf32>
    %378 = arith.addf %368, %377 : vector<32x9xf32>
    %379 = vector.extract_strided_slice %177 {offsets = [512, 0], sizes = [32, 9], strides = [1, 1]} : vector<544x9xf32> to vector<32x9xf32>
    %380 = arith.subf %379, %212 : vector<32x9xf32>
    %381 = arith.mulf %380, %380 : vector<32x9xf32>
    %382 = arith.addf %372, %381 : vector<32x9xf32>
    %383 = arith.subf %379, %215 : vector<32x9xf32>
    %384 = arith.mulf %383, %383 : vector<32x9xf32>
    %385 = arith.mulf %384, %383 : vector<32x9xf32>
    %386 = arith.addf %376, %385 : vector<32x9xf32>
    %387 = arith.mulf %384, %384 : vector<32x9xf32>
    %388 = arith.addf %378, %387 : vector<32x9xf32>
    %cst_63 = arith.constant 6.250000e-02 : f32
    %389 = vector.broadcast %cst_63 : f32 to vector<32x9xf32>
    %390 = arith.mulf %382, %389 : vector<32x9xf32>
    %391 = vector.broadcast %213 : vector<1x9xf32> to vector<32x9xf32>
    %392 = arith.mulf %390, %391 : vector<32x9xf32>
    %393 = vector.broadcast %213 : vector<1x9xf32> to vector<32x9xf32>
    %394 = arith.mulf %386, %393 : vector<32x9xf32>
    %395 = vector.broadcast %213 : vector<1x9xf32> to vector<32x9xf32>
    %396 = arith.mulf %388, %395 : vector<32x9xf32>
    %cst_64 = arith.constant 0.000000e+00 : f32
    %397 = vector.broadcast %cst_64 : f32 to vector<32x2xf32>
    %cst_65 = arith.constant 0.000000e+00 : f32
    %398 = vector.broadcast %cst_65 : f32 to vector<32x84xf32>
    %399 = tpu.concatenate %14, %21, %24, %27, %35, %45, %397, %215, %392, %394, %396, %398 in 1 : vector<32x1xf32>, vector<32x1xf32>, vector<32x1xf32>, vector<32x1xf32>, vector<32x1xf32>, vector<32x1xf32>, vector<32x2xf32>, vector<32x9xf32>, vector<32x9xf32>, vector<32x9xf32>, vector<32x9xf32>, vector<32x84xf32> -> vector<32x128xf32>
    %c0_66 = arith.constant 0 : index
    %c0_67 = arith.constant 0 : index
    %400 = vector.load %arg6[%c0_66, %c0_67] : memref<32x128xf32, #tpu.memory_space<vmem>>, vector<32x128xf32>
    tpu.vector_store %arg6[%c0_66, %c0_67], %399 {strides = array<i32>} : memref<32x128xf32, #tpu.memory_space<vmem>>, vector<32x128xf32>,
    %cst_68 = arith.constant 0.000000e+00 : f32
    %401 = vector.broadcast %cst_68 : f32 to vector<1x5xf32>
    %402 = tpu.concatenate %67, %74, %81, %89, %96, %99, %102, %106, %113, %116, %119, %401 in 1 : vector<1x1xf32>, vector<1x1xf32>, vector<1x1xf32>, vector<1x1xf32>, vector<1x1xf32>, vector<1x1xf32>, vector<1x1xf32>, vector<1x1xf32>, vector<1x1xf32>, vector<1x1xf32>, vector<1x1xf32>, vector<1x5xf32> -> vector<1x16xf32>
    %c0_69 = arith.constant 0 : index
    %c0_70 = arith.constant 0 : index
    %403 = vector.load %arg7[%c0_69, %c0_70] : memref<1x16xf32, #tpu.memory_space<vmem>>, vector<1x16xf32>
    tpu.vector_store %arg7[%c0_69, %c0_70], %402 {strides = array<i32>} : memref<1x16xf32, #tpu.memory_space<vmem>>, vector<1x16xf32>,
    return
  }
}

</mosaic_0001>

<llo_original>
// kernel: tpu_custom_call.1
$region0: #{tpu_custom_call.1}
  #allocation0 [shape = 'u32[]', space=smem, size = 0x4, offset = 0x4, fixed_abs, tag = 'smem constant byte address 0x4 - core index']
  #allocation1 [shape = 'u32[144,128]{1,0:T(1,128)}', space=vmem, size = 0x12000, scoped, tag = 'internal scratch']
  %s0 = inlined_call_operand.vmem [shape: f32[32,64], index: 0, kind: input, shape index: {}]
  %s1 = inlined_call_operand.vmem [shape: f32[32,8], index: 1, kind: input, shape index: {}]
  %s2 = inlined_call_operand.vmem [shape: f32[32,8], index: 2, kind: input, shape index: {}]
  %s3 = inlined_call_operand.vmem [shape: f32[32,1], index: 3, kind: input, shape index: {}]
  %s4 = inlined_call_operand.vmem [shape: f32[16,18], index: 4, kind: input, shape index: {}]
  %s5 = inlined_call_operand.vmem [shape: f32[1,9], index: 5, kind: input, shape index: {}]
  %s6 = inlined_call_operand.hbm [shape: f32[32,128], index: 6, kind: output, shape index: {0}]
  %s7 = inlined_call_operand.hbm [shape: f32[1,16], index: 7, kind: output, shape index: {1}]
  %s8 = inlined_call_operand.hbm [shape: f32[32,32], index: 8, kind: output, shape index: {2}]
  %9 = xla_tuple %s6, %s7, %s8
  %s10 = sld [smem:[#allocation0]]
  $region50: #{tpu_custom_call.1} parent=0
    _
  %s12 = ssub.s32 1, %s10
  %s13 = scalar_select 0, %s12, %s10
  $region1: #{tpu_custom_call.1} parent=0
    #allocation2 [shape = 'u8[16384]{0}', space=vmem, size = 0x4000, scoped, tag = 'output window, operand 0, single buffered']
    #allocation3 [shape = 's32[1]{0}', space=sflag, size = 0x4, scoped, tag = 'scoped memory for tpu_custom_call.1']
    #allocation4 [shape = 'u8[512]{0}', space=vmem, size = 0x400, scoped, tag = 'output window, operand 1, single buffered']
    #allocation5 [shape = 's32[1]{0}', space=sflag, size = 0x4, scoped, tag = 'scoped memory for tpu_custom_call.1']
    #allocation6 [shape = 'u8[16384]{0}', space=vmem, size = 0x4000, scoped, tag = 'output window, operand 2, single buffered']
    %14 = vsyncpa [#allocation3], 0
    %15 = vsyncpa [#allocation5], 0
    // Predicated region
    $region2: #{tpu_custom_call.1} parent=1 // pred_check
      _
    $region3: #{tpu_custom_call.1} parent=1 // pred_check_branch
      %17 = sbr.rel (0) target = $region5
    $region4: #{tpu_custom_call.1} parent=1 // pred_region
      _
    $region5: #{tpu_custom_call.1} parent=1 // pred_fallthru
      _
    // Predicated region
    $region6: #{tpu_custom_call.1} parent=1 // pred_check
      _
    $region7: #{tpu_custom_call.1} parent=1 // pred_check_branch
      %19 = sbr.rel (0) target = $region9
    $region8: #{tpu_custom_call.1} parent=1 // pred_region
      _
    $region9: #{tpu_custom_call.1} parent=1 // pred_fallthru
      _
    // Predicated region
    $region10: #{tpu_custom_call.1} parent=1 // pred_check
      _
    $region11: #{tpu_custom_call.1} parent=1 // pred_check_branch
      %21 = sbr.rel (0) target = $region13
    $region12: #{tpu_custom_call.1} parent=1 // pred_region
      _
    $region13: #{tpu_custom_call.1} parent=1 // pred_fallthru
      _
    // Predicated region
    $region14: #{tpu_custom_call.1} parent=1 // pred_check
      _
    $region15: #{tpu_custom_call.1} parent=1 // pred_check_branch
      %23 = sbr.rel (0) target = $region17
    $region16: #{tpu_custom_call.1} parent=1 // pred_region
      _
    $region17: #{tpu_custom_call.1} parent=1 // pred_fallthru
      _
    // Predicated region
    $region18: #{tpu_custom_call.1} parent=1 // pred_check
      _
    $region19: #{tpu_custom_call.1} parent=1 // pred_check_branch
      %25 = sbr.rel (0) target = $region21
    $region20: #{tpu_custom_call.1} parent=1 // pred_region
      _
    $region21: #{tpu_custom_call.1} parent=1 // pred_fallthru
      _
    // Predicated region
    $region22: #{tpu_custom_call.1} parent=1 // pred_check
      _
    $region23: #{tpu_custom_call.1} parent=1 // pred_check_branch
      %27 = sbr.rel (0) target = $region25
    $region24: #{tpu_custom_call.1} parent=1 // pred_region
      _
    $region25: #{tpu_custom_call.1} parent=1 // pred_fallthru
      _
    %v28 = vld [vmem:[%s3] sm:$0xff]
    %v29 = vld [vmem:[%s3 + $0x8] sm:$0xff]
    %v30 = vld [vmem:[%s3 + $0x10] sm:$0xff]
    %v31 = vld [vmem:[%s3 + $0x18] sm:$0xff]
    %v32 = vld [vmem:[%s0] sm:$0xff]
    %v33 = vld [vmem:[%s0 + $0x8] sm:$0xff]
    %v34 = vld [vmem:[%s0 + $0x10] sm:$0xff]
    %v35 = vld [vmem:[%s0 + $0x18] sm:$0xff]
    %v36 = vmul.f32 %v32, 0.115129255
    %v37 = vmul.f32 %v33, 0.115129255
    %v38 = vmul.f32 %v34, 0.115129255
    %v39 = vmul.f32 %v35, 0.115129255
    %v40 = vmul.f32 %v36, 1.442695
    %v41 = vpow.pop %v40
    %v42 = vmul.f32 %v37, 1.442695
    %v43 = vpow.pop %v42
    %v44 = vmul.f32 %v38, 1.442695
    %v45 = vpow.pop %v44
    %v46 = vmul.f32 %v39, 1.442695
    %v47 = vpow.pop %v46
    %v48 = vand.u32 2147483647, %v32
    %v49 = vand.u32 2147483647, %v33
    %v50 = vand.u32 2147483647, %v34
    %v51 = vand.u32 2147483647, %v35
    %v52 = vadd.f32 %v48, 1.0
    %v53 = vadd.f32 %v49, 1.0
    %v54 = vadd.f32 %v50, 1.0
    %v55 = vadd.f32 %v51, 1.0
    %v56 = vmin.f32 %v41, %v52
    %v57 = vmin.f32 %v43, %v53
    %v58 = vmin.f32 %v45, %v54
    %v59 = vmin.f32 %v47, %v55
    %61 = vset.pattern.permute.xlu0 0
    %62 = vperm.xlu0 %61, %v28
    %v63 = vpop.permute.xlu0 %62
    %66 = vset.pattern.permute.xlu0 0
    %67 = vperm.xlu0 %66, %v29
    %v68 = vpop.permute.xlu0 %67
    %71 = vset.pattern.permute.xlu0 0
    %72 = vperm.xlu0 %71, %v30
    %v73 = vpop.permute.xlu0 %72
    %76 = vset.pattern.permute.xlu0 0
    %77 = vperm.xlu0 %76, %v31
    %v78 = vpop.permute.xlu0 %77
    %v80 = vmul.f32 %v56, %v63
    %v81 = vmul.f32 %v57, %v68
    %v82 = vmul.f32 %v58, %v73
    %v83 = vmul.f32 %v59, %v78
    %vm84 = vcmask 523264
    %v85 = vsel %vm84, %v32, 0.0
    %86 = vadd.xlane.f32.xlu0 %v85
    %v87 = vpop.xlane.xlu0 %86
    %v88 = vsel %vm84, %v33, 0.0
    %89 = vadd.xlane.f32.xlu0 %v88
    %v90 = vpop.xlane.xlu0 %89
    %v91 = vsel %vm84, %v34, 0.0
    %92 = vadd.xlane.f32.xlu0 %v91
    %v93 = vpop.xlane.xlu0 %92
    %v94 = vsel %vm84, %v35, 0.0
    %95 = vadd.xlane.f32.xlu0 %v94
    %v96 = vpop.xlane.xlu0 %95
    %v97 = vrcp.pop 64.0
    %v98 = vmul.f32 %v87, %v97
    %v99 = vmul.f32 %v90, %v97
    %v100 = vmul.f32 %v93, %v97
    %v101 = vmul.f32 %v96, %v97
    %v102 = vsub.f32 %v32, %v98
    %v103 = vsub.f32 %v33, %v99
    %v104 = vsub.f32 %v34, %v100
    %v105 = vsub.f32 %v35, %v101
    %v106 = vmul.f32 %v102, %v102
    %v107 = vmul.f32 %v103, %v103
    %v108 = vmul.f32 %v104, %v104
    %v109 = vmul.f32 %v105, %v105
    %v110 = vsel %vm84, %v106, 0.0
    %111 = vadd.xlane.f32.xlu0 %v110
    %v112 = vpop.xlane.xlu0 %111
    %v113 = vsel %vm84, %v107, 0.0
    %114 = vadd.xlane.f32.xlu0 %v113
    %v115 = vpop.xlane.xlu0 %114
    %v116 = vsel %vm84, %v108, 0.0
    %117 = vadd.xlane.f32.xlu0 %v116
    %v118 = vpop.xlane.xlu0 %117
    %v119 = vsel %vm84, %v109, 0.0
    %120 = vadd.xlane.f32.xlu0 %v119
    %v121 = vpop.xlane.xlu0 %120
    %v122 = vmul.f32 %v112, 0.015873017
    %v123 = vmul.f32 %v115, 0.015873017
    %v124 = vmul.f32 %v118, 0.015873017
    %v125 = vmul.f32 %v121, 0.015873017
    %v126 = vmul.f32 %v106, %v102
    %v127 = vmul.f32 %v107, %v103
    %v128 = vmul.f32 %v108, %v104
    %v129 = vmul.f32 %v109, %v105
    %v130 = vsel %vm84, %v126, 0.0
    %131 = vadd.xlane.f32.xlu0 %v130
    %v132 = vpop.xlane.xlu0 %131
    %v133 = vsel %vm84, %v127, 0.0
    %134 = vadd.xlane.f32.xlu0 %v133
    %v135 = vpop.xlane.xlu0 %134
    %v136 = vsel %vm84, %v128, 0.0
    %137 = vadd.xlane.f32.xlu0 %v136
    %v138 = vpop.xlane.xlu0 %137
    %v139 = vsel %vm84, %v129, 0.0
    %140 = vadd.xlane.f32.xlu0 %v139
    %v141 = vpop.xlane.xlu0 %140
    %v142 = vmul.f32 %v106, %v106
    %v143 = vmul.f32 %v107, %v107
    %v144 = vmul.f32 %v108, %v108
    %v145 = vmul.f32 %v109, %v109
    %v146 = vsel %vm84, %v142, 0.0
    %147 = vadd.xlane.f32.xlu0 %v146
    %v148 = vpop.xlane.xlu0 %147
    %v149 = vsel %vm84, %v143, 0.0
    %150 = vadd.xlane.f32.xlu0 %v149
    %v151 = vpop.xlane.xlu0 %150
    %v152 = vsel %vm84, %v144, 0.0
    %153 = vadd.xlane.f32.xlu0 %v152
    %v154 = vpop.xlane.xlu0 %153
    %v155 = vsel %vm84, %v145, 0.0
    %156 = vadd.xlane.f32.xlu0 %v155
    %v157 = vpop.xlane.xlu0 %156
    %162 = vrot.lane.b32.xlu0 %v80, 1
    %v163 = vpop.permute.xlu0 %162
    %164 = vrot.lane.b32.xlu0 %v81, 1
    %v165 = vpop.permute.xlu0 %164
    %166 = vrot.lane.b32.xlu0 %v82, 1
    %v167 = vpop.permute.xlu0 %166
    %168 = vrot.lane.b32.xlu0 %v83, 1
    %v169 = vpop.permute.xlu0 %168
    %v174 = vsub.f32 %v80, %v163
    %v175 = vsub.f32 %v81, %v165
    %v176 = vsub.f32 %v82, %v167
    %v177 = vsub.f32 %v83, %v169
    %v178 = vand.u32 2147483647, %v174
    %v179 = vand.u32 2147483647, %v175
    %v180 = vand.u32 2147483647, %v176
    %v181 = vand.u32 2147483647, %v177
    %186 = vrot.lane.b32.xlu0 %v178, 127
    %v187 = vpop.permute.xlu0 %186
    %188 = vrot.lane.b32.xlu0 %v179, 127
    %v189 = vpop.permute.xlu0 %188
    %190 = vrot.lane.b32.xlu0 %v180, 127
    %v191 = vpop.permute.xlu0 %190
    %192 = vrot.lane.b32.xlu0 %v181, 127
    %v193 = vpop.permute.xlu0 %192
    %vm198 = vcmask 515072
    %v199 = vsel %vm198, %v187, 0.0
    %200 = vadd.xlane.f32.xlu0 %v199
    %v201 = vpop.xlane.xlu0 %200
    %v202 = vsel %vm198, %v189, 0.0
    %203 = vadd.xlane.f32.xlu0 %v202
    %v204 = vpop.xlane.xlu0 %203
    %v205 = vsel %vm198, %v191, 0.0
    %206 = vadd.xlane.f32.xlu0 %v205
    %v207 = vpop.xlane.xlu0 %206
    %v208 = vsel %vm198, %v193, 0.0
    %209 = vadd.xlane.f32.xlu0 %v208
    %v210 = vpop.xlane.xlu0 %209
    %v211 = vmul.f32 %v201, 0.015873017
    %v212 = vmul.f32 %v204, 0.015873017
    %v213 = vmul.f32 %v207, 0.015873017
    %v214 = vmul.f32 %v210, 0.015873017
    %v215 = vmul.f32 %v80, %v80
    %v216 = vmul.f32 %v81, %v81
    %v217 = vmul.f32 %v82, %v82
    %v218 = vmul.f32 %v83, %v83
    %v219 = vadd.f32 %v215, 0.001
    %v220 = vadd.f32 %v216, 0.001
    %v221 = vadd.f32 %v217, 0.001
    %v222 = vadd.f32 %v218, 0.001
    %227 = vrot.lane.b32.xlu0 %v219, 127
    %v228 = vpop.permute.xlu0 %227
    %229 = vrot.lane.b32.xlu0 %v220, 127
    %v230 = vpop.permute.xlu0 %229
    %231 = vrot.lane.b32.xlu0 %v221, 127
    %v232 = vpop.permute.xlu0 %231
    %233 = vrot.lane.b32.xlu0 %v222, 127
    %v234 = vpop.permute.xlu0 %233
    %v239 = vrcp.pop %v228
    %v240 = vmul.f32 %v215, %v239
    %v241 = vrcp.pop %v230
    %v242 = vmul.f32 %v216, %v241
    %v243 = vrcp.pop %v232
    %v244 = vmul.f32 %v217, %v243
    %v245 = vrcp.pop %v234
    %v246 = vmul.f32 %v218, %v245
    %v247 = vsel %vm198, %v240, 0.0
    %248 = vadd.xlane.f32.xlu0 %v247
    %v249 = vpop.xlane.xlu0 %248
    %v250 = vsel %vm198, %v242, 0.0
    %251 = vadd.xlane.f32.xlu0 %v250
    %v252 = vpop.xlane.xlu0 %251
    %v253 = vsel %vm198, %v244, 0.0
    %254 = vadd.xlane.f32.xlu0 %v253
    %v255 = vpop.xlane.xlu0 %254
    %v256 = vsel %vm198, %v246, 0.0
    %257 = vadd.xlane.f32.xlu0 %v256
    %v258 = vpop.xlane.xlu0 %257
    %v259 = vmul.f32 %v249, 0.015873017
    %v260 = vmul.f32 %v252, 0.015873017
    %v261 = vmul.f32 %v255, 0.015873017
    %v262 = vmul.f32 %v258, 0.015873017
    %v263 = vrsqrt.pop %v259
    %v264 = vmul.f32 %v259, %v263
    %vm265 = vcmp.eq.f32.partialorder %v259, inf
    %v266 = vsel %vm265, %v259, %v264
    %vm267 = vcmp.eq.f32.partialorder %v259, 0.0
    %v268 = vand.u32 %v259, 2147483648
    %v269 = vsel %vm267, %v268, %v266
    %v270 = vrsqrt.pop %v260
    %v271 = vmul.f32 %v260, %v270
    %vm272 = vcmp.eq.f32.partialorder %v260, inf
    %v273 = vsel %vm272, %v260, %v271
    %vm274 = vcmp.eq.f32.partialorder %v260, 0.0
    %v275 = vand.u32 %v260, 2147483648
    %v276 = vsel %vm274, %v275, %v273
    %v277 = vrsqrt.pop %v261
    %v278 = vmul.f32 %v261, %v277
    %vm279 = vcmp.eq.f32.partialorder %v261, inf
    %v280 = vsel %vm279, %v261, %v278
    %vm281 = vcmp.eq.f32.partialorder %v261, 0.0
    %v282 = vand.u32 %v261, 2147483648
    %v283 = vsel %vm281, %v282, %v280
    %v284 = vrsqrt.pop %v262
    %v285 = vmul.f32 %v262, %v284
    %vm286 = vcmp.eq.f32.partialorder %v262, inf
    %v287 = vsel %vm286, %v262, %v285
    %vm288 = vcmp.eq.f32.partialorder %v262, 0.0
    %v289 = vand.u32 %v262, 2147483648
    %v290 = vsel %vm288, %v289, %v287
    %v291 = vlaneseq
    %v292 = vshrl.u32 %v291, 7
    %v293 = vadd.s32 %v292, 8
    %v294 = vadd.s32 %v292, 16
    %v295 = vadd.s32 %v292, 24
    %vm296 = vcmp.lt.s32.totalorder %v292, 31
    %vm297 = vcmp.lt.s32.totalorder %v293, 31
    %vm298 = vcmp.lt.s32.totalorder %v294, 31
    %vm299 = vcmp.lt.s32.totalorder %v295, 31
    %v300 = vsel %vm296, 1, 0
    %v301 = vsel %vm297, 1, 0
    %v302 = vsel %vm298, 1, 0
    %v303 = vsel %vm299, 1, 0
    %v304 = vcvt.s32.f32 %v300
    %v305 = vcvt.s32.f32 %v301
    %v306 = vcvt.s32.f32 %v302
    %v307 = vcvt.s32.f32 %v303
    %v308 = vsel %vm84, %v80, 0.0
    %v309 = vsel %vm84, %v81, 0.0
    %v310 = vadd.f32 %v308, %v309
    %v311 = vsel %vm84, %v82, 0.0
    %v312 = vadd.f32 %v310, %v311
    %v313 = vsel %vm84, %v83, 0.0
    %v314 = vadd.f32 %v312, %v313
    %v315 = vrot.slane %v314, 4
    %v316 = vadd.f32 %v314, %v315
    %v317 = vrot.slane %v316, 2
    %v318 = vadd.f32 %v316, %v317
    %v319 = vrot.slane %v318, 1
    %v320 = vadd.f32 %v318, %v319
    %v321 = vmul.f32 %v320, 0.032258064
    %v322 = vsub.f32 %v80, %v321
    %v323 = vsub.f32 %v81, %v321
    %v324 = vsub.f32 %v82, %v321
    %v325 = vsub.f32 %v83, %v321
    %v326 = vmul.f32 %v322, %v304
    %v327 = vmul.f32 %v323, %v305
    %v328 = vmul.f32 %v324, %v306
    %v329 = vmul.f32 %v325, %v307
    %v330 = vmul.f32 %v326, %v326
    %v331 = vmul.f32 %v327, %v327
    %v332 = vmul.f32 %v328, %v328
    %v333 = vmul.f32 %v329, %v329
    %v334 = vsel %vm84, %v330, 0.0
    %v335 = vsel %vm84, %v331, 0.0
    %v336 = vadd.f32 %v334, %v335
    %v337 = vsel %vm84, %v332, 0.0
    %v338 = vadd.f32 %v336, %v337
    %v339 = vsel %vm84, %v333, 0.0
    %v340 = vadd.f32 %v338, %v339
    %v341 = vrot.slane %v340, 4
    %v342 = vadd.f32 %v340, %v341
    %v343 = vrot.slane %v342, 2
    %v344 = vadd.f32 %v342, %v343
    %v345 = vrot.slane %v344, 1
    %v346 = vadd.f32 %v344, %v345
    %v347 = vmul.f32 %v346, 0.033333335
    %v348 = vsel %vm84, %v347, 0.0
    %349 = vadd.xlane.f32.xlu0 %v348
    %v350 = vpop.xlane.xlu0 %349
    %v351 = vmul.f32 %v350, %v97
    %v352 = vmul.f32 %v330, %v326
    %v353 = vmul.f32 %v331, %v327
    %v354 = vmul.f32 %v332, %v328
    %v355 = vmul.f32 %v333, %v329
    %v356 = vsel %vm84, %v352, 0.0
    %v357 = vsel %vm84, %v353, 0.0
    %v358 = vadd.f32 %v356, %v357
    %v359 = vsel %vm84, %v354, 0.0
    %v360 = vadd.f32 %v358, %v359
    %v361 = vsel %vm84, %v355, 0.0
    %v362 = vadd.f32 %v360, %v361
    %v363 = vrot.slane %v362, 4
    %v364 = vadd.f32 %v362, %v363
    %v365 = vrot.slane %v364, 2
    %v366 = vadd.f32 %v364, %v365
    %v367 = vrot.slane %v366, 1
    %v368 = vadd.f32 %v366, %v367
    %v369 = vsel %vm84, %v368, 0.0
    %370 = vadd.xlane.f32.xlu0 %v369
    %v371 = vpop.xlane.xlu0 %370
    %v372 = vmul.f32 %v371, 0.00050403224
    %v373 = vmul.f32 %v330, %v330
    %v374 = vmul.f32 %v331, %v331
    %v375 = vmul.f32 %v332, %v332
    %v376 = vmul.f32 %v333, %v333
    %v377 = vsel %vm84, %v373, 0.0
    %v378 = vsel %vm84, %v374, 0.0
    %v379 = vadd.f32 %v377, %v378
    %v380 = vsel %vm84, %v375, 0.0
    %v381 = vadd.f32 %v379, %v380
    %v382 = vsel %vm84, %v376, 0.0
    %v383 = vadd.f32 %v381, %v382
    %v384 = vrot.slane %v383, 4
    %v385 = vadd.f32 %v383, %v384
    %v386 = vrot.slane %v385, 2
    %v387 = vadd.f32 %v385, %v386
    %v388 = vrot.slane %v387, 1
    %v389 = vadd.f32 %v387, %v388
    %v390 = vsel %vm84, %v389, 0.0
    %391 = vadd.xlane.f32.xlu0 %v390
    %v392 = vpop.xlane.xlu0 %391
    %v393 = vmul.f32 %v392, 0.00050403224
    %v394 = vmul.f32 %v321, 1.442695
    %v395 = vpow.pop %v394
    %v396 = vadd.f32 %v321, 1.0
    %v397 = vrcp.pop %v396
    %v398 = vmul.f32 %v395, %v397
    %v399 = vsel %vm84, %v398, 0.0
    %400 = vadd.xlane.f32.xlu0 %v399
    %v401 = vpop.xlane.xlu0 %400
    %v402 = vmul.f32 %v401, %v97
    %v403 = vsub.f32 %v398, %v402
    %v404 = vmul.f32 %v403, %v403
    %v405 = vsel %vm84, %v404, 0.0
    %406 = vadd.xlane.f32.xlu0 %v405
    %v407 = vpop.xlane.xlu0 %406
    %v408 = vmul.f32 %v407, 0.015873017
    %v409 = vmul.f32 %v404, %v403
    %v410 = vsel %vm84, %v409, 0.0
    %411 = vadd.xlane.f32.xlu0 %v410
    %v412 = vpop.xlane.xlu0 %411
    %v413 = vmul.f32 %v404, %v404
    %v414 = vsel %vm84, %v413, 0.0
    %415 = vadd.xlane.f32.xlu0 %v414
    %v416 = vpop.xlane.xlu0 %415
    %v417 = vsel %vm84, %v321, 0.0
    %418 = vadd.xlane.f32.xlu0 %v417
    %v419 = vpop.xlane.xlu0 %418
    %v420 = vmul.f32 %v419, %v97
    %v421 = vsub.f32 %v321, %v420
    %v422 = vmul.f32 %v421, %v421
    %v423 = vsel %vm84, %v422, 0.0
    %424 = vadd.xlane.f32.xlu0 %v423
    %v425 = vpop.xlane.xlu0 %424
    %v426 = vmul.f32 %v425, 0.015873017
    %v427 = vmul.f32 %v422, %v421
    %v428 = vsel %vm84, %v427, 0.0
    %429 = vadd.xlane.f32.xlu0 %v428
    %v430 = vpop.xlane.xlu0 %429
    %v431 = vmul.f32 %v422, %v422
    %v432 = vsel %vm84, %v431, 0.0
    %433 = vadd.xlane.f32.xlu0 %v432
    %v434 = vpop.xlane.xlu0 %433
    %435 = vadd.xlane.f32.xlu0 %v308
    %v436 = vpop.xlane.xlu0 %435
    %437 = vadd.xlane.f32.xlu0 %v309
    %v438 = vpop.xlane.xlu0 %437
    %439 = vadd.xlane.f32.xlu0 %v311
    %v440 = vpop.xlane.xlu0 %439
    %441 = vadd.xlane.f32.xlu0 %v313
    %v442 = vpop.xlane.xlu0 %441
    %v443 = vmul.f32 %v436, %v97
    %v444 = vmul.f32 %v438, %v97
    %v445 = vmul.f32 %v440, %v97
    %v446 = vmul.f32 %v442, %v97
    %v447 = vsub.f32 %v80, %v443
    %v448 = vsub.f32 %v81, %v444
    %v449 = vsub.f32 %v82, %v445
    %v450 = vsub.f32 %v83, %v446
    %v452 = vsel %vm84, %v447, 0
    %v455 = vsel %vm84, %v448, 0
    %v458 = vsel %vm84, %v449, 0
    %v461 = vsel %vm84, %v450, 0
    %463 = vmatprep.subr.mxu0 0.0
    %464 = vmatpush1.xpose.msra.mxu0 0.0
    %465 = vmatprep.subr.mxu0 0.0
    %466 = vmatpush1.xpose.msra.mxu0 0.0
    %467 = vmatprep.subr.mxu0 0.0
    %468 = vmatpush1.xpose.msra.mxu0 0.0
    %469 = vmatprep.subr.mxu0 0.0
    %470 = vmatpush1.xpose.msra.mxu0 0.0
    %471 = vmatprep.subr.mxu0 0.0
    %472 = vmatpush1.xpose.msra.mxu0 0.0
    %473 = vmatprep.subr.mxu0 0.0
    %474 = vmatpush1.xpose.msra.mxu0 0.0
    %475 = vmatprep.subr.mxu0 0.0
    %476 = vmatpush1.xpose.msra.mxu0 0.0
    %477 = vmatprep.subr.mxu0 0.0
    %478 = vmatpush1.xpose.msra.mxu0 0.0
    %479 = vmatprep.subr.mxu0 0.0
    %480 = vmatpush1.xpose.msra.mxu0 0.0
    %481 = vmatprep.subr.mxu0 0.0
    %482 = vmatpush1.xpose.msra.mxu0 0.0
    %483 = vmatprep.subr.mxu0 0.0
    %484 = vmatpush1.xpose.msra.mxu0 0.0
    %485 = vmatprep.subr.mxu0 0.0
    %486 = vmatpush1.xpose.msra.mxu0 0.0
    %487 = vmatprep.subr.mxu0 0.0
    %488 = vmatpush1.xpose.msra.mxu0 %v461
    %489 = vmatprep.subr.mxu0 0.0
    %490 = vmatpush1.xpose.msra.mxu0 %v458
    %491 = vmatprep.subr.mxu0 0.0
    %492 = vmatpush1.xpose.msra.mxu0 %v455
    %493 = vmatprep.subr.mxu0 0.0
    %494 = vmatpush1.xpose.msra.mxu0 %v452
    %495 = vmatprep.subr.mxu0 0.0
    %496 = vmatpush2.xpose.msra.mxu0 0.0
    %497 = vmatprep.subr.mxu0 0.0
    %498 = vmatpush2.xpose.msra.mxu0 0.0
    %499 = vmatprep.subr.mxu0 0.0
    %500 = vmatpush2.xpose.msra.mxu0 0.0
    %501 = vmatprep.subr.mxu0 0.0
    %502 = vmatpush2.xpose.msra.mxu0 0.0
    %503 = vmatprep.subr.mxu0 0.0
    %504 = vmatpush2.xpose.msra.mxu0 0.0
    %505 = vmatprep.subr.mxu0 0.0
    %506 = vmatpush2.xpose.msra.mxu0 0.0
    %507 = vmatprep.subr.mxu0 0.0
    %508 = vmatpush2.xpose.msra.mxu0 0.0
    %509 = vmatprep.subr.mxu0 0.0
    %510 = vmatpush2.xpose.msra.mxu0 0.0
    %511 = vmatprep.subr.mxu0 0.0
    %512 = vmatpush2.xpose.msra.mxu0 0.0
    %513 = vmatprep.subr.mxu0 0.0
    %514 = vmatpush2.xpose.msra.mxu0 0.0
    %515 = vmatprep.subr.mxu0 0.0
    %516 = vmatpush2.xpose.msra.mxu0 0.0
    %517 = vmatprep.subr.mxu0 0.0
    %518 = vmatpush2.xpose.msra.mxu0 0.0
    %519 = vmatprep.subr.mxu0 0.0
    %520 = vmatpush2.xpose.msra.mxu0 0.0
    %521 = vmatprep.subr.mxu0 0.0
    %522 = vmatpush2.xpose.msra.mxu0 0.0
    %523 = vmatprep.subr.mxu0 0.0
    %524 = vmatpush2.xpose.msra.mxu0 0.0
    %525 = vmatprep.subr.mxu0 0.0
    %526 = vmatpush2.xpose.msra.mxu0 0.0
    %527 = vmatprep.mubr.f32.mxu0 0.0
    %528 = vmatmul.mubr.f32.gmra.mxu0 %v452
    %v529 = vpop.f32.mrf.mxu0
    %v530 = vadd.f32 0.0, %v529
    %v531 = vpop.f32.mrf.mxu0
    %532 = vmatprep.mubr.f32.mxu0 0.0
    %533 = vmatmul.mubr.f32.gmra.mxu0 %v455
    %v534 = vpop.f32.mrf.mxu0
    %v535 = vadd.f32 0.0, %v534
    %v536 = vpop.f32.mrf.mxu0
    %537 = vmatprep.mubr.f32.mxu0 0.0
    %538 = vmatmul.mubr.f32.gmra.mxu0 %v458
    %v539 = vpop.f32.mrf.mxu0
    %v540 = vadd.f32 0.0, %v539
    %v541 = vpop.f32.mrf.mxu0
    %542 = vmatprep.mubr.f32.mxu0 0.0
    %543 = vmatmul.mubr.f32.gmra.mxu0 %v461
    %v544 = vpop.f32.mrf.mxu0
    %v545 = vadd.f32 0.0, %v544
    %v546 = vpop.f32.mrf.mxu0
    %547 = vdwg.mxu0
    %v548 = vmul.f32 %v530, 0.015873017
    %v549 = vmul.f32 %v535, 0.015873017
    %v550 = vmul.f32 %v540, 0.015873017
    %v551 = vmul.f32 %v545, 0.015873017
    %vm552 = vcmask 261120
    %553 = vst.msk [vmem:[#allocation6] sm:$0xff] %vm552, %v548
    %554 = vst.msk [vmem:[#allocation6 + $0x8] sm:$0xff] %vm552, %v549
    %555 = vst.msk [vmem:[#allocation6 + $0x10] sm:$0xff] %vm552, %v550
    %556 = vst.msk [vmem:[#allocation6 + $0x18] sm:$0xff] %vm552, %v551
    %v557 = vld [vmem:[%s1] sm:$0xff]
    %v558 = vld [vmem:[%s1 + $0x8] sm:$0xff]
    %v559 = vld [vmem:[%s1 + $0x10] sm:$0xff]
    %v560 = vld [vmem:[%s1 + $0x18] sm:$0xff]
    %v561 = vmul.f32 %v557, 0.115129255
    %v562 = vmul.f32 %v558, 0.115129255
    %v563 = vmul.f32 %v559, 0.115129255
    %v564 = vmul.f32 %v560, 0.115129255
    %v565 = vmul.f32 %v561, 1.442695
    %v566 = vpow.pop %v565
    %v567 = vmul.f32 %v562, 1.442695
    %v568 = vpow.pop %v567
    %v569 = vmul.f32 %v563, 1.442695
    %v570 = vpow.pop %v569
    %v571 = vmul.f32 %v564, 1.442695
    %v572 = vpow.pop %v571
    %v573 = vand.u32 2147483647, %v557
    %v574 = vand.u32 2147483647, %v558
    %v575 = vand.u32 2147483647, %v559
    %v576 = vand.u32 2147483647, %v560
    %v577 = vadd.f32 %v573, 1.0
    %v578 = vadd.f32 %v574, 1.0
    %v579 = vadd.f32 %v575, 1.0
    %v580 = vadd.f32 %v576, 1.0
    %v581 = vmin.f32 %v566, %v577
    %v582 = vmin.f32 %v568, %v578
    %v583 = vmin.f32 %v570, %v579
    %v584 = vmin.f32 %v572, %v580
    %v585 = vmul.f32 %v581, %v63
    %v586 = vmul.f32 %v582, %v68
    %v587 = vmul.f32 %v583, %v73
    %v588 = vmul.f32 %v584, %v78
    %v589 = vld [vmem:[%s2] sm:$0xff]
    %v590 = vld [vmem:[%s2 + $0x8] sm:$0xff]
    %v591 = vld [vmem:[%s2 + $0x10] sm:$0xff]
    %v592 = vld [vmem:[%s2 + $0x18] sm:$0xff]
    %v593 = vmul.f32 %v589, 0.115129255
    %v594 = vmul.f32 %v590, 0.115129255
    %v595 = vmul.f32 %v591, 0.115129255
    %v596 = vmul.f32 %v592, 0.115129255
    %v597 = vmul.f32 %v593, 1.442695
    %v598 = vpow.pop %v597
    %v599 = vmul.f32 %v594, 1.442695
    %v600 = vpow.pop %v599
    %v601 = vmul.f32 %v595, 1.442695
    %v602 = vpow.pop %v601
    %v603 = vmul.f32 %v596, 1.442695
    %v604 = vpow.pop %v603
    %v605 = vand.u32 2147483647, %v589
    %v606 = vand.u32 2147483647, %v590
    %v607 = vand.u32 2147483647, %v591
    %v608 = vand.u32 2147483647, %v592
    %v609 = vadd.f32 %v605, 1.0
    %v610 = vadd.f32 %v606, 1.0
    %v611 = vadd.f32 %v607, 1.0
    %v612 = vadd.f32 %v608, 1.0
    %v613 = vmin.f32 %v598, %v609
    %v614 = vmin.f32 %v600, %v610
    %v615 = vmin.f32 %v602, %v611
    %v616 = vmin.f32 %v604, %v612
    %v617 = vmul.f32 %v613, %v63
    %v618 = vmul.f32 %v614, %v68
    %v619 = vmul.f32 %v615, %v73
    %v620 = vmul.f32 %v616, %v78
    %621 = vrot.lane.b32.xlu0 %v80, 8
    %v622 = vpop.permute.xlu0 %621
    %623 = vrot.lane.b32.xlu0 %v81, 8
    %v624 = vpop.permute.xlu0 %623
    %625 = vrot.lane.b32.xlu0 %v82, 8
    %v626 = vpop.permute.xlu0 %625
    %627 = vrot.lane.b32.xlu0 %v83, 8
    %v628 = vpop.permute.xlu0 %627
    %637 = vrot.lane.b32.xlu0 %v617, 72
    %v638 = vpop.permute.xlu0 %637
    %639 = vrot.lane.b32.xlu0 %v618, 72
    %v640 = vpop.permute.xlu0 %639
    %641 = vrot.lane.b32.xlu0 %v619, 72
    %v642 = vpop.permute.xlu0 %641
    %643 = vrot.lane.b32.xlu0 %v620, 72
    %v644 = vpop.permute.xlu0 %643
    %vm649 = vcmask 64512
    %v650 = vsel %vm649, %v585, %v622
    %v651 = vsel %vm649, %v586, %v624
    %v652 = vsel %vm649, %v587, %v626
    %v653 = vsel %vm649, %v588, %v628
    %vm654 = vcmask 588800
    %v655 = vsel %vm654, %v650, %v638
    %v656 = vsel %vm654, %v651, %v640
    %v657 = vsel %vm654, %v652, %v642
    %v658 = vsel %vm654, %v653, %v644
    %663 = vrot.lane.b32.xlu0 %v655, 124
    %v664 = vpop.permute.xlu0 %663
    %665 = vrot.lane.b32.xlu0 %v656, 124
    %v666 = vpop.permute.xlu0 %665
    %667 = vrot.lane.b32.xlu0 %v657, 124
    %v668 = vpop.permute.xlu0 %667
    %669 = vrot.lane.b32.xlu0 %v658, 124
    %v670 = vpop.permute.xlu0 %669
    %671 = vrot.lane.b32.xlu0 %v655, 120
    %v672 = vpop.permute.xlu0 %671
    %673 = vrot.lane.b32.xlu0 %v656, 120
    %v674 = vpop.permute.xlu0 %673
    %675 = vrot.lane.b32.xlu0 %v657, 120
    %v676 = vpop.permute.xlu0 %675
    %677 = vrot.lane.b32.xlu0 %v658, 120
    %v678 = vpop.permute.xlu0 %677
    %679 = vrot.lane.b32.xlu0 %v655, 116
    %v680 = vpop.permute.xlu0 %679
    %681 = vrot.lane.b32.xlu0 %v656, 116
    %v682 = vpop.permute.xlu0 %681
    %683 = vrot.lane.b32.xlu0 %v657, 116
    %v684 = vpop.permute.xlu0 %683
    %685 = vrot.lane.b32.xlu0 %v658, 116
    %v686 = vpop.permute.xlu0 %685
    %687 = vrot.lane.b32.xlu0 %v655, 112
    %v688 = vpop.permute.xlu0 %687
    %689 = vrot.lane.b32.xlu0 %v656, 112
    %v690 = vpop.permute.xlu0 %689
    %691 = vrot.lane.b32.xlu0 %v657, 112
    %v692 = vpop.permute.xlu0 %691
    %693 = vrot.lane.b32.xlu0 %v658, 112
    %v694 = vpop.permute.xlu0 %693
    %695 = vrot.lane.b32.xlu0 %v655, 108
    %v696 = vpop.permute.xlu0 %695
    %697 = vrot.lane.b32.xlu0 %v656, 108
    %v698 = vpop.permute.xlu0 %697
    %699 = vrot.lane.b32.xlu0 %v657, 108
    %v700 = vpop.permute.xlu0 %699
    %701 = vrot.lane.b32.xlu0 %v658, 108
    %v702 = vpop.permute.xlu0 %701
    %703 = vrot.lane.b32.xlu0 %v655, 104
    %v704 = vpop.permute.xlu0 %703
    %705 = vrot.lane.b32.xlu0 %v656, 104
    %v706 = vpop.permute.xlu0 %705
    %707 = vrot.lane.b32.xlu0 %v657, 104
    %v708 = vpop.permute.xlu0 %707
    %709 = vrot.lane.b32.xlu0 %v658, 104
    %v710 = vpop.permute.xlu0 %709
    %711 = vrot.lane.b32.xlu0 %v655, 100
    %v712 = vpop.permute.xlu0 %711
    %713 = vrot.lane.b32.xlu0 %v656, 100
    %v714 = vpop.permute.xlu0 %713
    %715 = vrot.lane.b32.xlu0 %v657, 100
    %v716 = vpop.permute.xlu0 %715
    %717 = vrot.lane.b32.xlu0 %v658, 100
    %v718 = vpop.permute.xlu0 %717
    %719 = vrot.lane.b32.xlu0 %v655, 96
    %v720 = vpop.permute.xlu0 %719
    %721 = vrot.lane.b32.xlu0 %v656, 96
    %v722 = vpop.permute.xlu0 %721
    %723 = vrot.lane.b32.xlu0 %v657, 96
    %v724 = vpop.permute.xlu0 %723
    %725 = vrot.lane.b32.xlu0 %v658, 96
    %v726 = vpop.permute.xlu0 %725
    %727 = vrot.lane.b32.xlu0 %v655, 92
    %v728 = vpop.permute.xlu0 %727
    %729 = vrot.lane.b32.xlu0 %v656, 92
    %v730 = vpop.permute.xlu0 %729
    %731 = vrot.lane.b32.xlu0 %v657, 92
    %v732 = vpop.permute.xlu0 %731
    %733 = vrot.lane.b32.xlu0 %v658, 92
    %v734 = vpop.permute.xlu0 %733
    %735 = vrot.lane.b32.xlu0 %v655, 88
    %v736 = vpop.permute.xlu0 %735
    %737 = vrot.lane.b32.xlu0 %v656, 88
    %v738 = vpop.permute.xlu0 %737
    %739 = vrot.lane.b32.xlu0 %v657, 88
    %v740 = vpop.permute.xlu0 %739
    %741 = vrot.lane.b32.xlu0 %v658, 88
    %v742 = vpop.permute.xlu0 %741
    %743 = vrot.lane.b32.xlu0 %v655, 84
    %v744 = vpop.permute.xlu0 %743
    %745 = vrot.lane.b32.xlu0 %v656, 84
    %v746 = vpop.permute.xlu0 %745
    %747 = vrot.lane.b32.xlu0 %v657, 84
    %v748 = vpop.permute.xlu0 %747
    %749 = vrot.lane.b32.xlu0 %v658, 84
    %v750 = vpop.permute.xlu0 %749
    %751 = vrot.lane.b32.xlu0 %v655, 80
    %v752 = vpop.permute.xlu0 %751
    %753 = vrot.lane.b32.xlu0 %v656, 80
    %v754 = vpop.permute.xlu0 %753
    %755 = vrot.lane.b32.xlu0 %v657, 80
    %v756 = vpop.permute.xlu0 %755
    %757 = vrot.lane.b32.xlu0 %v658, 80
    %v758 = vpop.permute.xlu0 %757
    %759 = vrot.lane.b32.xlu0 %v655, 76
    %v760 = vpop.permute.xlu0 %759
    %761 = vrot.lane.b32.xlu0 %v656, 76
    %v762 = vpop.permute.xlu0 %761
    %763 = vrot.lane.b32.xlu0 %v657, 76
    %v764 = vpop.permute.xlu0 %763
    %765 = vrot.lane.b32.xlu0 %v658, 76
    %v766 = vpop.permute.xlu0 %765
    %767 = vrot.lane.b32.xlu0 %v655, 72
    %v768 = vpop.permute.xlu0 %767
    %769 = vrot.lane.b32.xlu0 %v656, 72
    %v770 = vpop.permute.xlu0 %769
    %771 = vrot.lane.b32.xlu0 %v657, 72
    %v772 = vpop.permute.xlu0 %771
    %773 = vrot.lane.b32.xlu0 %v658, 72
    %v774 = vpop.permute.xlu0 %773
    %775 = vrot.lane.b32.xlu0 %v655, 68
    %v776 = vpop.permute.xlu0 %775
    %777 = vrot.lane.b32.xlu0 %v656, 68
    %v778 = vpop.permute.xlu0 %777
    %779 = vrot.lane.b32.xlu0 %v657, 68
    %v780 = vpop.permute.xlu0 %779
    %781 = vrot.lane.b32.xlu0 %v658, 68
    %v782 = vpop.permute.xlu0 %781
    %783 = vrot.lane.b32.xlu0 %v655, 64
    %v784 = vpop.permute.xlu0 %783
    %785 = vrot.lane.b32.xlu0 %v656, 64
    %v786 = vpop.permute.xlu0 %785
    %787 = vrot.lane.b32.xlu0 %v657, 64
    %v788 = vpop.permute.xlu0 %787
    %789 = vrot.lane.b32.xlu0 %v658, 64
    %v790 = vpop.permute.xlu0 %789
    %v791 = vld [vmem:[%s4] sm:$0xff]
    %v792 = vld [vmem:[%s4 + $0x8] sm:$0xff]
    %vm793 = vcmask 130048
    %v794 = vsel %vm793, %v655, 0
    %v796 = vsel %vm793, %v656, 0
    %v798 = vsel %vm793, %v657, 0
    %v800 = vsel %vm793, %v658, 0
    %v802 = vsel %vm793, %v664, 0
    %v804 = vsel %vm793, %v666, 0
    %v806 = vsel %vm793, %v668, 0
    %v808 = vsel %vm793, %v670, 0
    %v810 = vsel %vm793, %v672, 0
    %v812 = vsel %vm793, %v674, 0
    %v814 = vsel %vm793, %v676, 0
    %v816 = vsel %vm793, %v678, 0
    %v818 = vsel %vm793, %v680, 0
    %v820 = vsel %vm793, %v682, 0
    %v822 = vsel %vm793, %v684, 0
    %v824 = vsel %vm793, %v686, 0
    %v826 = vsel %vm793, %v688, 0
    %v828 = vsel %vm793, %v690, 0
    %v830 = vsel %vm793, %v692, 0
    %v832 = vsel %vm793, %v694, 0
    %v834 = vsel %vm793, %v696, 0
    %v836 = vsel %vm793, %v698, 0
    %v838 = vsel %vm793, %v700, 0
    %v840 = vsel %vm793, %v702, 0
    %v842 = vsel %vm793, %v704, 0
    %v844 = vsel %vm793, %v706, 0
    %v846 = vsel %vm793, %v708, 0
    %v848 = vsel %vm793, %v710, 0
    %v850 = vsel %vm793, %v712, 0
    %v852 = vsel %vm793, %v714, 0
    %v854 = vsel %vm793, %v716, 0
    %v856 = vsel %vm793, %v718, 0
    %v858 = vsel %vm793, %v720, 0
    %v860 = vsel %vm793, %v722, 0
    %v862 = vsel %vm793, %v724, 0
    %v864 = vsel %vm793, %v726, 0
    %v866 = vsel %vm793, %v728, 0
    %v868 = vsel %vm793, %v730, 0
    %v870 = vsel %vm793, %v732, 0
    %v872 = vsel %vm793, %v734, 0
    %v874 = vsel %vm793, %v736, 0
    %v876 = vsel %vm793, %v738, 0
    %v878 = vsel %vm793, %v740, 0
    %v880 = vsel %vm793, %v742, 0
    %v882 = vsel %vm793, %v744, 0
    %v884 = vsel %vm793, %v746, 0
    %v886 = vsel %vm793, %v748, 0
    %v888 = vsel %vm793, %v750, 0
    %v890 = vsel %vm793, %v752, 0
    %v892 = vsel %vm793, %v754, 0
    %v894 = vsel %vm793, %v756, 0
    %v896 = vsel %vm793, %v758, 0
    %v898 = vsel %vm793, %v760, 0
    %v900 = vsel %vm793, %v762, 0
    %v902 = vsel %vm793, %v764, 0
    %v904 = vsel %vm793, %v766, 0
    %v906 = vsel %vm793, %v768, 0
    %v908 = vsel %vm793, %v770, 0
    %v910 = vsel %vm793, %v772, 0
    %v912 = vsel %vm793, %v774, 0
    %v914 = vsel %vm793, %v776, 0
    %v916 = vsel %vm793, %v778, 0
    %v918 = vsel %vm793, %v780, 0
    %v920 = vsel %vm793, %v782, 0
    %v922 = vsel %vm793, %v784, 0
    %v924 = vsel %vm793, %v786, 0
    %v926 = vsel %vm793, %v788, 0
    %v928 = vsel %vm793, %v790, 0
    %930 = vmatprep.subr.mxu0 0.0
    %931 = vmatpush1.msra.mxu0 0.0
    %932 = vmatprep.subr.mxu0 0.0
    %933 = vmatpush1.msra.mxu0 0.0
    %934 = vmatprep.subr.mxu0 0.0
    %935 = vmatpush1.msra.mxu0 0.0
    %936 = vmatprep.subr.mxu0 0.0
    %937 = vmatpush1.msra.mxu0 0.0
    %938 = vmatprep.subr.mxu0 0.0
    %939 = vmatpush1.msra.mxu0 0.0
    %940 = vmatprep.subr.mxu0 0.0
    %941 = vmatpush1.msra.mxu0 0.0
    %942 = vmatprep.subr.mxu0 0.0
    %943 = vmatpush1.msra.mxu0 0.0
    %944 = vmatprep.subr.mxu0 0.0
    %945 = vmatpush1.msra.mxu0 0.0
    %946 = vmatprep.subr.mxu0 0.0
    %947 = vmatpush1.msra.mxu0 0.0
    %948 = vmatprep.subr.mxu0 0.0
    %949 = vmatpush1.msra.mxu0 0.0
    %950 = vmatprep.subr.mxu0 0.0
    %951 = vmatpush1.msra.mxu0 0.0
    %952 = vmatprep.subr.mxu0 0.0
    %953 = vmatpush1.msra.mxu0 0.0
    %954 = vmatprep.subr.mxu0 0.0
    %955 = vmatpush1.msra.mxu0 0.0
    %956 = vmatprep.subr.mxu0 0.0
    %957 = vmatpush1.msra.mxu0 0.0
    %958 = vmatprep.subr.mxu0 0.0
    %959 = vmatpush1.msra.mxu0 %v792
    %960 = vmatprep.subr.mxu0 0.0
    %961 = vmatpush1.msra.mxu0 %v791
    %962 = vmatprep.subr.mxu0 0.0
    %963 = vmatpush2.msra.mxu0 0.0
    %964 = vmatprep.subr.mxu0 0.0
    %965 = vmatpush2.msra.mxu0 0.0
    %966 = vmatprep.subr.mxu0 0.0
    %967 = vmatpush2.msra.mxu0 0.0
    %968 = vmatprep.subr.mxu0 0.0
    %969 = vmatpush2.msra.mxu0 0.0
    %970 = vmatprep.subr.mxu0 0.0
    %971 = vmatpush2.msra.mxu0 0.0
    %972 = vmatprep.subr.mxu0 0.0
    %973 = vmatpush2.msra.mxu0 0.0
    %974 = vmatprep.subr.mxu0 0.0
    %975 = vmatpush2.msra.mxu0 0.0
    %976 = vmatprep.subr.mxu0 0.0
    %977 = vmatpush2.msra.mxu0 0.0
    %978 = vmatprep.subr.mxu0 0.0
    %979 = vmatpush2.msra.mxu0 0.0
    %980 = vmatprep.subr.mxu0 0.0
    %981 = vmatpush2.msra.mxu0 0.0
    %982 = vmatprep.subr.mxu0 0.0
    %983 = vmatpush2.msra.mxu0 0.0
    %984 = vmatprep.subr.mxu0 0.0
    %985 = vmatpush2.msra.mxu0 0.0
    %986 = vmatprep.subr.mxu0 0.0
    %987 = vmatpush2.msra.mxu0 0.0
    %988 = vmatprep.subr.mxu0 0.0
    %989 = vmatpush2.msra.mxu0 0.0
    %990 = vmatprep.subr.mxu0 0.0
    %991 = vmatpush2.msra.mxu0 0.0
    %992 = vmatprep.subr.mxu0 0.0
    %993 = vmatpush2.msra.mxu0 0.0
    %994 = vmatprep.mubr.f32.mxu0 0.0
    %995 = vmatmul.mubr.f32.gmra.mxu0 %v794
    %v996 = vpop.f32.mrf.mxu0
    %v997 = vadd.f32 0.0, %v996
    %v998 = vpop.f32.mrf.mxu0
    %999 = vmatprep.mubr.f32.mxu0 0.0
    %1000 = vmatmul.mubr.f32.gmra.mxu0 %v796
    %v1001 = vpop.f32.mrf.mxu0
    %v1002 = vadd.f32 0.0, %v1001
    %v1003 = vpop.f32.mrf.mxu0
    %1004 = vmatprep.mubr.f32.mxu0 0.0
    %1005 = vmatmul.mubr.f32.gmra.mxu0 %v798
    %v1006 = vpop.f32.mrf.mxu0
    %v1007 = vadd.f32 0.0, %v1006
    %v1008 = vpop.f32.mrf.mxu0
    %1009 = vmatprep.mubr.f32.mxu0 0.0
    %1010 = vmatmul.mubr.f32.gmra.mxu0 %v800
    %v1011 = vpop.f32.mrf.mxu0
    %v1012 = vadd.f32 0.0, %v1011
    %v1013 = vpop.f32.mrf.mxu0
    %1014 = vmatprep.mubr.f32.mxu0 0.0
    %1015 = vmatmul.mubr.f32.gmra.mxu0 %v802
    %v1016 = vpop.f32.mrf.mxu0
    %v1017 = vadd.f32 0.0, %v1016
    %v1018 = vpop.f32.mrf.mxu0
    %1019 = vmatprep.mubr.f32.mxu0 0.0
    %1020 = vmatmul.mubr.f32.gmra.mxu0 %v804
    %v1021 = vpop.f32.mrf.mxu0
    %v1022 = vadd.f32 0.0, %v1021
    %v1023 = vpop.f32.mrf.mxu0
    %1024 = vmatprep.mubr.f32.mxu0 0.0
    %1025 = vmatmul.mubr.f32.gmra.mxu0 %v806
    %v1026 = vpop.f32.mrf.mxu0
    %v1027 = vadd.f32 0.0, %v1026
    %v1028 = vpop.f32.mrf.mxu0
    %1029 = vmatprep.mubr.f32.mxu0 0.0
    %1030 = vmatmul.mubr.f32.gmra.mxu0 %v808
    %v1031 = vpop.f32.mrf.mxu0
    %v1032 = vadd.f32 0.0, %v1031
    %v1033 = vpop.f32.mrf.mxu0
    %1034 = vmatprep.mubr.f32.mxu0 0.0
    %1035 = vmatmul.mubr.f32.gmra.mxu0 %v810
    %v1036 = vpop.f32.mrf.mxu0
    %v1037 = vadd.f32 0.0, %v1036
    %v1038 = vpop.f32.mrf.mxu0
    %1039 = vmatprep.mubr.f32.mxu0 0.0
    %1040 = vmatmul.mubr.f32.gmra.mxu0 %v812
    %v1041 = vpop.f32.mrf.mxu0
    %v1042 = vadd.f32 0.0, %v1041
    %v1043 = vpop.f32.mrf.mxu0
    %1044 = vmatprep.mubr.f32.mxu0 0.0
    %1045 = vmatmul.mubr.f32.gmra.mxu0 %v814
    %v1046 = vpop.f32.mrf.mxu0
    %v1047 = vadd.f32 0.0, %v1046
    %v1048 = vpop.f32.mrf.mxu0
    %1049 = vmatprep.mubr.f32.mxu0 0.0
    %1050 = vmatmul.mubr.f32.gmra.mxu0 %v816
    %v1051 = vpop.f32.mrf.mxu0
    %v1052 = vadd.f32 0.0, %v1051
    %v1053 = vpop.f32.mrf.mxu0
    %1054 = vmatprep.mubr.f32.mxu0 0.0
    %1055 = vmatmul.mubr.f32.gmra.mxu0 %v818
    %v1056 = vpop.f32.mrf.mxu0
    %v1057 = vadd.f32 0.0, %v1056
    %v1058 = vpop.f32.mrf.mxu0
    %1059 = vmatprep.mubr.f32.mxu0 0.0
    %1060 = vmatmul.mubr.f32.gmra.mxu0 %v820
    %v1061 = vpop.f32.mrf.mxu0
    %v1062 = vadd.f32 0.0, %v1061
    %v1063 = vpop.f32.mrf.mxu0
    %1064 = vmatprep.mubr.f32.mxu0 0.0
    %1065 = vmatmul.mubr.f32.gmra.mxu0 %v822
    %v1066 = vpop.f32.mrf.mxu0
    %v1067 = vadd.f32 0.0, %v1066
    %v1068 = vpop.f32.mrf.mxu0
    %1069 = vmatprep.mubr.f32.mxu0 0.0
    %1070 = vmatmul.mubr.f32.gmra.mxu0 %v824
    %v1071 = vpop.f32.mrf.mxu0
    %v1072 = vadd.f32 0.0, %v1071
    %v1073 = vpop.f32.mrf.mxu0
    %1074 = vmatprep.mubr.f32.mxu0 0.0
    %1075 = vmatmul.mubr.f32.gmra.mxu0 %v826
    %v1076 = vpop.f32.mrf.mxu0
    %v1077 = vadd.f32 0.0, %v1076
    %v1078 = vpop.f32.mrf.mxu0
    %1079 = vmatprep.mubr.f32.mxu0 0.0
    %1080 = vmatmul.mubr.f32.gmra.mxu0 %v828
    %v1081 = vpop.f32.mrf.mxu0
    %v1082 = vadd.f32 0.0, %v1081
    %v1083 = vpop.f32.mrf.mxu0
    %1084 = vmatprep.mubr.f32.mxu0 0.0
    %1085 = vmatmul.mubr.f32.gmra.mxu0 %v830
    %v1086 = vpop.f32.mrf.mxu0
    %v1087 = vadd.f32 0.0, %v1086
    %v1088 = vpop.f32.mrf.mxu0
    %1089 = vmatprep.mubr.f32.mxu0 0.0
    %1090 = vmatmul.mubr.f32.gmra.mxu0 %v832
    %v1091 = vpop.f32.mrf.mxu0
    %v1092 = vadd.f32 0.0, %v1091
    %v1093 = vpop.f32.mrf.mxu0
    %1094 = vmatprep.mubr.f32.mxu0 0.0
    %1095 = vmatmul.mubr.f32.gmra.mxu0 %v834
    %v1096 = vpop.f32.mrf.mxu0
    %v1097 = vadd.f32 0.0, %v1096
    %v1098 = vpop.f32.mrf.mxu0
    %1099 = vmatprep.mubr.f32.mxu0 0.0
    %1100 = vmatmul.mubr.f32.gmra.mxu0 %v836
    %v1101 = vpop.f32.mrf.mxu0
    %v1102 = vadd.f32 0.0, %v1101
    %v1103 = vpop.f32.mrf.mxu0
    %1104 = vmatprep.mubr.f32.mxu0 0.0
    %1105 = vmatmul.mubr.f32.gmra.mxu0 %v838
    %v1106 = vpop.f32.mrf.mxu0
    %v1107 = vadd.f32 0.0, %v1106
    %v1108 = vpop.f32.mrf.mxu0
    %1109 = vmatprep.mubr.f32.mxu0 0.0
    %1110 = vmatmul.mubr.f32.gmra.mxu0 %v840
    %v1111 = vpop.f32.mrf.mxu0
    %v1112 = vadd.f32 0.0, %v1111
    %v1113 = vpop.f32.mrf.mxu0
    %1114 = vmatprep.mubr.f32.mxu0 0.0
    %1115 = vmatmul.mubr.f32.gmra.mxu0 %v842
    %v1116 = vpop.f32.mrf.mxu0
    %v1117 = vadd.f32 0.0, %v1116
    %v1118 = vpop.f32.mrf.mxu0
    %1119 = vmatprep.mubr.f32.mxu0 0.0
    %1120 = vmatmul.mubr.f32.gmra.mxu0 %v844
    %v1121 = vpop.f32.mrf.mxu0
    %v1122 = vadd.f32 0.0, %v1121
    %v1123 = vpop.f32.mrf.mxu0
    %1124 = vmatprep.mubr.f32.mxu0 0.0
    %1125 = vmatmul.mubr.f32.gmra.mxu0 %v846
    %v1126 = vpop.f32.mrf.mxu0
    %v1127 = vadd.f32 0.0, %v1126
    %v1128 = vpop.f32.mrf.mxu0
    %1129 = vmatprep.mubr.f32.mxu0 0.0
    %1130 = vmatmul.mubr.f32.gmra.mxu0 %v848
    %v1131 = vpop.f32.mrf.mxu0
    %v1132 = vadd.f32 0.0, %v1131
    %v1133 = vpop.f32.mrf.mxu0
    %1134 = vmatprep.mubr.f32.mxu0 0.0
    %1135 = vmatmul.mubr.f32.gmra.mxu0 %v850
    %v1136 = vpop.f32.mrf.mxu0
    %v1137 = vadd.f32 0.0, %v1136
    %v1138 = vpop.f32.mrf.mxu0
    %1139 = vmatprep.mubr.f32.mxu0 0.0
    %1140 = vmatmul.mubr.f32.gmra.mxu0 %v852
    %v1141 = vpop.f32.mrf.mxu0
    %v1142 = vadd.f32 0.0, %v1141
    %v1143 = vpop.f32.mrf.mxu0
    %1144 = vmatprep.mubr.f32.mxu0 0.0
    %1145 = vmatmul.mubr.f32.gmra.mxu0 %v854
    %v1146 = vpop.f32.mrf.mxu0
    %v1147 = vadd.f32 0.0, %v1146
    %v1148 = vpop.f32.mrf.mxu0
    %1149 = vmatprep.mubr.f32.mxu0 0.0
    %1150 = vmatmul.mubr.f32.gmra.mxu0 %v856
    %v1151 = vpop.f32.mrf.mxu0
    %v1152 = vadd.f32 0.0, %v1151
    %v1153 = vpop.f32.mrf.mxu0
    %1154 = vmatprep.mubr.f32.mxu0 0.0
    %1155 = vmatmul.mubr.f32.gmra.mxu0 %v858
    %v1156 = vpop.f32.mrf.mxu0
    %v1157 = vadd.f32 0.0, %v1156
    %v1158 = vpop.f32.mrf.mxu0
    %1159 = vmatprep.mubr.f32.mxu0 0.0
    %1160 = vmatmul.mubr.f32.gmra.mxu0 %v860
    %v1161 = vpop.f32.mrf.mxu0
    %v1162 = vadd.f32 0.0, %v1161
    %v1163 = vpop.f32.mrf.mxu0
    %1164 = vmatprep.mubr.f32.mxu0 0.0
    %1165 = vmatmul.mubr.f32.gmra.mxu0 %v862
    %v1166 = vpop.f32.mrf.mxu0
    %v1167 = vadd.f32 0.0, %v1166
    %v1168 = vpop.f32.mrf.mxu0
    %1169 = vmatprep.mubr.f32.mxu0 0.0
    %1170 = vmatmul.mubr.f32.gmra.mxu0 %v864
    %v1171 = vpop.f32.mrf.mxu0
    %v1172 = vadd.f32 0.0, %v1171
    %v1173 = vpop.f32.mrf.mxu0
    %1174 = vmatprep.mubr.f32.mxu0 0.0
    %1175 = vmatmul.mubr.f32.gmra.mxu0 %v866
    %v1176 = vpop.f32.mrf.mxu0
    %v1177 = vadd.f32 0.0, %v1176
    %v1178 = vpop.f32.mrf.mxu0
    %1179 = vmatprep.mubr.f32.mxu0 0.0
    %1180 = vmatmul.mubr.f32.gmra.mxu0 %v868
    %v1181 = vpop.f32.mrf.mxu0
    %v1182 = vadd.f32 0.0, %v1181
    %v1183 = vpop.f32.mrf.mxu0
    %1184 = vmatprep.mubr.f32.mxu0 0.0
    %1185 = vmatmul.mubr.f32.gmra.mxu0 %v870
    %v1186 = vpop.f32.mrf.mxu0
    %v1187 = vadd.f32 0.0, %v1186
    %v1188 = vpop.f32.mrf.mxu0
    %1189 = vmatprep.mubr.f32.mxu0 0.0
    %1190 = vmatmul.mubr.f32.gmra.mxu0 %v872
    %v1191 = vpop.f32.mrf.mxu0
    %v1192 = vadd.f32 0.0, %v1191
    %v1193 = vpop.f32.mrf.mxu0
    %1194 = vmatprep.mubr.f32.mxu0 0.0
    %1195 = vmatmul.mubr.f32.gmra.mxu0 %v874
    %v1196 = vpop.f32.mrf.mxu0
    %v1197 = vadd.f32 0.0, %v1196
    %v1198 = vpop.f32.mrf.mxu0
    %1199 = vmatprep.mubr.f32.mxu0 0.0
    %1200 = vmatmul.mubr.f32.gmra.mxu0 %v876
    %v1201 = vpop.f32.mrf.mxu0
    %v1202 = vadd.f32 0.0, %v1201
    %v1203 = vpop.f32.mrf.mxu0
    %1204 = vmatprep.mubr.f32.mxu0 0.0
    %1205 = vmatmul.mubr.f32.gmra.mxu0 %v878
    %v1206 = vpop.f32.mrf.mxu0
    %v1207 = vadd.f32 0.0, %v1206
    %v1208 = vpop.f32.mrf.mxu0
    %1209 = vmatprep.mubr.f32.mxu0 0.0
    %1210 = vmatmul.mubr.f32.gmra.mxu0 %v880
    %v1211 = vpop.f32.mrf.mxu0
    %v1212 = vadd.f32 0.0, %v1211
    %v1213 = vpop.f32.mrf.mxu0
    %1214 = vmatprep.mubr.f32.mxu0 0.0
    %1215 = vmatmul.mubr.f32.gmra.mxu0 %v882
    %v1216 = vpop.f32.mrf.mxu0
    %v1217 = vadd.f32 0.0, %v1216
    %v1218 = vpop.f32.mrf.mxu0
    %1219 = vmatprep.mubr.f32.mxu0 0.0
    %1220 = vmatmul.mubr.f32.gmra.mxu0 %v884
    %v1221 = vpop.f32.mrf.mxu0
    %v1222 = vadd.f32 0.0, %v1221
    %v1223 = vpop.f32.mrf.mxu0
    %1224 = vmatprep.mubr.f32.mxu0 0.0
    %1225 = vmatmul.mubr.f32.gmra.mxu0 %v886
    %v1226 = vpop.f32.mrf.mxu0
    %v1227 = vadd.f32 0.0, %v1226
    %v1228 = vpop.f32.mrf.mxu0
    %1229 = vmatprep.mubr.f32.mxu0 0.0
    %1230 = vmatmul.mubr.f32.gmra.mxu0 %v888
    %v1231 = vpop.f32.mrf.mxu0
    %v1232 = vadd.f32 0.0, %v1231
    %v1233 = vpop.f32.mrf.mxu0
    %1234 = vmatprep.mubr.f32.mxu0 0.0
    %1235 = vmatmul.mubr.f32.gmra.mxu0 %v890
    %v1236 = vpop.f32.mrf.mxu0
    %v1237 = vadd.f32 0.0, %v1236
    %v1238 = vpop.f32.mrf.mxu0
    %1239 = vmatprep.mubr.f32.mxu0 0.0
    %1240 = vmatmul.mubr.f32.gmra.mxu0 %v892
    %v1241 = vpop.f32.mrf.mxu0
    %v1242 = vadd.f32 0.0, %v1241
    %v1243 = vpop.f32.mrf.mxu0
    %1244 = vmatprep.mubr.f32.mxu0 0.0
    %1245 = vmatmul.mubr.f32.gmra.mxu0 %v894
    %v1246 = vpop.f32.mrf.mxu0
    %v1247 = vadd.f32 0.0, %v1246
    %v1248 = vpop.f32.mrf.mxu0
    %1249 = vmatprep.mubr.f32.mxu0 0.0
    %1250 = vmatmul.mubr.f32.gmra.mxu0 %v896
    %v1251 = vpop.f32.mrf.mxu0
    %v1252 = vadd.f32 0.0, %v1251
    %v1253 = vpop.f32.mrf.mxu0
    %1254 = vmatprep.mubr.f32.mxu0 0.0
    %1255 = vmatmul.mubr.f32.gmra.mxu0 %v898
    %v1256 = vpop.f32.mrf.mxu0
    %v1257 = vadd.f32 0.0, %v1256
    %v1258 = vpop.f32.mrf.mxu0
    %1259 = vmatprep.mubr.f32.mxu0 0.0
    %1260 = vmatmul.mubr.f32.gmra.mxu0 %v900
    %v1261 = vpop.f32.mrf.mxu0
    %v1262 = vadd.f32 0.0, %v1261
    %v1263 = vpop.f32.mrf.mxu0
    %1264 = vmatprep.mubr.f32.mxu0 0.0
    %1265 = vmatmul.mubr.f32.gmra.mxu0 %v902
    %v1266 = vpop.f32.mrf.mxu0
    %v1267 = vadd.f32 0.0, %v1266
    %v1268 = vpop.f32.mrf.mxu0
    %1269 = vmatprep.mubr.f32.mxu0 0.0
    %1270 = vmatmul.mubr.f32.gmra.mxu0 %v904
    %v1271 = vpop.f32.mrf.mxu0
    %v1272 = vadd.f32 0.0, %v1271
    %v1273 = vpop.f32.mrf.mxu0
    %1274 = vmatprep.mubr.f32.mxu0 0.0
    %1275 = vmatmul.mubr.f32.gmra.mxu0 %v906
    %v1276 = vpop.f32.mrf.mxu0
    %v1277 = vadd.f32 0.0, %v1276
    %v1278 = vpop.f32.mrf.mxu0
    %1279 = vmatprep.mubr.f32.mxu0 0.0
    %1280 = vmatmul.mubr.f32.gmra.mxu0 %v908
    %v1281 = vpop.f32.mrf.mxu0
    %v1282 = vadd.f32 0.0, %v1281
    %v1283 = vpop.f32.mrf.mxu0
    %1284 = vmatprep.mubr.f32.mxu0 0.0
    %1285 = vmatmul.mubr.f32.gmra.mxu0 %v910
    %v1286 = vpop.f32.mrf.mxu0
    %v1287 = vadd.f32 0.0, %v1286
    %v1288 = vpop.f32.mrf.mxu0
    %1289 = vmatprep.mubr.f32.mxu0 0.0
    %1290 = vmatmul.mubr.f32.gmra.mxu0 %v912
    %v1291 = vpop.f32.mrf.mxu0
    %v1292 = vadd.f32 0.0, %v1291
    %v1293 = vpop.f32.mrf.mxu0
    %1294 = vmatprep.mubr.f32.mxu0 0.0
    %1295 = vmatmul.mubr.f32.gmra.mxu0 %v914
    %v1296 = vpop.f32.mrf.mxu0
    %v1297 = vadd.f32 0.0, %v1296
    %v1298 = vpop.f32.mrf.mxu0
    %1299 = vmatprep.mubr.f32.mxu0 0.0
    %1300 = vmatmul.mubr.f32.gmra.mxu0 %v916
    %v1301 = vpop.f32.mrf.mxu0
    %v1302 = vadd.f32 0.0, %v1301
    %v1303 = vpop.f32.mrf.mxu0
    %1304 = vmatprep.mubr.f32.mxu0 0.0
    %1305 = vmatmul.mubr.f32.gmra.mxu0 %v918
    %v1306 = vpop.f32.mrf.mxu0
    %v1307 = vadd.f32 0.0, %v1306
    %v1308 = vpop.f32.mrf.mxu0
    %1309 = vmatprep.mubr.f32.mxu0 0.0
    %1310 = vmatmul.mubr.f32.gmra.mxu0 %v920
    %v1311 = vpop.f32.mrf.mxu0
    %v1312 = vadd.f32 0.0, %v1311
    %v1313 = vpop.f32.mrf.mxu0
    %1314 = vmatprep.mubr.f32.mxu0 0.0
    %1315 = vmatmul.mubr.f32.gmra.mxu0 %v922
    %v1316 = vpop.f32.mrf.mxu0
    %v1317 = vadd.f32 0.0, %v1316
    %v1318 = vpop.f32.mrf.mxu0
    %1319 = vmatprep.mubr.f32.mxu0 0.0
    %1320 = vmatmul.mubr.f32.gmra.mxu0 %v924
    %v1321 = vpop.f32.mrf.mxu0
    %v1322 = vadd.f32 0.0, %v1321
    %v1323 = vpop.f32.mrf.mxu0
    %1324 = vmatprep.mubr.f32.mxu0 0.0
    %1325 = vmatmul.mubr.f32.gmra.mxu0 %v926
    %v1326 = vpop.f32.mrf.mxu0
    %v1327 = vadd.f32 0.0, %v1326
    %v1328 = vpop.f32.mrf.mxu0
    %1329 = vmatprep.mubr.f32.mxu0 0.0
    %1330 = vmatmul.mubr.f32.gmra.mxu0 %v928
    %v1331 = vpop.f32.mrf.mxu0
    %v1332 = vadd.f32 0.0, %v1331
    %v1333 = vpop.f32.mrf.mxu0
    %1334 = vdwg.mxu0
    %v1335 = vmul.f32 %v997, %v997
    %v1336 = vmul.f32 %v1002, %v1002
    %v1337 = vmul.f32 %v1007, %v1007
    %v1338 = vmul.f32 %v1012, %v1012
    %v1339 = vmul.f32 %v1017, %v1017
    %v1340 = vmul.f32 %v1022, %v1022
    %v1341 = vmul.f32 %v1027, %v1027
    %v1342 = vmul.f32 %v1032, %v1032
    %v1343 = vmul.f32 %v1037, %v1037
    %v1344 = vmul.f32 %v1042, %v1042
    %v1345 = vmul.f32 %v1047, %v1047
    %v1346 = vmul.f32 %v1052, %v1052
    %v1347 = vmul.f32 %v1057, %v1057
    %v1348 = vmul.f32 %v1062, %v1062
    %v1349 = vmul.f32 %v1067, %v1067
    %v1350 = vmul.f32 %v1072, %v1072
    %v1351 = vmul.f32 %v1077, %v1077
    %v1352 = vmul.f32 %v1082, %v1082
    %v1353 = vmul.f32 %v1087, %v1087
    %v1354 = vmul.f32 %v1092, %v1092
    %v1355 = vmul.f32 %v1097, %v1097
    %v1356 = vmul.f32 %v1102, %v1102
    %v1357 = vmul.f32 %v1107, %v1107
    %v1358 = vmul.f32 %v1112, %v1112
    %v1359 = vmul.f32 %v1117, %v1117
    %v1360 = vmul.f32 %v1122, %v1122
    %v1361 = vmul.f32 %v1127, %v1127
    %v1362 = vmul.f32 %v1132, %v1132
    %v1363 = vmul.f32 %v1137, %v1137
    %v1364 = vmul.f32 %v1142, %v1142
    %v1365 = vmul.f32 %v1147, %v1147
    %v1366 = vmul.f32 %v1152, %v1152
    %v1367 = vmul.f32 %v1157, %v1157
    %v1368 = vmul.f32 %v1162, %v1162
    %v1369 = vmul.f32 %v1167, %v1167
    %v1370 = vmul.f32 %v1172, %v1172
    %v1371 = vmul.f32 %v1177, %v1177
    %v1372 = vmul.f32 %v1182, %v1182
    %v1373 = vmul.f32 %v1187, %v1187
    %v1374 = vmul.f32 %v1192, %v1192
    %v1375 = vmul.f32 %v1197, %v1197
    %v1376 = vmul.f32 %v1202, %v1202
    %v1377 = vmul.f32 %v1207, %v1207
    %v1378 = vmul.f32 %v1212, %v1212
    %v1379 = vmul.f32 %v1217, %v1217
    %v1380 = vmul.f32 %v1222, %v1222
    %v1381 = vmul.f32 %v1227, %v1227
    %v1382 = vmul.f32 %v1232, %v1232
    %v1383 = vmul.f32 %v1237, %v1237
    %v1384 = vmul.f32 %v1242, %v1242
    %v1385 = vmul.f32 %v1247, %v1247
    %v1386 = vmul.f32 %v1252, %v1252
    %v1387 = vmul.f32 %v1257, %v1257
    %v1388 = vmul.f32 %v1262, %v1262
    %v1389 = vmul.f32 %v1267, %v1267
    %v1390 = vmul.f32 %v1272, %v1272
    %v1391 = vmul.f32 %v1277, %v1277
    %v1392 = vmul.f32 %v1282, %v1282
    %v1393 = vmul.f32 %v1287, %v1287
    %v1394 = vmul.f32 %v1292, %v1292
    %v1395 = vmul.f32 %v1297, %v1297
    %v1396 = vmul.f32 %v1302, %v1302
    %v1397 = vmul.f32 %v1307, %v1307
    %v1398 = vmul.f32 %v1312, %v1312
    %v1399 = vmul.f32 %v1317, %v1317
    %v1400 = vmul.f32 %v1322, %v1322
    %v1401 = vmul.f32 %v1327, %v1327
    %v1402 = vmul.f32 %v1332, %v1332
    %1471 = vrot.lane.b32.xlu0 %v1335, 119
    %v1472 = vpop.permute.xlu0 %1471
    %1473 = vrot.lane.b32.xlu0 %v1336, 119
    %v1474 = vpop.permute.xlu0 %1473
    %1475 = vrot.lane.b32.xlu0 %v1337, 119
    %v1476 = vpop.permute.xlu0 %1475
    %1477 = vrot.lane.b32.xlu0 %v1338, 119
    %v1478 = vpop.permute.xlu0 %1477
    %1479 = vrot.lane.b32.xlu0 %v1339, 119
    %v1480 = vpop.permute.xlu0 %1479
    %1481 = vrot.lane.b32.xlu0 %v1340, 119
    %v1482 = vpop.permute.xlu0 %1481
    %1483 = vrot.lane.b32.xlu0 %v1341, 119
    %v1484 = vpop.permute.xlu0 %1483
    %1485 = vrot.lane.b32.xlu0 %v1342, 119
    %v1486 = vpop.permute.xlu0 %1485
    %1487 = vrot.lane.b32.xlu0 %v1343, 119
    %v1488 = vpop.permute.xlu0 %1487
    %1489 = vrot.lane.b32.xlu0 %v1344, 119
    %v1490 = vpop.permute.xlu0 %1489
    %1491 = vrot.lane.b32.xlu0 %v1345, 119
    %v1492 = vpop.permute.xlu0 %1491
    %1493 = vrot.lane.b32.xlu0 %v1346, 119
    %v1494 = vpop.permute.xlu0 %1493
    %1495 = vrot.lane.b32.xlu0 %v1347, 119
    %v1496 = vpop.permute.xlu0 %1495
    %1497 = vrot.lane.b32.xlu0 %v1348, 119
    %v1498 = vpop.permute.xlu0 %1497
    %1499 = vrot.lane.b32.xlu0 %v1349, 119
    %v1500 = vpop.permute.xlu0 %1499
    %1501 = vrot.lane.b32.xlu0 %v1350, 119
    %v1502 = vpop.permute.xlu0 %1501
    %1503 = vrot.lane.b32.xlu0 %v1351, 119
    %v1504 = vpop.permute.xlu0 %1503
    %1505 = vrot.lane.b32.xlu0 %v1352, 119
    %v1506 = vpop.permute.xlu0 %1505
    %1507 = vrot.lane.b32.xlu0 %v1353, 119
    %v1508 = vpop.permute.xlu0 %1507
    %1509 = vrot.lane.b32.xlu0 %v1354, 119
    %v1510 = vpop.permute.xlu0 %1509
    %1511 = vrot.lane.b32.xlu0 %v1355, 119
    %v1512 = vpop.permute.xlu0 %1511
    %1513 = vrot.lane.b32.xlu0 %v1356, 119
    %v1514 = vpop.permute.xlu0 %1513
    %1515 = vrot.lane.b32.xlu0 %v1357, 119
    %v1516 = vpop.permute.xlu0 %1515
    %1517 = vrot.lane.b32.xlu0 %v1358, 119
    %v1518 = vpop.permute.xlu0 %1517
    %1519 = vrot.lane.b32.xlu0 %v1359, 119
    %v1520 = vpop.permute.xlu0 %1519
    %1521 = vrot.lane.b32.xlu0 %v1360, 119
    %v1522 = vpop.permute.xlu0 %1521
    %1523 = vrot.lane.b32.xlu0 %v1361, 119
    %v1524 = vpop.permute.xlu0 %1523
    %1525 = vrot.lane.b32.xlu0 %v1362, 119
    %v1526 = vpop.permute.xlu0 %1525
    %1527 = vrot.lane.b32.xlu0 %v1363, 119
    %v1528 = vpop.permute.xlu0 %1527
    %1529 = vrot.lane.b32.xlu0 %v1364, 119
    %v1530 = vpop.permute.xlu0 %1529
    %1531 = vrot.lane.b32.xlu0 %v1365, 119
    %v1532 = vpop.permute.xlu0 %1531
    %1533 = vrot.lane.b32.xlu0 %v1366, 119
    %v1534 = vpop.permute.xlu0 %1533
    %1535 = vrot.lane.b32.xlu0 %v1367, 119
    %v1536 = vpop.permute.xlu0 %1535
    %1537 = vrot.lane.b32.xlu0 %v1368, 119
    %v1538 = vpop.permute.xlu0 %1537
    %1539 = vrot.lane.b32.xlu0 %v1369, 119
    %v1540 = vpop.permute.xlu0 %1539
    %1541 = vrot.lane.b32.xlu0 %v1370, 119
    %v1542 = vpop.permute.xlu0 %1541
    %1543 = vrot.lane.b32.xlu0 %v1371, 119
    %v1544 = vpop.permute.xlu0 %1543
    %1545 = vrot.lane.b32.xlu0 %v1372, 119
    %v1546 = vpop.permute.xlu0 %1545
    %1547 = vrot.lane.b32.xlu0 %v1373, 119
    %v1548 = vpop.permute.xlu0 %1547
    %1549 = vrot.lane.b32.xlu0 %v1374, 119
    %v1550 = vpop.permute.xlu0 %1549
    %1551 = vrot.lane.b32.xlu0 %v1375, 119
    %v1552 = vpop.permute.xlu0 %1551
    %1553 = vrot.lane.b32.xlu0 %v1376, 119
    %v1554 = vpop.permute.xlu0 %1553
    %1555 = vrot.lane.b32.xlu0 %v1377, 119
    %v1556 = vpop.permute.xlu0 %1555
    %1557 = vrot.lane.b32.xlu0 %v1378, 119
    %v1558 = vpop.permute.xlu0 %1557
    %1559 = vrot.lane.b32.xlu0 %v1379, 119
    %v1560 = vpop.permute.xlu0 %1559
    %1561 = vrot.lane.b32.xlu0 %v1380, 119
    %v1562 = vpop.permute.xlu0 %1561
    %1563 = vrot.lane.b32.xlu0 %v1381, 119
    %v1564 = vpop.permute.xlu0 %1563
    %1565 = vrot.lane.b32.xlu0 %v1382, 119
    %v1566 = vpop.permute.xlu0 %1565
    %1567 = vrot.lane.b32.xlu0 %v1383, 119
    %v1568 = vpop.permute.xlu0 %1567
    %1569 = vrot.lane.b32.xlu0 %v1384, 119
    %v1570 = vpop.permute.xlu0 %1569
    %1571 = vrot.lane.b32.xlu0 %v1385, 119
    %v1572 = vpop.permute.xlu0 %1571
    %1573 = vrot.lane.b32.xlu0 %v1386, 119
    %v1574 = vpop.permute.xlu0 %1573
    %1575 = vrot.lane.b32.xlu0 %v1387, 119
    %v1576 = vpop.permute.xlu0 %1575
    %1577 = vrot.lane.b32.xlu0 %v1388, 119
    %v1578 = vpop.permute.xlu0 %1577
    %1579 = vrot.lane.b32.xlu0 %v1389, 119
    %v1580 = vpop.permute.xlu0 %1579
    %1581 = vrot.lane.b32.xlu0 %v1390, 119
    %v1582 = vpop.permute.xlu0 %1581
    %1583 = vrot.lane.b32.xlu0 %v1391, 119
    %v1584 = vpop.permute.xlu0 %1583
    %1585 = vrot.lane.b32.xlu0 %v1392, 119
    %v1586 = vpop.permute.xlu0 %1585
    %1587 = vrot.lane.b32.xlu0 %v1393, 119
    %v1588 = vpop.permute.xlu0 %1587
    %1589 = vrot.lane.b32.xlu0 %v1394, 119
    %v1590 = vpop.permute.xlu0 %1589
    %1591 = vrot.lane.b32.xlu0 %v1395, 119
    %v1592 = vpop.permute.xlu0 %1591
    %1593 = vrot.lane.b32.xlu0 %v1396, 119
    %v1594 = vpop.permute.xlu0 %1593
    %1595 = vrot.lane.b32.xlu0 %v1397, 119
    %v1596 = vpop.permute.xlu0 %1595
    %1597 = vrot.lane.b32.xlu0 %v1398, 119
    %v1598 = vpop.permute.xlu0 %1597
    %1599 = vrot.lane.b32.xlu0 %v1399, 119
    %v1600 = vpop.permute.xlu0 %1599
    %1601 = vrot.lane.b32.xlu0 %v1400, 119
    %v1602 = vpop.permute.xlu0 %1601
    %1603 = vrot.lane.b32.xlu0 %v1401, 119
    %v1604 = vpop.permute.xlu0 %1603
    %1605 = vrot.lane.b32.xlu0 %v1402, 119
    %v1606 = vpop.permute.xlu0 %1605
    %v1675 = vadd.f32 %v1335, %v1472
    %v1676 = vadd.f32 %v1336, %v1474
    %v1677 = vadd.f32 %v1337, %v1476
    %v1678 = vadd.f32 %v1338, %v1478
    %v1679 = vadd.f32 %v1339, %v1480
    %v1680 = vadd.f32 %v1340, %v1482
    %v1681 = vadd.f32 %v1341, %v1484
    %v1682 = vadd.f32 %v1342, %v1486
    %v1683 = vadd.f32 %v1343, %v1488
    %v1684 = vadd.f32 %v1344, %v1490
    %v1685 = vadd.f32 %v1345, %v1492
    %v1686 = vadd.f32 %v1346, %v1494
    %v1687 = vadd.f32 %v1347, %v1496
    %v1688 = vadd.f32 %v1348, %v1498
    %v1689 = vadd.f32 %v1349, %v1500
    %v1690 = vadd.f32 %v1350, %v1502
    %v1691 = vadd.f32 %v1351, %v1504
    %v1692 = vadd.f32 %v1352, %v1506
    %v1693 = vadd.f32 %v1353, %v1508
    %v1694 = vadd.f32 %v1354, %v1510
    %v1695 = vadd.f32 %v1355, %v1512
    %v1696 = vadd.f32 %v1356, %v1514
    %v1697 = vadd.f32 %v1357, %v1516
    %v1698 = vadd.f32 %v1358, %v1518
    %v1699 = vadd.f32 %v1359, %v1520
    %v1700 = vadd.f32 %v1360, %v1522
    %v1701 = vadd.f32 %v1361, %v1524
    %v1702 = vadd.f32 %v1362, %v1526
    %v1703 = vadd.f32 %v1363, %v1528
    %v1704 = vadd.f32 %v1364, %v1530
    %v1705 = vadd.f32 %v1365, %v1532
    %v1706 = vadd.f32 %v1366, %v1534
    %v1707 = vadd.f32 %v1367, %v1536
    %v1708 = vadd.f32 %v1368, %v1538
    %v1709 = vadd.f32 %v1369, %v1540
    %v1710 = vadd.f32 %v1370, %v1542
    %v1711 = vadd.f32 %v1371, %v1544
    %v1712 = vadd.f32 %v1372, %v1546
    %v1713 = vadd.f32 %v1373, %v1548
    %v1714 = vadd.f32 %v1374, %v1550
    %v1715 = vadd.f32 %v1375, %v1552
    %v1716 = vadd.f32 %v1376, %v1554
    %v1717 = vadd.f32 %v1377, %v1556
    %v1718 = vadd.f32 %v1378, %v1558
    %v1719 = vadd.f32 %v1379, %v1560
    %v1720 = vadd.f32 %v1380, %v1562
    %v1721 = vadd.f32 %v1381, %v1564
    %v1722 = vadd.f32 %v1382, %v1566
    %v1723 = vadd.f32 %v1383, %v1568
    %v1724 = vadd.f32 %v1384, %v1570
    %v1725 = vadd.f32 %v1385, %v1572
    %v1726 = vadd.f32 %v1386, %v1574
    %v1727 = vadd.f32 %v1387, %v1576
    %v1728 = vadd.f32 %v1388, %v1578
    %v1729 = vadd.f32 %v1389, %v1580
    %v1730 = vadd.f32 %v1390, %v1582
    %v1731 = vadd.f32 %v1391, %v1584
    %v1732 = vadd.f32 %v1392, %v1586
    %v1733 = vadd.f32 %v1393, %v1588
    %v1734 = vadd.f32 %v1394, %v1590
    %v1735 = vadd.f32 %v1395, %v1592
    %v1736 = vadd.f32 %v1396, %v1594
    %v1737 = vadd.f32 %v1397, %v1596
    %v1738 = vadd.f32 %v1398, %v1598
    %v1739 = vadd.f32 %v1399, %v1600
    %v1740 = vadd.f32 %v1400, %v1602
    %v1741 = vadd.f32 %v1401, %v1604
    %v1742 = vadd.f32 %v1402, %v1606
    %v1743 = vrsqrt.pop %v1675
    %v1744 = vmul.f32 %v1675, %v1743
    %vm1745 = vcmp.eq.f32.partialorder %v1675, inf
    %v1746 = vsel %vm1745, %v1675, %v1744
    %vm1747 = vcmp.eq.f32.partialorder %v1675, 0.0
    %v1748 = vand.u32 %v1675, 2147483648
    %v1749 = vsel %vm1747, %v1748, %v1746
    %v1750 = vrsqrt.pop %v1676
    %v1751 = vmul.f32 %v1676, %v1750
    %vm1752 = vcmp.eq.f32.partialorder %v1676, inf
    %v1753 = vsel %vm1752, %v1676, %v1751
    %vm1754 = vcmp.eq.f32.partialorder %v1676, 0.0
    %v1755 = vand.u32 %v1676, 2147483648
    %v1756 = vsel %vm1754, %v1755, %v1753
    %v1757 = vrsqrt.pop %v1677
    %v1758 = vmul.f32 %v1677, %v1757
    %vm1759 = vcmp.eq.f32.partialorder %v1677, inf
    %v1760 = vsel %vm1759, %v1677, %v1758
    %vm1761 = vcmp.eq.f32.partialorder %v1677, 0.0
    %v1762 = vand.u32 %v1677, 2147483648
    %v1763 = vsel %vm1761, %v1762, %v1760
    %v1764 = vrsqrt.pop %v1678
    %v1765 = vmul.f32 %v1678, %v1764
    %vm1766 = vcmp.eq.f32.partialorder %v1678, inf
    %v1767 = vsel %vm1766, %v1678, %v1765
    %vm1768 = vcmp.eq.f32.partialorder %v1678, 0.0
    %v1769 = vand.u32 %v1678, 2147483648
    %v1770 = vsel %vm1768, %v1769, %v1767
    %v1771 = vrsqrt.pop %v1679
    %v1772 = vmul.f32 %v1679, %v1771
    %vm1773 = vcmp.eq.f32.partialorder %v1679, inf
    %v1774 = vsel %vm1773, %v1679, %v1772
    %vm1775 = vcmp.eq.f32.partialorder %v1679, 0.0
    %v1776 = vand.u32 %v1679, 2147483648
    %v1777 = vsel %vm1775, %v1776, %v1774
    %v1778 = vrsqrt.pop %v1680
    %v1779 = vmul.f32 %v1680, %v1778
    %vm1780 = vcmp.eq.f32.partialorder %v1680, inf
    %v1781 = vsel %vm1780, %v1680, %v1779
    %vm1782 = vcmp.eq.f32.partialorder %v1680, 0.0
    %v1783 = vand.u32 %v1680, 2147483648
    %v1784 = vsel %vm1782, %v1783, %v1781
    %v1785 = vrsqrt.pop %v1681
    %v1786 = vmul.f32 %v1681, %v1785
    %vm1787 = vcmp.eq.f32.partialorder %v1681, inf
    %v1788 = vsel %vm1787, %v1681, %v1786
    %vm1789 = vcmp.eq.f32.partialorder %v1681, 0.0
    %v1790 = vand.u32 %v1681, 2147483648
    %v1791 = vsel %vm1789, %v1790, %v1788
    %v1792 = vrsqrt.pop %v1682
    %v1793 = vmul.f32 %v1682, %v1792
    %vm1794 = vcmp.eq.f32.partialorder %v1682, inf
    %v1795 = vsel %vm1794, %v1682, %v1793
    %vm1796 = vcmp.eq.f32.partialorder %v1682, 0.0
    %v1797 = vand.u32 %v1682, 2147483648
    %v1798 = vsel %vm1796, %v1797, %v1795
    %v1799 = vrsqrt.pop %v1683
    %v1800 = vmul.f32 %v1683, %v1799
    %vm1801 = vcmp.eq.f32.partialorder %v1683, inf
    %v1802 = vsel %vm1801, %v1683, %v1800
    %vm1803 = vcmp.eq.f32.partialorder %v1683, 0.0
    %v1804 = vand.u32 %v1683, 2147483648
    %v1805 = vsel %vm1803, %v1804, %v1802
    %v1806 = vrsqrt.pop %v1684
    %v1807 = vmul.f32 %v1684, %v1806
    %vm1808 = vcmp.eq.f32.partialorder %v1684, inf
    %v1809 = vsel %vm1808, %v1684, %v1807
    %vm1810 = vcmp.eq.f32.partialorder %v1684, 0.0
    %v1811 = vand.u32 %v1684, 2147483648
    %v1812 = vsel %vm1810, %v1811, %v1809
    %v1813 = vrsqrt.pop %v1685
    %v1814 = vmul.f32 %v1685, %v1813
    %vm1815 = vcmp.eq.f32.partialorder %v1685, inf
    %v1816 = vsel %vm1815, %v1685, %v1814
    %vm1817 = vcmp.eq.f32.partialorder %v1685, 0.0
    %v1818 = vand.u32 %v1685, 2147483648
    %v1819 = vsel %vm1817, %v1818, %v1816
    %v1820 = vrsqrt.pop %v1686
    %v1821 = vmul.f32 %v1686, %v1820
    %vm1822 = vcmp.eq.f32.partialorder %v1686, inf
    %v1823 = vsel %vm1822, %v1686, %v1821
    %vm1824 = vcmp.eq.f32.partialorder %v1686, 0.0
    %v1825 = vand.u32 %v1686, 2147483648
    %v1826 = vsel %vm1824, %v1825, %v1823
    %v1827 = vrsqrt.pop %v1687
    %v1828 = vmul.f32 %v1687, %v1827
    %vm1829 = vcmp.eq.f32.partialorder %v1687, inf
    %v1830 = vsel %vm1829, %v1687, %v1828
    %vm1831 = vcmp.eq.f32.partialorder %v1687, 0.0
    %v1832 = vand.u32 %v1687, 2147483648
    %v1833 = vsel %vm1831, %v1832, %v1830
    %v1834 = vrsqrt.pop %v1688
    %v1835 = vmul.f32 %v1688, %v1834
    %vm1836 = vcmp.eq.f32.partialorder %v1688, inf
    %v1837 = vsel %vm1836, %v1688, %v1835
    %vm1838 = vcmp.eq.f32.partialorder %v1688, 0.0
    %v1839 = vand.u32 %v1688, 2147483648
    %v1840 = vsel %vm1838, %v1839, %v1837
    %v1841 = vrsqrt.pop %v1689
    %v1842 = vmul.f32 %v1689, %v1841
    %vm1843 = vcmp.eq.f32.partialorder %v1689, inf
    %v1844 = vsel %vm1843, %v1689, %v1842
    %vm1845 = vcmp.eq.f32.partialorder %v1689, 0.0
    %v1846 = vand.u32 %v1689, 2147483648
    %v1847 = vsel %vm1845, %v1846, %v1844
    %v1848 = vrsqrt.pop %v1690
    %v1849 = vmul.f32 %v1690, %v1848
    %vm1850 = vcmp.eq.f32.partialorder %v1690, inf
    %v1851 = vsel %vm1850, %v1690, %v1849
    %vm1852 = vcmp.eq.f32.partialorder %v1690, 0.0
    %v1853 = vand.u32 %v1690, 2147483648
    %v1854 = vsel %vm1852, %v1853, %v1851
    %v1855 = vrsqrt.pop %v1691
    %v1856 = vmul.f32 %v1691, %v1855
    %vm1857 = vcmp.eq.f32.partialorder %v1691, inf
    %v1858 = vsel %vm1857, %v1691, %v1856
    %vm1859 = vcmp.eq.f32.partialorder %v1691, 0.0
    %v1860 = vand.u32 %v1691, 2147483648
    %v1861 = vsel %vm1859, %v1860, %v1858
    %v1862 = vrsqrt.pop %v1692
    %v1863 = vmul.f32 %v1692, %v1862
    %vm1864 = vcmp.eq.f32.partialorder %v1692, inf
    %v1865 = vsel %vm1864, %v1692, %v1863
    %vm1866 = vcmp.eq.f32.partialorder %v1692, 0.0
    %v1867 = vand.u32 %v1692, 2147483648
    %v1868 = vsel %vm1866, %v1867, %v1865
    %v1869 = vrsqrt.pop %v1693
    %v1870 = vmul.f32 %v1693, %v1869
    %vm1871 = vcmp.eq.f32.partialorder %v1693, inf
    %v1872 = vsel %vm1871, %v1693, %v1870
    %vm1873 = vcmp.eq.f32.partialorder %v1693, 0.0
    %v1874 = vand.u32 %v1693, 2147483648
    %v1875 = vsel %vm1873, %v1874, %v1872
    %v1876 = vrsqrt.pop %v1694
    %v1877 = vmul.f32 %v1694, %v1876
    %vm1878 = vcmp.eq.f32.partialorder %v1694, inf
    %v1879 = vsel %vm1878, %v1694, %v1877
    %vm1880 = vcmp.eq.f32.partialorder %v1694, 0.0
    %v1881 = vand.u32 %v1694, 2147483648
    %v1882 = vsel %vm1880, %v1881, %v1879
    %v1883 = vrsqrt.pop %v1695
    %v1884 = vmul.f32 %v1695, %v1883
    %vm1885 = vcmp.eq.f32.partialorder %v1695, inf
    %v1886 = vsel %vm1885, %v1695, %v1884
    %vm1887 = vcmp.eq.f32.partialorder %v1695, 0.0
    %v1888 = vand.u32 %v1695, 2147483648
    %v1889 = vsel %vm1887, %v1888, %v1886
    %v1890 = vrsqrt.pop %v1696
    %v1891 = vmul.f32 %v1696, %v1890
    %vm1892 = vcmp.eq.f32.partialorder %v1696, inf
    %v1893 = vsel %vm1892, %v1696, %v1891
    %vm1894 = vcmp.eq.f32.partialorder %v1696, 0.0
    %v1895 = vand.u32 %v1696, 2147483648
    %v1896 = vsel %vm1894, %v1895, %v1893
    %v1897 = vrsqrt.pop %v1697
    %v1898 = vmul.f32 %v1697, %v1897
    %vm1899 = vcmp.eq.f32.partialorder %v1697, inf
    %v1900 = vsel %vm1899, %v1697, %v1898
    %vm1901 = vcmp.eq.f32.partialorder %v1697, 0.0
    %v1902 = vand.u32 %v1697, 2147483648
    %v1903 = vsel %vm1901, %v1902, %v1900
    %v1904 = vrsqrt.pop %v1698
    %v1905 = vmul.f32 %v1698, %v1904
    %vm1906 = vcmp.eq.f32.partialorder %v1698, inf
    %v1907 = vsel %vm1906, %v1698, %v1905
    %vm1908 = vcmp.eq.f32.partialorder %v1698, 0.0
    %v1909 = vand.u32 %v1698, 2147483648
    %v1910 = vsel %vm1908, %v1909, %v1907
    %v1911 = vrsqrt.pop %v1699
    %v1912 = vmul.f32 %v1699, %v1911
    %vm1913 = vcmp.eq.f32.partialorder %v1699, inf
    %v1914 = vsel %vm1913, %v1699, %v1912
    %vm1915 = vcmp.eq.f32.partialorder %v1699, 0.0
    %v1916 = vand.u32 %v1699, 2147483648
    %v1917 = vsel %vm1915, %v1916, %v1914
    %v1918 = vrsqrt.pop %v1700
    %v1919 = vmul.f32 %v1700, %v1918
    %vm1920 = vcmp.eq.f32.partialorder %v1700, inf
    %v1921 = vsel %vm1920, %v1700, %v1919
    %vm1922 = vcmp.eq.f32.partialorder %v1700, 0.0
    %v1923 = vand.u32 %v1700, 2147483648
    %v1924 = vsel %vm1922, %v1923, %v1921
    %v1925 = vrsqrt.pop %v1701
    %v1926 = vmul.f32 %v1701, %v1925
    %vm1927 = vcmp.eq.f32.partialorder %v1701, inf
    %v1928 = vsel %vm1927, %v1701, %v1926
    %vm1929 = vcmp.eq.f32.partialorder %v1701, 0.0
    %v1930 = vand.u32 %v1701, 2147483648
    %v1931 = vsel %vm1929, %v1930, %v1928
    %v1932 = vrsqrt.pop %v1702
    %v1933 = vmul.f32 %v1702, %v1932
    %vm1934 = vcmp.eq.f32.partialorder %v1702, inf
    %v1935 = vsel %vm1934, %v1702, %v1933
    %vm1936 = vcmp.eq.f32.partialorder %v1702, 0.0
    %v1937 = vand.u32 %v1702, 2147483648
    %v1938 = vsel %vm1936, %v1937, %v1935
    %v1939 = vrsqrt.pop %v1703
    %v1940 = vmul.f32 %v1703, %v1939
    %vm1941 = vcmp.eq.f32.partialorder %v1703, inf
    %v1942 = vsel %vm1941, %v1703, %v1940
    %vm1943 = vcmp.eq.f32.partialorder %v1703, 0.0
    %v1944 = vand.u32 %v1703, 2147483648
    %v1945 = vsel %vm1943, %v1944, %v1942
    %v1946 = vrsqrt.pop %v1704
    %v1947 = vmul.f32 %v1704, %v1946
    %vm1948 = vcmp.eq.f32.partialorder %v1704, inf
    %v1949 = vsel %vm1948, %v1704, %v1947
    %vm1950 = vcmp.eq.f32.partialorder %v1704, 0.0
    %v1951 = vand.u32 %v1704, 2147483648
    %v1952 = vsel %vm1950, %v1951, %v1949
    %v1953 = vrsqrt.pop %v1705
    %v1954 = vmul.f32 %v1705, %v1953
    %vm1955 = vcmp.eq.f32.partialorder %v1705, inf
    %v1956 = vsel %vm1955, %v1705, %v1954
    %vm1957 = vcmp.eq.f32.partialorder %v1705, 0.0
    %v1958 = vand.u32 %v1705, 2147483648
    %v1959 = vsel %vm1957, %v1958, %v1956
    %v1960 = vrsqrt.pop %v1706
    %v1961 = vmul.f32 %v1706, %v1960
    %vm1962 = vcmp.eq.f32.partialorder %v1706, inf
    %v1963 = vsel %vm1962, %v1706, %v1961
    %vm1964 = vcmp.eq.f32.partialorder %v1706, 0.0
    %v1965 = vand.u32 %v1706, 2147483648
    %v1966 = vsel %vm1964, %v1965, %v1963
    %v1967 = vrsqrt.pop %v1707
    %v1968 = vmul.f32 %v1707, %v1967
    %vm1969 = vcmp.eq.f32.partialorder %v1707, inf
    %v1970 = vsel %vm1969, %v1707, %v1968
    %vm1971 = vcmp.eq.f32.partialorder %v1707, 0.0
    %v1972 = vand.u32 %v1707, 2147483648
    %v1973 = vsel %vm1971, %v1972, %v1970
    %v1974 = vrsqrt.pop %v1708
    %v1975 = vmul.f32 %v1708, %v1974
    %vm1976 = vcmp.eq.f32.partialorder %v1708, inf
    %v1977 = vsel %vm1976, %v1708, %v1975
    %vm1978 = vcmp.eq.f32.partialorder %v1708, 0.0
    %v1979 = vand.u32 %v1708, 2147483648
    %v1980 = vsel %vm1978, %v1979, %v1977
    %v1981 = vrsqrt.pop %v1709
    %v1982 = vmul.f32 %v1709, %v1981
    %vm1983 = vcmp.eq.f32.partialorder %v1709, inf
    %v1984 = vsel %vm1983, %v1709, %v1982
    %vm1985 = vcmp.eq.f32.partialorder %v1709, 0.0
    %v1986 = vand.u32 %v1709, 2147483648
    %v1987 = vsel %vm1985, %v1986, %v1984
    %v1988 = vrsqrt.pop %v1710
    %v1989 = vmul.f32 %v1710, %v1988
    %vm1990 = vcmp.eq.f32.partialorder %v1710, inf
    %v1991 = vsel %vm1990, %v1710, %v1989
    %vm1992 = vcmp.eq.f32.partialorder %v1710, 0.0
    %v1993 = vand.u32 %v1710, 2147483648
    %v1994 = vsel %vm1992, %v1993, %v1991
    %v1995 = vrsqrt.pop %v1711
    %v1996 = vmul.f32 %v1711, %v1995
    %vm1997 = vcmp.eq.f32.partialorder %v1711, inf
    %v1998 = vsel %vm1997, %v1711, %v1996
    %vm1999 = vcmp.eq.f32.partialorder %v1711, 0.0
    %v2000 = vand.u32 %v1711, 2147483648
    %v2001 = vsel %vm1999, %v2000, %v1998
    %v2002 = vrsqrt.pop %v1712
    %v2003 = vmul.f32 %v1712, %v2002
    %vm2004 = vcmp.eq.f32.partialorder %v1712, inf
    %v2005 = vsel %vm2004, %v1712, %v2003
    %vm2006 = vcmp.eq.f32.partialorder %v1712, 0.0
    %v2007 = vand.u32 %v1712, 2147483648
    %v2008 = vsel %vm2006, %v2007, %v2005
    %v2009 = vrsqrt.pop %v1713
    %v2010 = vmul.f32 %v1713, %v2009
    %vm2011 = vcmp.eq.f32.partialorder %v1713, inf
    %v2012 = vsel %vm2011, %v1713, %v2010
    %vm2013 = vcmp.eq.f32.partialorder %v1713, 0.0
    %v2014 = vand.u32 %v1713, 2147483648
    %v2015 = vsel %vm2013, %v2014, %v2012
    %v2016 = vrsqrt.pop %v1714
    %v2017 = vmul.f32 %v1714, %v2016
    %vm2018 = vcmp.eq.f32.partialorder %v1714, inf
    %v2019 = vsel %vm2018, %v1714, %v2017
    %vm2020 = vcmp.eq.f32.partialorder %v1714, 0.0
    %v2021 = vand.u32 %v1714, 2147483648
    %v2022 = vsel %vm2020, %v2021, %v2019
    %v2023 = vrsqrt.pop %v1715
    %v2024 = vmul.f32 %v1715, %v2023
    %vm2025 = vcmp.eq.f32.partialorder %v1715, inf
    %v2026 = vsel %vm2025, %v1715, %v2024
    %vm2027 = vcmp.eq.f32.partialorder %v1715, 0.0
    %v2028 = vand.u32 %v1715, 2147483648
    %v2029 = vsel %vm2027, %v2028, %v2026
    %v2030 = vrsqrt.pop %v1716
    %v2031 = vmul.f32 %v1716, %v2030
    %vm2032 = vcmp.eq.f32.partialorder %v1716, inf
    %v2033 = vsel %vm2032, %v1716, %v2031
    %vm2034 = vcmp.eq.f32.partialorder %v1716, 0.0
    %v2035 = vand.u32 %v1716, 2147483648
    %v2036 = vsel %vm2034, %v2035, %v2033
    %v2037 = vrsqrt.pop %v1717
    %v2038 = vmul.f32 %v1717, %v2037
    %vm2039 = vcmp.eq.f32.partialorder %v1717, inf
    %v2040 = vsel %vm2039, %v1717, %v2038
    %vm2041 = vcmp.eq.f32.partialorder %v1717, 0.0
    %v2042 = vand.u32 %v1717, 2147483648
    %v2043 = vsel %vm2041, %v2042, %v2040
    %v2044 = vrsqrt.pop %v1718
    %v2045 = vmul.f32 %v1718, %v2044
    %vm2046 = vcmp.eq.f32.partialorder %v1718, inf
    %v2047 = vsel %vm2046, %v1718, %v2045
    %vm2048 = vcmp.eq.f32.partialorder %v1718, 0.0
    %v2049 = vand.u32 %v1718, 2147483648
    %v2050 = vsel %vm2048, %v2049, %v2047
    %v2051 = vrsqrt.pop %v1719
    %v2052 = vmul.f32 %v1719, %v2051
    %vm2053 = vcmp.eq.f32.partialorder %v1719, inf
    %v2054 = vsel %vm2053, %v1719, %v2052
    %vm2055 = vcmp.eq.f32.partialorder %v1719, 0.0
    %v2056 = vand.u32 %v1719, 2147483648
    %v2057 = vsel %vm2055, %v2056, %v2054
    %v2058 = vrsqrt.pop %v1720
    %v2059 = vmul.f32 %v1720, %v2058
    %vm2060 = vcmp.eq.f32.partialorder %v1720, inf
    %v2061 = vsel %vm2060, %v1720, %v2059
    %vm2062 = vcmp.eq.f32.partialorder %v1720, 0.0
    %v2063 = vand.u32 %v1720, 2147483648
    %v2064 = vsel %vm2062, %v2063, %v2061
    %v2065 = vrsqrt.pop %v1721
    %v2066 = vmul.f32 %v1721, %v2065
    %vm2067 = vcmp.eq.f32.partialorder %v1721, inf
    %v2068 = vsel %vm2067, %v1721, %v2066
    %vm2069 = vcmp.eq.f32.partialorder %v1721, 0.0
    %v2070 = vand.u32 %v1721, 2147483648
    %v2071 = vsel %vm2069, %v2070, %v2068
    %v2072 = vrsqrt.pop %v1722
    %v2073 = vmul.f32 %v1722, %v2072
    %vm2074 = vcmp.eq.f32.partialorder %v1722, inf
    %v2075 = vsel %vm2074, %v1722, %v2073
    %vm2076 = vcmp.eq.f32.partialorder %v1722, 0.0
    %v2077 = vand.u32 %v1722, 2147483648
    %v2078 = vsel %vm2076, %v2077, %v2075
    %v2079 = vrsqrt.pop %v1723
    %v2080 = vmul.f32 %v1723, %v2079
    %vm2081 = vcmp.eq.f32.partialorder %v1723, inf
    %v2082 = vsel %vm2081, %v1723, %v2080
    %vm2083 = vcmp.eq.f32.partialorder %v1723, 0.0
    %v2084 = vand.u32 %v1723, 2147483648
    %v2085 = vsel %vm2083, %v2084, %v2082
    %v2086 = vrsqrt.pop %v1724
    %v2087 = vmul.f32 %v1724, %v2086
    %vm2088 = vcmp.eq.f32.partialorder %v1724, inf
    %v2089 = vsel %vm2088, %v1724, %v2087
    %vm2090 = vcmp.eq.f32.partialorder %v1724, 0.0
    %v2091 = vand.u32 %v1724, 2147483648
    %v2092 = vsel %vm2090, %v2091, %v2089
    %v2093 = vrsqrt.pop %v1725
    %v2094 = vmul.f32 %v1725, %v2093
    %vm2095 = vcmp.eq.f32.partialorder %v1725, inf
    %v2096 = vsel %vm2095, %v1725, %v2094
    %vm2097 = vcmp.eq.f32.partialorder %v1725, 0.0
    %v2098 = vand.u32 %v1725, 2147483648
    %v2099 = vsel %vm2097, %v2098, %v2096
    %v2100 = vrsqrt.pop %v1726
    %v2101 = vmul.f32 %v1726, %v2100
    %vm2102 = vcmp.eq.f32.partialorder %v1726, inf
    %v2103 = vsel %vm2102, %v1726, %v2101
    %vm2104 = vcmp.eq.f32.partialorder %v1726, 0.0
    %v2105 = vand.u32 %v1726, 2147483648
    %v2106 = vsel %vm2104, %v2105, %v2103
    %v2107 = vrsqrt.pop %v1727
    %v2108 = vmul.f32 %v1727, %v2107
    %vm2109 = vcmp.eq.f32.partialorder %v1727, inf
    %v2110 = vsel %vm2109, %v1727, %v2108
    %vm2111 = vcmp.eq.f32.partialorder %v1727, 0.0
    %v2112 = vand.u32 %v1727, 2147483648
    %v2113 = vsel %vm2111, %v2112, %v2110
    %v2114 = vrsqrt.pop %v1728
    %v2115 = vmul.f32 %v1728, %v2114
    %vm2116 = vcmp.eq.f32.partialorder %v1728, inf
    %v2117 = vsel %vm2116, %v1728, %v2115
    %vm2118 = vcmp.eq.f32.partialorder %v1728, 0.0
    %v2119 = vand.u32 %v1728, 2147483648
    %v2120 = vsel %vm2118, %v2119, %v2117
    %v2121 = vrsqrt.pop %v1729
    %v2122 = vmul.f32 %v1729, %v2121
    %vm2123 = vcmp.eq.f32.partialorder %v1729, inf
    %v2124 = vsel %vm2123, %v1729, %v2122
    %vm2125 = vcmp.eq.f32.partialorder %v1729, 0.0
    %v2126 = vand.u32 %v1729, 2147483648
    %v2127 = vsel %vm2125, %v2126, %v2124
    %v2128 = vrsqrt.pop %v1730
    %v2129 = vmul.f32 %v1730, %v2128
    %vm2130 = vcmp.eq.f32.partialorder %v1730, inf
    %v2131 = vsel %vm2130, %v1730, %v2129
    %vm2132 = vcmp.eq.f32.partialorder %v1730, 0.0
    %v2133 = vand.u32 %v1730, 2147483648
    %v2134 = vsel %vm2132, %v2133, %v2131
    %v2135 = vrsqrt.pop %v1731
    %v2136 = vmul.f32 %v1731, %v2135
    %vm2137 = vcmp.eq.f32.partialorder %v1731, inf
    %v2138 = vsel %vm2137, %v1731, %v2136
    %vm2139 = vcmp.eq.f32.partialorder %v1731, 0.0
    %v2140 = vand.u32 %v1731, 2147483648
    %v2141 = vsel %vm2139, %v2140, %v2138
    %v2142 = vrsqrt.pop %v1732
    %v2143 = vmul.f32 %v1732, %v2142
    %vm2144 = vcmp.eq.f32.partialorder %v1732, inf
    %v2145 = vsel %vm2144, %v1732, %v2143
    %vm2146 = vcmp.eq.f32.partialorder %v1732, 0.0
    %v2147 = vand.u32 %v1732, 2147483648
    %v2148 = vsel %vm2146, %v2147, %v2145
    %v2149 = vrsqrt.pop %v1733
    %v2150 = vmul.f32 %v1733, %v2149
    %vm2151 = vcmp.eq.f32.partialorder %v1733, inf
    %v2152 = vsel %vm2151, %v1733, %v2150
    %vm2153 = vcmp.eq.f32.partialorder %v1733, 0.0
    %v2154 = vand.u32 %v1733, 2147483648
    %v2155 = vsel %vm2153, %v2154, %v2152
    %v2156 = vrsqrt.pop %v1734
    %v2157 = vmul.f32 %v1734, %v2156
    %vm2158 = vcmp.eq.f32.partialorder %v1734, inf
    %v2159 = vsel %vm2158, %v1734, %v2157
    %vm2160 = vcmp.eq.f32.partialorder %v1734, 0.0
    %v2161 = vand.u32 %v1734, 2147483648
    %v2162 = vsel %vm2160, %v2161, %v2159
    %v2163 = vrsqrt.pop %v1735
    %v2164 = vmul.f32 %v1735, %v2163
    %vm2165 = vcmp.eq.f32.partialorder %v1735, inf
    %v2166 = vsel %vm2165, %v1735, %v2164
    %vm2167 = vcmp.eq.f32.partialorder %v1735, 0.0
    %v2168 = vand.u32 %v1735, 2147483648
    %v2169 = vsel %vm2167, %v2168, %v2166
    %v2170 = vrsqrt.pop %v1736
    %v2171 = vmul.f32 %v1736, %v2170
    %vm2172 = vcmp.eq.f32.partialorder %v1736, inf
    %v2173 = vsel %vm2172, %v1736, %v2171
    %vm2174 = vcmp.eq.f32.partialorder %v1736, 0.0
    %v2175 = vand.u32 %v1736, 2147483648
    %v2176 = vsel %vm2174, %v2175, %v2173
    %v2177 = vrsqrt.pop %v1737
    %v2178 = vmul.f32 %v1737, %v2177
    %vm2179 = vcmp.eq.f32.partialorder %v1737, inf
    %v2180 = vsel %vm2179, %v1737, %v2178
    %vm2181 = vcmp.eq.f32.partialorder %v1737, 0.0
    %v2182 = vand.u32 %v1737, 2147483648
    %v2183 = vsel %vm2181, %v2182, %v2180
    %v2184 = vrsqrt.pop %v1738
    %v2185 = vmul.f32 %v1738, %v2184
    %vm2186 = vcmp.eq.f32.partialorder %v1738, inf
    %v2187 = vsel %vm2186, %v1738, %v2185
    %vm2188 = vcmp.eq.f32.partialorder %v1738, 0.0
    %v2189 = vand.u32 %v1738, 2147483648
    %v2190 = vsel %vm2188, %v2189, %v2187
    %v2191 = vrsqrt.pop %v1739
    %v2192 = vmul.f32 %v1739, %v2191
    %vm2193 = vcmp.eq.f32.partialorder %v1739, inf
    %v2194 = vsel %vm2193, %v1739, %v2192
    %vm2195 = vcmp.eq.f32.partialorder %v1739, 0.0
    %v2196 = vand.u32 %v1739, 2147483648
    %v2197 = vsel %vm2195, %v2196, %v2194
    %v2198 = vrsqrt.pop %v1740
    %v2199 = vmul.f32 %v1740, %v2198
    %vm2200 = vcmp.eq.f32.partialorder %v1740, inf
    %v2201 = vsel %vm2200, %v1740, %v2199
    %vm2202 = vcmp.eq.f32.partialorder %v1740, 0.0
    %v2203 = vand.u32 %v1740, 2147483648
    %v2204 = vsel %vm2202, %v2203, %v2201
    %v2205 = vrsqrt.pop %v1741
    %v2206 = vmul.f32 %v1741, %v2205
    %vm2207 = vcmp.eq.f32.partialorder %v1741, inf
    %v2208 = vsel %vm2207, %v1741, %v2206
    %vm2209 = vcmp.eq.f32.partialorder %v1741, 0.0
    %v2210 = vand.u32 %v1741, 2147483648
    %v2211 = vsel %vm2209, %v2210, %v2208
    %v2212 = vrsqrt.pop %v1742
    %v2213 = vmul.f32 %v1742, %v2212
    %vm2214 = vcmp.eq.f32.partialorder %v1742, inf
    %v2215 = vsel %vm2214, %v1742, %v2213
    %vm2216 = vcmp.eq.f32.partialorder %v1742, 0.0
    %v2217 = vand.u32 %v1742, 2147483648
    %v2218 = vsel %vm2216, %v2217, %v2215
    %v2219 = vadd.f32 %v1749, %v1777
    %v2220 = vadd.f32 %v1756, %v1784
    %v2221 = vadd.f32 %v1763, %v1791
    %v2222 = vadd.f32 %v1770, %v1798
    %v2223 = vadd.f32 %v2219, %v1805
    %v2224 = vadd.f32 %v2220, %v1812
    %v2225 = vadd.f32 %v2221, %v1819
    %v2226 = vadd.f32 %v2222, %v1826
    %v2227 = vadd.f32 %v2223, %v1833
    %v2228 = vadd.f32 %v2224, %v1840
    %v2229 = vadd.f32 %v2225, %v1847
    %v2230 = vadd.f32 %v2226, %v1854
    %v2231 = vadd.f32 %v2227, %v1861
    %v2232 = vadd.f32 %v2228, %v1868
    %v2233 = vadd.f32 %v2229, %v1875
    %v2234 = vadd.f32 %v2230, %v1882
    %v2235 = vadd.f32 %v2231, %v1889
    %v2236 = vadd.f32 %v2232, %v1896
    %v2237 = vadd.f32 %v2233, %v1903
    %v2238 = vadd.f32 %v2234, %v1910
    %v2239 = vadd.f32 %v2235, %v1917
    %v2240 = vadd.f32 %v2236, %v1924
    %v2241 = vadd.f32 %v2237, %v1931
    %v2242 = vadd.f32 %v2238, %v1938
    %v2243 = vadd.f32 %v2239, %v1945
    %v2244 = vadd.f32 %v2240, %v1952
    %v2245 = vadd.f32 %v2241, %v1959
    %v2246 = vadd.f32 %v2242, %v1966
    %v2247 = vadd.f32 %v2243, %v1973
    %v2248 = vadd.f32 %v2244, %v1980
    %v2249 = vadd.f32 %v2245, %v1987
    %v2250 = vadd.f32 %v2246, %v1994
    %v2251 = vadd.f32 %v2247, %v2001
    %v2252 = vadd.f32 %v2248, %v2008
    %v2253 = vadd.f32 %v2249, %v2015
    %v2254 = vadd.f32 %v2250, %v2022
    %v2255 = vadd.f32 %v2251, %v2029
    %v2256 = vadd.f32 %v2252, %v2036
    %v2257 = vadd.f32 %v2253, %v2043
    %v2258 = vadd.f32 %v2254, %v2050
    %v2259 = vadd.f32 %v2255, %v2057
    %v2260 = vadd.f32 %v2256, %v2064
    %v2261 = vadd.f32 %v2257, %v2071
    %v2262 = vadd.f32 %v2258, %v2078
    %v2263 = vadd.f32 %v2259, %v2085
    %v2264 = vadd.f32 %v2260, %v2092
    %v2265 = vadd.f32 %v2261, %v2099
    %v2266 = vadd.f32 %v2262, %v2106
    %v2267 = vadd.f32 %v2263, %v2113
    %v2268 = vadd.f32 %v2264, %v2120
    %v2269 = vadd.f32 %v2265, %v2127
    %v2270 = vadd.f32 %v2266, %v2134
    %v2271 = vadd.f32 %v2267, %v2141
    %v2272 = vadd.f32 %v2268, %v2148
    %v2273 = vadd.f32 %v2269, %v2155
    %v2274 = vadd.f32 %v2270, %v2162
    %v2275 = vadd.f32 %v2271, %v2169
    %v2276 = vadd.f32 %v2272, %v2176
    %v2277 = vadd.f32 %v2273, %v2183
    %v2278 = vadd.f32 %v2274, %v2190
    %v2279 = vadd.f32 %v2275, %v2197
    %v2280 = vadd.f32 %v2276, %v2204
    %v2281 = vadd.f32 %v2277, %v2211
    %v2282 = vadd.f32 %v2278, %v2218
    %v2283 = vmul.f32 %v2279, 0.05882353
    %v2284 = vmul.f32 %v2280, 0.05882353
    %v2285 = vmul.f32 %v2281, 0.05882353
    %v2286 = vmul.f32 %v2282, 0.05882353
    %v2287 = vld [vmem:[%s5] sm:$0x1]
    %v2289 = vlaneseq
    %v2290 = vshrl.u32 %v2289, 7
    %v2291 = vsub.s32 0, %v2290
    %v2292 = vrot.slane %v2287, %v2291
    %v2294 = vmul.f32 %v2283, %v2292
    %v2295 = vmul.f32 %v2284, %v2292
    %v2296 = vmul.f32 %v2285, %v2292
    %v2297 = vmul.f32 %v2286, %v2292
    %v2298 = vsub.f32 %v1749, %v2283
    %v2299 = vsub.f32 %v1756, %v2284
    %v2300 = vsub.f32 %v1763, %v2285
    %v2301 = vsub.f32 %v1770, %v2286
    %v2302 = vmul.f32 %v2298, %v2298
    %v2303 = vmul.f32 %v2299, %v2299
    %v2304 = vmul.f32 %v2300, %v2300
    %v2305 = vmul.f32 %v2301, %v2301
    %v2306 = vadd.f32 %v2302, 0.0
    %v2307 = vadd.f32 %v2303, 0.0
    %v2308 = vadd.f32 %v2304, 0.0
    %v2309 = vadd.f32 %v2305, 0.0
    %v2310 = vsub.f32 %v1749, %v2294
    %v2311 = vsub.f32 %v1756, %v2295
    %v2312 = vsub.f32 %v1763, %v2296
    %v2313 = vsub.f32 %v1770, %v2297
    %v2314 = vmul.f32 %v2310, %v2310
    %v2315 = vmul.f32 %v2311, %v2311
    %v2316 = vmul.f32 %v2312, %v2312
    %v2317 = vmul.f32 %v2313, %v2313
    %v2318 = vmul.f32 %v2314, %v2310
    %v2319 = vmul.f32 %v2315, %v2311
    %v2320 = vmul.f32 %v2316, %v2312
    %v2321 = vmul.f32 %v2317, %v2313
    %v2322 = vadd.f32 %v2318, 0.0
    %v2323 = vadd.f32 %v2319, 0.0
    %v2324 = vadd.f32 %v2320, 0.0
    %v2325 = vadd.f32 %v2321, 0.0
    %v2326 = vmul.f32 %v2314, %v2314
    %v2327 = vmul.f32 %v2315, %v2315
    %v2328 = vmul.f32 %v2316, %v2316
    %v2329 = vmul.f32 %v2317, %v2317
    %v2330 = vadd.f32 %v2326, 0.0
    %v2331 = vadd.f32 %v2327, 0.0
    %v2332 = vadd.f32 %v2328, 0.0
    %v2333 = vadd.f32 %v2329, 0.0
    %v2334 = vsub.f32 %v1777, %v2283
    %v2335 = vsub.f32 %v1784, %v2284
    %v2336 = vsub.f32 %v1791, %v2285
    %v2337 = vsub.f32 %v1798, %v2286
    %v2338 = vmul.f32 %v2334, %v2334
    %v2339 = vmul.f32 %v2335, %v2335
    %v2340 = vmul.f32 %v2336, %v2336
    %v2341 = vmul.f32 %v2337, %v2337
    %v2342 = vadd.f32 %v2306, %v2338
    %v2343 = vadd.f32 %v2307, %v2339
    %v2344 = vadd.f32 %v2308, %v2340
    %v2345 = vadd.f32 %v2309, %v2341
    %v2346 = vsub.f32 %v1777, %v2294
    %v2347 = vsub.f32 %v1784, %v2295
    %v2348 = vsub.f32 %v1791, %v2296
    %v2349 = vsub.f32 %v1798, %v2297
    %v2350 = vmul.f32 %v2346, %v2346
    %v2351 = vmul.f32 %v2347, %v2347
    %v2352 = vmul.f32 %v2348, %v2348
    %v2353 = vmul.f32 %v2349, %v2349
    %v2354 = vmul.f32 %v2350, %v2346
    %v2355 = vmul.f32 %v2351, %v2347
    %v2356 = vmul.f32 %v2352, %v2348
    %v2357 = vmul.f32 %v2353, %v2349
    %v2358 = vadd.f32 %v2322, %v2354
    %v2359 = vadd.f32 %v2323, %v2355
    %v2360 = vadd.f32 %v2324, %v2356
    %v2361 = vadd.f32 %v2325, %v2357
    %v2362 = vmul.f32 %v2350, %v2350
    %v2363 = vmul.f32 %v2351, %v2351
    %v2364 = vmul.f32 %v2352, %v2352
    %v2365 = vmul.f32 %v2353, %v2353
    %v2366 = vadd.f32 %v2330, %v2362
    %v2367 = vadd.f32 %v2331, %v2363
    %v2368 = vadd.f32 %v2332, %v2364
    %v2369 = vadd.f32 %v2333, %v2365
    %v2370 = vsub.f32 %v1805, %v2283
    %v2371 = vsub.f32 %v1812, %v2284
    %v2372 = vsub.f32 %v1819, %v2285
    %v2373 = vsub.f32 %v1826, %v2286
    %v2374 = vmul.f32 %v2370, %v2370
    %v2375 = vmul.f32 %v2371, %v2371
    %v2376 = vmul.f32 %v2372, %v2372
    %v2377 = vmul.f32 %v2373, %v2373
    %v2378 = vadd.f32 %v2342, %v2374
    %v2379 = vadd.f32 %v2343, %v2375
    %v2380 = vadd.f32 %v2344, %v2376
    %v2381 = vadd.f32 %v2345, %v2377
    %v2382 = vsub.f32 %v1805, %v2294
    %v2383 = vsub.f32 %v1812, %v2295
    %v2384 = vsub.f32 %v1819, %v2296
    %v2385 = vsub.f32 %v1826, %v2297
    %v2386 = vmul.f32 %v2382, %v2382
    %v2387 = vmul.f32 %v2383, %v2383
    %v2388 = vmul.f32 %v2384, %v2384
    %v2389 = vmul.f32 %v2385, %v2385
    %v2390 = vmul.f32 %v2386, %v2382
    %v2391 = vmul.f32 %v2387, %v2383
    %v2392 = vmul.f32 %v2388, %v2384
    %v2393 = vmul.f32 %v2389, %v2385
    %v2394 = vadd.f32 %v2358, %v2390
    %v2395 = vadd.f32 %v2359, %v2391
    %v2396 = vadd.f32 %v2360, %v2392
    %v2397 = vadd.f32 %v2361, %v2393
    %v2398 = vmul.f32 %v2386, %v2386
    %v2399 = vmul.f32 %v2387, %v2387
    %v2400 = vmul.f32 %v2388, %v2388
    %v2401 = vmul.f32 %v2389, %v2389
    %v2402 = vadd.f32 %v2366, %v2398
    %v2403 = vadd.f32 %v2367, %v2399
    %v2404 = vadd.f32 %v2368, %v2400
    %v2405 = vadd.f32 %v2369, %v2401
    %v2406 = vsub.f32 %v1833, %v2283
    %v2407 = vsub.f32 %v1840, %v2284
    %v2408 = vsub.f32 %v1847, %v2285
    %v2409 = vsub.f32 %v1854, %v2286
    %v2410 = vmul.f32 %v2406, %v2406
    %v2411 = vmul.f32 %v2407, %v2407
    %v2412 = vmul.f32 %v2408, %v2408
    %v2413 = vmul.f32 %v2409, %v2409
    %v2414 = vadd.f32 %v2378, %v2410
    %v2415 = vadd.f32 %v2379, %v2411
    %v2416 = vadd.f32 %v2380, %v2412
    %v2417 = vadd.f32 %v2381, %v2413
    %v2418 = vsub.f32 %v1833, %v2294
    %v2419 = vsub.f32 %v1840, %v2295
    %v2420 = vsub.f32 %v1847, %v2296
    %v2421 = vsub.f32 %v1854, %v2297
    %v2422 = vmul.f32 %v2418, %v2418
    %v2423 = vmul.f32 %v2419, %v2419
    %v2424 = vmul.f32 %v2420, %v2420
    %v2425 = vmul.f32 %v2421, %v2421
    %v2426 = vmul.f32 %v2422, %v2418
    %v2427 = vmul.f32 %v2423, %v2419
    %v2428 = vmul.f32 %v2424, %v2420
    %v2429 = vmul.f32 %v2425, %v2421
    %v2430 = vadd.f32 %v2394, %v2426
    %v2431 = vadd.f32 %v2395, %v2427
    %v2432 = vadd.f32 %v2396, %v2428
    %v2433 = vadd.f32 %v2397, %v2429
    %v2434 = vmul.f32 %v2422, %v2422
    %v2435 = vmul.f32 %v2423, %v2423
    %v2436 = vmul.f32 %v2424, %v2424
    %v2437 = vmul.f32 %v2425, %v2425
    %v2438 = vadd.f32 %v2402, %v2434
    %v2439 = vadd.f32 %v2403, %v2435
    %v2440 = vadd.f32 %v2404, %v2436
    %v2441 = vadd.f32 %v2405, %v2437
    %v2442 = vsub.f32 %v1861, %v2283
    %v2443 = vsub.f32 %v1868, %v2284
    %v2444 = vsub.f32 %v1875, %v2285
    %v2445 = vsub.f32 %v1882, %v2286
    %v2446 = vmul.f32 %v2442, %v2442
    %v2447 = vmul.f32 %v2443, %v2443
    %v2448 = vmul.f32 %v2444, %v2444
    %v2449 = vmul.f32 %v2445, %v2445
    %v2450 = vadd.f32 %v2414, %v2446
    %v2451 = vadd.f32 %v2415, %v2447
    %v2452 = vadd.f32 %v2416, %v2448
    %v2453 = vadd.f32 %v2417, %v2449
    %v2454 = vsub.f32 %v1861, %v2294
    %v2455 = vsub.f32 %v1868, %v2295
    %v2456 = vsub.f32 %v1875, %v2296
    %v2457 = vsub.f32 %v1882, %v2297
    %v2458 = vmul.f32 %v2454, %v2454
    %v2459 = vmul.f32 %v2455, %v2455
    %v2460 = vmul.f32 %v2456, %v2456
    %v2461 = vmul.f32 %v2457, %v2457
    %v2462 = vmul.f32 %v2458, %v2454
    %v2463 = vmul.f32 %v2459, %v2455
    %v2464 = vmul.f32 %v2460, %v2456
    %v2465 = vmul.f32 %v2461, %v2457
    %v2466 = vadd.f32 %v2430, %v2462
    %v2467 = vadd.f32 %v2431, %v2463
    %v2468 = vadd.f32 %v2432, %v2464
    %v2469 = vadd.f32 %v2433, %v2465
    %v2470 = vmul.f32 %v2458, %v2458
    %v2471 = vmul.f32 %v2459, %v2459
    %v2472 = vmul.f32 %v2460, %v2460
    %v2473 = vmul.f32 %v2461, %v2461
    %v2474 = vadd.f32 %v2438, %v2470
    %v2475 = vadd.f32 %v2439, %v2471
    %v2476 = vadd.f32 %v2440, %v2472
    %v2477 = vadd.f32 %v2441, %v2473
    %v2478 = vsub.f32 %v1889, %v2283
    %v2479 = vsub.f32 %v1896, %v2284
    %v2480 = vsub.f32 %v1903, %v2285
    %v2481 = vsub.f32 %v1910, %v2286
    %v2482 = vmul.f32 %v2478, %v2478
    %v2483 = vmul.f32 %v2479, %v2479
    %v2484 = vmul.f32 %v2480, %v2480
    %v2485 = vmul.f32 %v2481, %v2481
    %v2486 = vadd.f32 %v2450, %v2482
    %v2487 = vadd.f32 %v2451, %v2483
    %v2488 = vadd.f32 %v2452, %v2484
    %v2489 = vadd.f32 %v2453, %v2485
    %v2490 = vsub.f32 %v1889, %v2294
    %v2491 = vsub.f32 %v1896, %v2295
    %v2492 = vsub.f32 %v1903, %v2296
    %v2493 = vsub.f32 %v1910, %v2297
    %v2494 = vmul.f32 %v2490, %v2490
    %v2495 = vmul.f32 %v2491, %v2491
    %v2496 = vmul.f32 %v2492, %v2492
    %v2497 = vmul.f32 %v2493, %v2493
    %v2498 = vmul.f32 %v2494, %v2490
    %v2499 = vmul.f32 %v2495, %v2491
    %v2500 = vmul.f32 %v2496, %v2492
    %v2501 = vmul.f32 %v2497, %v2493
    %v2502 = vadd.f32 %v2466, %v2498
    %v2503 = vadd.f32 %v2467, %v2499
    %v2504 = vadd.f32 %v2468, %v2500
    %v2505 = vadd.f32 %v2469, %v2501
    %v2506 = vmul.f32 %v2494, %v2494
    %v2507 = vmul.f32 %v2495, %v2495
    %v2508 = vmul.f32 %v2496, %v2496
    %v2509 = vmul.f32 %v2497, %v2497
    %v2510 = vadd.f32 %v2474, %v2506
    %v2511 = vadd.f32 %v2475, %v2507
    %v2512 = vadd.f32 %v2476, %v2508
    %v2513 = vadd.f32 %v2477, %v2509
    %v2514 = vsub.f32 %v1917, %v2283
    %v2515 = vsub.f32 %v1924, %v2284
    %v2516 = vsub.f32 %v1931, %v2285
    %v2517 = vsub.f32 %v1938, %v2286
    %v2518 = vmul.f32 %v2514, %v2514
    %v2519 = vmul.f32 %v2515, %v2515
    %v2520 = vmul.f32 %v2516, %v2516
    %v2521 = vmul.f32 %v2517, %v2517
    %v2522 = vadd.f32 %v2486, %v2518
    %v2523 = vadd.f32 %v2487, %v2519
    %v2524 = vadd.f32 %v2488, %v2520
    %v2525 = vadd.f32 %v2489, %v2521
    %v2526 = vsub.f32 %v1917, %v2294
    %v2527 = vsub.f32 %v1924, %v2295
    %v2528 = vsub.f32 %v1931, %v2296
    %v2529 = vsub.f32 %v1938, %v2297
    %v2530 = vmul.f32 %v2526, %v2526
    %v2531 = vmul.f32 %v2527, %v2527
    %v2532 = vmul.f32 %v2528, %v2528
    %v2533 = vmul.f32 %v2529, %v2529
    %v2534 = vmul.f32 %v2530, %v2526
    %v2535 = vmul.f32 %v2531, %v2527
    %v2536 = vmul.f32 %v2532, %v2528
    %v2537 = vmul.f32 %v2533, %v2529
    %v2538 = vadd.f32 %v2502, %v2534
    %v2539 = vadd.f32 %v2503, %v2535
    %v2540 = vadd.f32 %v2504, %v2536
    %v2541 = vadd.f32 %v2505, %v2537
    %v2542 = vmul.f32 %v2530, %v2530
    %v2543 = vmul.f32 %v2531, %v2531
    %v2544 = vmul.f32 %v2532, %v2532
    %v2545 = vmul.f32 %v2533, %v2533
    %v2546 = vadd.f32 %v2510, %v2542
    %v2547 = vadd.f32 %v2511, %v2543
    %v2548 = vadd.f32 %v2512, %v2544
    %v2549 = vadd.f32 %v2513, %v2545
    %v2550 = vsub.f32 %v1945, %v2283
    %v2551 = vsub.f32 %v1952, %v2284
    %v2552 = vsub.f32 %v1959, %v2285
    %v2553 = vsub.f32 %v1966, %v2286
    %v2554 = vmul.f32 %v2550, %v2550
    %v2555 = vmul.f32 %v2551, %v2551
    %v2556 = vmul.f32 %v2552, %v2552
    %v2557 = vmul.f32 %v2553, %v2553
    %v2558 = vadd.f32 %v2522, %v2554
    %v2559 = vadd.f32 %v2523, %v2555
    %v2560 = vadd.f32 %v2524, %v2556
    %v2561 = vadd.f32 %v2525, %v2557
    %v2562 = vsub.f32 %v1945, %v2294
    %v2563 = vsub.f32 %v1952, %v2295
    %v2564 = vsub.f32 %v1959, %v2296
    %v2565 = vsub.f32 %v1966, %v2297
    %v2566 = vmul.f32 %v2562, %v2562
    %v2567 = vmul.f32 %v2563, %v2563
    %v2568 = vmul.f32 %v2564, %v2564
    %v2569 = vmul.f32 %v2565, %v2565
    %v2570 = vmul.f32 %v2566, %v2562
    %v2571 = vmul.f32 %v2567, %v2563
    %v2572 = vmul.f32 %v2568, %v2564
    %v2573 = vmul.f32 %v2569, %v2565
    %v2574 = vadd.f32 %v2538, %v2570
    %v2575 = vadd.f32 %v2539, %v2571
    %v2576 = vadd.f32 %v2540, %v2572
    %v2577 = vadd.f32 %v2541, %v2573
    %v2578 = vmul.f32 %v2566, %v2566
    %v2579 = vmul.f32 %v2567, %v2567
    %v2580 = vmul.f32 %v2568, %v2568
    %v2581 = vmul.f32 %v2569, %v2569
    %v2582 = vadd.f32 %v2546, %v2578
    %v2583 = vadd.f32 %v2547, %v2579
    %v2584 = vadd.f32 %v2548, %v2580
    %v2585 = vadd.f32 %v2549, %v2581
    %v2586 = vsub.f32 %v1973, %v2283
    %v2587 = vsub.f32 %v1980, %v2284
    %v2588 = vsub.f32 %v1987, %v2285
    %v2589 = vsub.f32 %v1994, %v2286
    %v2590 = vmul.f32 %v2586, %v2586
    %v2591 = vmul.f32 %v2587, %v2587
    %v2592 = vmul.f32 %v2588, %v2588
    %v2593 = vmul.f32 %v2589, %v2589
    %v2594 = vadd.f32 %v2558, %v2590
    %v2595 = vadd.f32 %v2559, %v2591
    %v2596 = vadd.f32 %v2560, %v2592
    %v2597 = vadd.f32 %v2561, %v2593
    %v2598 = vsub.f32 %v1973, %v2294
    %v2599 = vsub.f32 %v1980, %v2295
    %v2600 = vsub.f32 %v1987, %v2296
    %v2601 = vsub.f32 %v1994, %v2297
    %v2602 = vmul.f32 %v2598, %v2598
    %v2603 = vmul.f32 %v2599, %v2599
    %v2604 = vmul.f32 %v2600, %v2600
    %v2605 = vmul.f32 %v2601, %v2601
    %v2606 = vmul.f32 %v2602, %v2598
    %v2607 = vmul.f32 %v2603, %v2599
    %v2608 = vmul.f32 %v2604, %v2600
    %v2609 = vmul.f32 %v2605, %v2601
    %v2610 = vadd.f32 %v2574, %v2606
    %v2611 = vadd.f32 %v2575, %v2607
    %v2612 = vadd.f32 %v2576, %v2608
    %v2613 = vadd.f32 %v2577, %v2609
    %v2614 = vmul.f32 %v2602, %v2602
    %v2615 = vmul.f32 %v2603, %v2603
    %v2616 = vmul.f32 %v2604, %v2604
    %v2617 = vmul.f32 %v2605, %v2605
    %v2618 = vadd.f32 %v2582, %v2614
    %v2619 = vadd.f32 %v2583, %v2615
    %v2620 = vadd.f32 %v2584, %v2616
    %v2621 = vadd.f32 %v2585, %v2617
    %v2622 = vsub.f32 %v2001, %v2283
    %v2623 = vsub.f32 %v2008, %v2284
    %v2624 = vsub.f32 %v2015, %v2285
    %v2625 = vsub.f32 %v2022, %v2286
    %v2626 = vmul.f32 %v2622, %v2622
    %v2627 = vmul.f32 %v2623, %v2623
    %v2628 = vmul.f32 %v2624, %v2624
    %v2629 = vmul.f32 %v2625, %v2625
    %v2630 = vadd.f32 %v2594, %v2626
    %v2631 = vadd.f32 %v2595, %v2627
    %v2632 = vadd.f32 %v2596, %v2628
    %v2633 = vadd.f32 %v2597, %v2629
    %v2634 = vsub.f32 %v2001, %v2294
    %v2635 = vsub.f32 %v2008, %v2295
    %v2636 = vsub.f32 %v2015, %v2296
    %v2637 = vsub.f32 %v2022, %v2297
    %v2638 = vmul.f32 %v2634, %v2634
    %v2639 = vmul.f32 %v2635, %v2635
    %v2640 = vmul.f32 %v2636, %v2636
    %v2641 = vmul.f32 %v2637, %v2637
    %v2642 = vmul.f32 %v2638, %v2634
    %v2643 = vmul.f32 %v2639, %v2635
    %v2644 = vmul.f32 %v2640, %v2636
    %v2645 = vmul.f32 %v2641, %v2637
    %v2646 = vadd.f32 %v2610, %v2642
    %v2647 = vadd.f32 %v2611, %v2643
    %v2648 = vadd.f32 %v2612, %v2644
    %v2649 = vadd.f32 %v2613, %v2645
    %v2650 = vmul.f32 %v2638, %v2638
    %v2651 = vmul.f32 %v2639, %v2639
    %v2652 = vmul.f32 %v2640, %v2640
    %v2653 = vmul.f32 %v2641, %v2641
    %v2654 = vadd.f32 %v2618, %v2650
    %v2655 = vadd.f32 %v2619, %v2651
    %v2656 = vadd.f32 %v2620, %v2652
    %v2657 = vadd.f32 %v2621, %v2653
    %v2658 = vsub.f32 %v2029, %v2283
    %v2659 = vsub.f32 %v2036, %v2284
    %v2660 = vsub.f32 %v2043, %v2285
    %v2661 = vsub.f32 %v2050, %v2286
    %v2662 = vmul.f32 %v2658, %v2658
    %v2663 = vmul.f32 %v2659, %v2659
    %v2664 = vmul.f32 %v2660, %v2660
    %v2665 = vmul.f32 %v2661, %v2661
    %v2666 = vadd.f32 %v2630, %v2662
    %v2667 = vadd.f32 %v2631, %v2663
    %v2668 = vadd.f32 %v2632, %v2664
    %v2669 = vadd.f32 %v2633, %v2665
    %v2670 = vsub.f32 %v2029, %v2294
    %v2671 = vsub.f32 %v2036, %v2295
    %v2672 = vsub.f32 %v2043, %v2296
    %v2673 = vsub.f32 %v2050, %v2297
    %v2674 = vmul.f32 %v2670, %v2670
    %v2675 = vmul.f32 %v2671, %v2671
    %v2676 = vmul.f32 %v2672, %v2672
    %v2677 = vmul.f32 %v2673, %v2673
    %v2678 = vmul.f32 %v2674, %v2670
    %v2679 = vmul.f32 %v2675, %v2671
    %v2680 = vmul.f32 %v2676, %v2672
    %v2681 = vmul.f32 %v2677, %v2673
    %v2682 = vadd.f32 %v2646, %v2678
    %v2683 = vadd.f32 %v2647, %v2679
    %v2684 = vadd.f32 %v2648, %v2680
    %v2685 = vadd.f32 %v2649, %v2681
    %v2686 = vmul.f32 %v2674, %v2674
    %v2687 = vmul.f32 %v2675, %v2675
    %v2688 = vmul.f32 %v2676, %v2676
    %v2689 = vmul.f32 %v2677, %v2677
    %v2690 = vadd.f32 %v2654, %v2686
    %v2691 = vadd.f32 %v2655, %v2687
    %v2692 = vadd.f32 %v2656, %v2688
    %v2693 = vadd.f32 %v2657, %v2689
    %v2694 = vsub.f32 %v2057, %v2283
    %v2695 = vsub.f32 %v2064, %v2284
    %v2696 = vsub.f32 %v2071, %v2285
    %v2697 = vsub.f32 %v2078, %v2286
    %v2698 = vmul.f32 %v2694, %v2694
    %v2699 = vmul.f32 %v2695, %v2695
    %v2700 = vmul.f32 %v2696, %v2696
    %v2701 = vmul.f32 %v2697, %v2697
    %v2702 = vadd.f32 %v2666, %v2698
    %v2703 = vadd.f32 %v2667, %v2699
    %v2704 = vadd.f32 %v2668, %v2700
    %v2705 = vadd.f32 %v2669, %v2701
    %v2706 = vsub.f32 %v2057, %v2294
    %v2707 = vsub.f32 %v2064, %v2295
    %v2708 = vsub.f32 %v2071, %v2296
    %v2709 = vsub.f32 %v2078, %v2297
    %v2710 = vmul.f32 %v2706, %v2706
    %v2711 = vmul.f32 %v2707, %v2707
    %v2712 = vmul.f32 %v2708, %v2708
    %v2713 = vmul.f32 %v2709, %v2709
    %v2714 = vmul.f32 %v2710, %v2706
    %v2715 = vmul.f32 %v2711, %v2707
    %v2716 = vmul.f32 %v2712, %v2708
    %v2717 = vmul.f32 %v2713, %v2709
    %v2718 = vadd.f32 %v2682, %v2714
    %v2719 = vadd.f32 %v2683, %v2715
    %v2720 = vadd.f32 %v2684, %v2716
    %v2721 = vadd.f32 %v2685, %v2717
    %v2722 = vmul.f32 %v2710, %v2710
    %v2723 = vmul.f32 %v2711, %v2711
    %v2724 = vmul.f32 %v2712, %v2712
    %v2725 = vmul.f32 %v2713, %v2713
    %v2726 = vadd.f32 %v2690, %v2722
    %v2727 = vadd.f32 %v2691, %v2723
    %v2728 = vadd.f32 %v2692, %v2724
    %v2729 = vadd.f32 %v2693, %v2725
    %v2730 = vsub.f32 %v2085, %v2283
    %v2731 = vsub.f32 %v2092, %v2284
    %v2732 = vsub.f32 %v2099, %v2285
    %v2733 = vsub.f32 %v2106, %v2286
    %v2734 = vmul.f32 %v2730, %v2730
    %v2735 = vmul.f32 %v2731, %v2731
    %v2736 = vmul.f32 %v2732, %v2732
    %v2737 = vmul.f32 %v2733, %v2733
    %v2738 = vadd.f32 %v2702, %v2734
    %v2739 = vadd.f32 %v2703, %v2735
    %v2740 = vadd.f32 %v2704, %v2736
    %v2741 = vadd.f32 %v2705, %v2737
    %v2742 = vsub.f32 %v2085, %v2294
    %v2743 = vsub.f32 %v2092, %v2295
    %v2744 = vsub.f32 %v2099, %v2296
    %v2745 = vsub.f32 %v2106, %v2297
    %v2746 = vmul.f32 %v2742, %v2742
    %v2747 = vmul.f32 %v2743, %v2743
    %v2748 = vmul.f32 %v2744, %v2744
    %v2749 = vmul.f32 %v2745, %v2745
    %v2750 = vmul.f32 %v2746, %v2742
    %v2751 = vmul.f32 %v2747, %v2743
    %v2752 = vmul.f32 %v2748, %v2744
    %v2753 = vmul.f32 %v2749, %v2745
    %v2754 = vadd.f32 %v2718, %v2750
    %v2755 = vadd.f32 %v2719, %v2751
    %v2756 = vadd.f32 %v2720, %v2752
    %v2757 = vadd.f32 %v2721, %v2753
    %v2758 = vmul.f32 %v2746, %v2746
    %v2759 = vmul.f32 %v2747, %v2747
    %v2760 = vmul.f32 %v2748, %v2748
    %v2761 = vmul.f32 %v2749, %v2749
    %v2762 = vadd.f32 %v2726, %v2758
    %v2763 = vadd.f32 %v2727, %v2759
    %v2764 = vadd.f32 %v2728, %v2760
    %v2765 = vadd.f32 %v2729, %v2761
    %v2766 = vsub.f32 %v2113, %v2283
    %v2767 = vsub.f32 %v2120, %v2284
    %v2768 = vsub.f32 %v2127, %v2285
    %v2769 = vsub.f32 %v2134, %v2286
    %v2770 = vmul.f32 %v2766, %v2766
    %v2771 = vmul.f32 %v2767, %v2767
    %v2772 = vmul.f32 %v2768, %v2768
    %v2773 = vmul.f32 %v2769, %v2769
    %v2774 = vadd.f32 %v2738, %v2770
    %v2775 = vadd.f32 %v2739, %v2771
    %v2776 = vadd.f32 %v2740, %v2772
    %v2777 = vadd.f32 %v2741, %v2773
    %v2778 = vsub.f32 %v2113, %v2294
    %v2779 = vsub.f32 %v2120, %v2295
    %v2780 = vsub.f32 %v2127, %v2296
    %v2781 = vsub.f32 %v2134, %v2297
    %v2782 = vmul.f32 %v2778, %v2778
    %v2783 = vmul.f32 %v2779, %v2779
    %v2784 = vmul.f32 %v2780, %v2780
    %v2785 = vmul.f32 %v2781, %v2781
    %v2786 = vmul.f32 %v2782, %v2778
    %v2787 = vmul.f32 %v2783, %v2779
    %v2788 = vmul.f32 %v2784, %v2780
    %v2789 = vmul.f32 %v2785, %v2781
    %v2790 = vadd.f32 %v2754, %v2786
    %v2791 = vadd.f32 %v2755, %v2787
    %v2792 = vadd.f32 %v2756, %v2788
    %v2793 = vadd.f32 %v2757, %v2789
    %v2794 = vmul.f32 %v2782, %v2782
    %v2795 = vmul.f32 %v2783, %v2783
    %v2796 = vmul.f32 %v2784, %v2784
    %v2797 = vmul.f32 %v2785, %v2785
    %v2798 = vadd.f32 %v2762, %v2794
    %v2799 = vadd.f32 %v2763, %v2795
    %v2800 = vadd.f32 %v2764, %v2796
    %v2801 = vadd.f32 %v2765, %v2797
    %v2802 = vsub.f32 %v2141, %v2283
    %v2803 = vsub.f32 %v2148, %v2284
    %v2804 = vsub.f32 %v2155, %v2285
    %v2805 = vsub.f32 %v2162, %v2286
    %v2806 = vmul.f32 %v2802, %v2802
    %v2807 = vmul.f32 %v2803, %v2803
    %v2808 = vmul.f32 %v2804, %v2804
    %v2809 = vmul.f32 %v2805, %v2805
    %v2810 = vadd.f32 %v2774, %v2806
    %v2811 = vadd.f32 %v2775, %v2807
    %v2812 = vadd.f32 %v2776, %v2808
    %v2813 = vadd.f32 %v2777, %v2809
    %v2814 = vsub.f32 %v2141, %v2294
    %v2815 = vsub.f32 %v2148, %v2295
    %v2816 = vsub.f32 %v2155, %v2296
    %v2817 = vsub.f32 %v2162, %v2297
    %v2818 = vmul.f32 %v2814, %v2814
    %v2819 = vmul.f32 %v2815, %v2815
    %v2820 = vmul.f32 %v2816, %v2816
    %v2821 = vmul.f32 %v2817, %v2817
    %v2822 = vmul.f32 %v2818, %v2814
    %v2823 = vmul.f32 %v2819, %v2815
    %v2824 = vmul.f32 %v2820, %v2816
    %v2825 = vmul.f32 %v2821, %v2817
    %v2826 = vadd.f32 %v2790, %v2822
    %v2827 = vadd.f32 %v2791, %v2823
    %v2828 = vadd.f32 %v2792, %v2824
    %v2829 = vadd.f32 %v2793, %v2825
    %v2830 = vmul.f32 %v2818, %v2818
    %v2831 = vmul.f32 %v2819, %v2819
    %v2832 = vmul.f32 %v2820, %v2820
    %v2833 = vmul.f32 %v2821, %v2821
    %v2834 = vadd.f32 %v2798, %v2830
    %v2835 = vadd.f32 %v2799, %v2831
    %v2836 = vadd.f32 %v2800, %v2832
    %v2837 = vadd.f32 %v2801, %v2833
    %v2838 = vsub.f32 %v2169, %v2283
    %v2839 = vsub.f32 %v2176, %v2284
    %v2840 = vsub.f32 %v2183, %v2285
    %v2841 = vsub.f32 %v2190, %v2286
    %v2842 = vmul.f32 %v2838, %v2838
    %v2843 = vmul.f32 %v2839, %v2839
    %v2844 = vmul.f32 %v2840, %v2840
    %v2845 = vmul.f32 %v2841, %v2841
    %v2846 = vadd.f32 %v2810, %v2842
    %v2847 = vadd.f32 %v2811, %v2843
    %v2848 = vadd.f32 %v2812, %v2844
    %v2849 = vadd.f32 %v2813, %v2845
    %v2850 = vsub.f32 %v2169, %v2294
    %v2851 = vsub.f32 %v2176, %v2295
    %v2852 = vsub.f32 %v2183, %v2296
    %v2853 = vsub.f32 %v2190, %v2297
    %v2854 = vmul.f32 %v2850, %v2850
    %v2855 = vmul.f32 %v2851, %v2851
    %v2856 = vmul.f32 %v2852, %v2852
    %v2857 = vmul.f32 %v2853, %v2853
    %v2858 = vmul.f32 %v2854, %v2850
    %v2859 = vmul.f32 %v2855, %v2851
    %v2860 = vmul.f32 %v2856, %v2852
    %v2861 = vmul.f32 %v2857, %v2853
    %v2862 = vadd.f32 %v2826, %v2858
    %v2863 = vadd.f32 %v2827, %v2859
    %v2864 = vadd.f32 %v2828, %v2860
    %v2865 = vadd.f32 %v2829, %v2861
    %v2866 = vmul.f32 %v2854, %v2854
    %v2867 = vmul.f32 %v2855, %v2855
    %v2868 = vmul.f32 %v2856, %v2856
    %v2869 = vmul.f32 %v2857, %v2857
    %v2870 = vadd.f32 %v2834, %v2866
    %v2871 = vadd.f32 %v2835, %v2867
    %v2872 = vadd.f32 %v2836, %v2868
    %v2873 = vadd.f32 %v2837, %v2869
    %v2874 = vsub.f32 %v2197, %v2283
    %v2875 = vsub.f32 %v2204, %v2284
    %v2876 = vsub.f32 %v2211, %v2285
    %v2877 = vsub.f32 %v2218, %v2286
    %v2878 = vmul.f32 %v2874, %v2874
    %v2879 = vmul.f32 %v2875, %v2875
    %v2880 = vmul.f32 %v2876, %v2876
    %v2881 = vmul.f32 %v2877, %v2877
    %v2882 = vadd.f32 %v2846, %v2878
    %v2883 = vadd.f32 %v2847, %v2879
    %v2884 = vadd.f32 %v2848, %v2880
    %v2885 = vadd.f32 %v2849, %v2881
    %v2886 = vsub.f32 %v2197, %v2294
    %v2887 = vsub.f32 %v2204, %v2295
    %v2888 = vsub.f32 %v2211, %v2296
    %v2889 = vsub.f32 %v2218, %v2297
    %v2890 = vmul.f32 %v2886, %v2886
    %v2891 = vmul.f32 %v2887, %v2887
    %v2892 = vmul.f32 %v2888, %v2888
    %v2893 = vmul.f32 %v2889, %v2889
    %v2894 = vmul.f32 %v2890, %v2886
    %v2895 = vmul.f32 %v2891, %v2887
    %v2896 = vmul.f32 %v2892, %v2888
    %v2897 = vmul.f32 %v2893, %v2889
    %v2898 = vadd.f32 %v2862, %v2894
    %v2899 = vadd.f32 %v2863, %v2895
    %v2900 = vadd.f32 %v2864, %v2896
    %v2901 = vadd.f32 %v2865, %v2897
    %v2902 = vmul.f32 %v2890, %v2890
    %v2903 = vmul.f32 %v2891, %v2891
    %v2904 = vmul.f32 %v2892, %v2892
    %v2905 = vmul.f32 %v2893, %v2893
    %v2906 = vadd.f32 %v2870, %v2902
    %v2907 = vadd.f32 %v2871, %v2903
    %v2908 = vadd.f32 %v2872, %v2904
    %v2909 = vadd.f32 %v2873, %v2905
    %v2910 = vmul.f32 %v2882, 0.0625
    %v2911 = vmul.f32 %v2883, 0.0625
    %v2912 = vmul.f32 %v2884, 0.0625
    %v2913 = vmul.f32 %v2885, 0.0625
    %v2914 = vmul.f32 %v2910, %v2292
    %v2915 = vmul.f32 %v2911, %v2292
    %v2916 = vmul.f32 %v2912, %v2292
    %v2917 = vmul.f32 %v2913, %v2292
    %v2918 = vmul.f32 %v2898, %v2292
    %v2919 = vmul.f32 %v2899, %v2292
    %v2920 = vmul.f32 %v2900, %v2292
    %v2921 = vmul.f32 %v2901, %v2292
    %v2922 = vmul.f32 %v2906, %v2292
    %v2923 = vmul.f32 %v2907, %v2292
    %v2924 = vmul.f32 %v2908, %v2292
    %v2925 = vmul.f32 %v2909, %v2292
    %2930 = vrot.lane.b32.xlu0 %v2294, 8
    %v2931 = vpop.permute.xlu0 %2930
    %2932 = vrot.lane.b32.xlu0 %v2295, 8
    %v2933 = vpop.permute.xlu0 %2932
    %2934 = vrot.lane.b32.xlu0 %v2296, 8
    %v2935 = vpop.permute.xlu0 %2934
    %2936 = vrot.lane.b32.xlu0 %v2297, 8
    %v2937 = vpop.permute.xlu0 %2936
    %2946 = vrot.lane.b32.xlu0 %v2914, 17
    %v2947 = vpop.permute.xlu0 %2946
    %2948 = vrot.lane.b32.xlu0 %v2915, 17
    %v2949 = vpop.permute.xlu0 %2948
    %2950 = vrot.lane.b32.xlu0 %v2916, 17
    %v2951 = vpop.permute.xlu0 %2950
    %2952 = vrot.lane.b32.xlu0 %v2917, 17
    %v2953 = vpop.permute.xlu0 %2952
    %2962 = vrot.lane.b32.xlu0 %v2918, 26
    %v2963 = vpop.permute.xlu0 %2962
    %2964 = vrot.lane.b32.xlu0 %v2919, 26
    %v2965 = vpop.permute.xlu0 %2964
    %2966 = vrot.lane.b32.xlu0 %v2920, 26
    %v2967 = vpop.permute.xlu0 %2966
    %2968 = vrot.lane.b32.xlu0 %v2921, 26
    %v2969 = vpop.permute.xlu0 %2968
    %2978 = vrot.lane.b32.xlu0 %v2922, 35
    %v2979 = vpop.permute.xlu0 %2978
    %2980 = vrot.lane.b32.xlu0 %v2923, 35
    %v2981 = vpop.permute.xlu0 %2980
    %2982 = vrot.lane.b32.xlu0 %v2924, 35
    %v2983 = vpop.permute.xlu0 %2982
    %2984 = vrot.lane.b32.xlu0 %v2925, 35
    %v2985 = vpop.permute.xlu0 %2984
    %vm2990 = vcmask 7168
    %v2991 = vsel %vm2990, %v98, %v122
    %v2992 = vsel %vm2990, %v99, %v123
    %v2993 = vsel %vm2990, %v100, %v124
    %v2994 = vsel %vm2990, %v101, %v125
    %vm2995 = vcmask 15360
    %v2996 = vsel %vm2995, %v2991, %v132
    %v2997 = vsel %vm2995, %v2992, %v135
    %v2998 = vsel %vm2995, %v2993, %v138
    %v2999 = vsel %vm2995, %v2994, %v141
    %vm3000 = vcmask 23552
    %v3001 = vsel %vm3000, %v2996, %v148
    %v3002 = vsel %vm3000, %v2997, %v151
    %v3003 = vsel %vm3000, %v2998, %v154
    %v3004 = vsel %vm3000, %v2999, %v157
    %vm3005 = vcmask 31744
    %v3006 = vsel %vm3005, %v3001, %v211
    %v3007 = vsel %vm3005, %v3002, %v212
    %v3008 = vsel %vm3005, %v3003, %v213
    %v3009 = vsel %vm3005, %v3004, %v214
    %vm3010 = vcmask 39936
    %v3011 = vsel %vm3010, %v3006, %v269
    %v3012 = vsel %vm3010, %v3007, %v276
    %v3013 = vsel %vm3010, %v3008, %v283
    %v3014 = vsel %vm3010, %v3009, %v290
    %vm3015 = vcmask 48128
    %v3016 = vsel %vm3015, %v3011, 0.0
    %v3017 = vsel %vm3015, %v3012, 0.0
    %v3018 = vsel %vm3015, %v3013, 0.0
    %v3019 = vsel %vm3015, %v3014, 0.0
    %v3020 = vsel %vm649, %v3016, %v2931
    %v3021 = vsel %vm649, %v3017, %v2933
    %v3022 = vsel %vm649, %v3018, %v2935
    %v3023 = vsel %vm649, %v3019, %v2937
    %vm3024 = vcmask 138240
    %v3025 = vsel %vm3024, %v3020, %v2947
    %v3026 = vsel %vm3024, %v3021, %v2949
    %v3027 = vsel %vm3024, %v3022, %v2951
    %v3028 = vsel %vm3024, %v3023, %v2953
    %vm3029 = vcmask 211968
    %v3030 = vsel %vm3029, %v3025, %v2963
    %v3031 = vsel %vm3029, %v3026, %v2965
    %v3032 = vsel %vm3029, %v3027, %v2967
    %v3033 = vsel %vm3029, %v3028, %v2969
    %vm3034 = vcmask 285696
    %v3035 = vsel %vm3034, %v3030, %v2979
    %v3036 = vsel %vm3034, %v3031, %v2981
    %v3037 = vsel %vm3034, %v3032, %v2983
    %v3038 = vsel %vm3034, %v3033, %v2985
    %vm3039 = vcmask 359424
    %v3040 = vsel %vm3039, %v3035, 0.0
    %v3041 = vsel %vm3039, %v3036, 0.0
    %v3042 = vsel %vm3039, %v3037, 0.0
    %v3043 = vsel %vm3039, %v3038, 0.0
    %3044 = vst [vmem:[#allocation2] sm:$0xff] %v3040
    %3045 = vst [vmem:[#allocation2 + $0x8] sm:$0xff] %v3041
    %3046 = vst [vmem:[#allocation2 + $0x10] sm:$0xff] %v3042
    %3047 = vst [vmem:[#allocation2 + $0x18] sm:$0xff] %v3043
    %v3048 = vsel %vm2990, %v351, %v372
    %v3049 = vsel %vm2995, %v3048, %v393
    %v3050 = vsel %vm3000, %v3049, %v402
    %v3051 = vsel %vm3005, %v3050, %v408
    %v3052 = vsel %vm3010, %v3051, %v412
    %v3053 = vsel %vm3015, %v3052, %v416
    %vm3054 = vcmask 56320
    %v3055 = vsel %vm3054, %v3053, %v420
    %v3056 = vsel %vm649, %v3055, %v426
    %vm3057 = vcmask 72704
    %v3058 = vsel %vm3057, %v3056, %v430
    %vm3059 = vcmask 80896
    %v3060 = vsel %vm3059, %v3058, %v434
    %vm3061 = vcmask 89088
    %v3062 = vsel %vm3061, %v3060, 0.0
    %vm3063 = vcmask 122880
    %3064 = vst.msk [vmem:[#allocation4] sm:$0x1] %vm3063, %v3062
    // Predicated region
    $region26: #{tpu_custom_call.1} parent=1 // pred_check
      _
    $region27: #{tpu_custom_call.1} parent=1 // pred_check_branch
      %3066 = sbr.rel (0) target = $region29
    $region28: #{tpu_custom_call.1} parent=1 // pred_region
      %s3068 = ssub.s32 512, 512
      %3069 = vsyncadd [#allocation3], %s3068
      %s3070 = sshll.u32 [#allocation2], 4
      %s3071 = int_to_ptr.vmem [resolvable:$true] %s3070
      %3076 = dma.vmem_to_hbm [thread:$0]  %s3071, 512, %s6, [#allocation3], 128, 128, 8
    $region29: #{tpu_custom_call.1} parent=1 // pred_fallthru
      _
    // Predicated region
    $region30: #{tpu_custom_call.1} parent=1 // pred_check
      _
    $region31: #{tpu_custom_call.1} parent=1 // pred_check_branch
      %3078 = sbr.rel (0) target = $region33
    $region32: #{tpu_custom_call.1} parent=1 // pred_region
      %s3080 = ssub.s32 16, 16
      %3081 = vsyncadd [#allocation5], %s3080
      %s3083 = sshll.u32 [#allocation4], 4
      %s3084 = int_to_ptr.vmem [resolvable:$true] %s3083
      %3086 = dma.vmem_to_hbm [thread:$0]  %s3084, 16, %s7, [#allocation5]
    $region33: #{tpu_custom_call.1} parent=1 // pred_fallthru
      _
    // Predicated region
    $region34: #{tpu_custom_call.1} parent=1 // pred_check
      _
    $region35: #{tpu_custom_call.1} parent=1 // pred_check_branch
      %3088 = sbr.rel (0) target = $region37
    $region36: #{tpu_custom_call.1} parent=1 // pred_region
      %s3090 = ssub.s32 512, 512
      %3091 = vsyncadd [#allocation5], %s3090
      %s3092 = sshll.u32 [#allocation6], 4
      %s3093 = int_to_ptr.vmem [resolvable:$true] %s3092
      %3098 = dma.vmem_to_hbm [thread:$0]  %s3093, 512, %s8, [#allocation5], 128, 128, 8
    $region37: #{tpu_custom_call.1} parent=1 // pred_fallthru
      _
    // Predicated region
    $region38: #{tpu_custom_call.1} parent=1 // pred_check
      _
    $region39: #{tpu_custom_call.1} parent=1 // pred_check_branch
      %3100 = sbr.rel (0) target = $region41
    $region40: #{tpu_custom_call.1} parent=1 // pred_region
      %3101 = dma.done [#allocation3], 512
    $region41: #{tpu_custom_call.1} parent=1 // pred_fallthru
      _
    // Predicated region
    $region42: #{tpu_custom_call.1} parent=1 // pred_check
      _
    $region43: #{tpu_custom_call.1} parent=1 // pred_check_branch
      %3103 = sbr.rel (0) target = $region45
    $region44: #{tpu_custom_call.1} parent=1 // pred_region
      %3104 = dma.done [#allocation5], 16
    $region45: #{tpu_custom_call.1} parent=1 // pred_fallthru
      _
    // Predicated region
    $region46: #{tpu_custom_call.1} parent=1 // pred_check
      _
    $region47: #{tpu_custom_call.1} parent=1 // pred_check_branch
      %3106 = sbr.rel (0) target = $region49
    $region48: #{tpu_custom_call.1} parent=1 // pred_region
      %3107 = dma.done [#allocation5], 512
    $region49: #{tpu_custom_call.1} parent=1 // pred_fallthru
      _
    %3108 = vsyncpa [#allocation3], 1
    %3109 = vsyncpa [#allocation5], 1

</llo_original>
